<compile_context>
chip_gen: v6e
topology: v6e:2x2x1
jax: 0.10.0
libtpu: 0.0.40
codegen_flags: <defaults>
</compile_context>

<pallas_src>
import functools
import math

import jax
import jax.numpy as jnp
from jax.experimental import pallas as pl
from jax.experimental.pallas import tpu as pltpu


# ----------------------------------------------------------------------------
# Kernel: one grid step == one tile of bt batch elements; the full layer
# (fused QKV, per-head attention, out-proj, residual+LN, FFN, residual+LN)
# is computed in VMEM on the (S, bt, D) tile in its native HBM layout.
# ----------------------------------------------------------------------------
def _encoder_layer_kernel(x_ref,
                          ps2b_ref, pb2s_ref,
                          wqkv_ref, bqkv_ref,
                          wo_ref, bo_ref,
                          w1_ref, b1_ref,
                          w2_ref, b2_ref,
                          g1_ref, be1_ref, g2_ref, be2_ref,
                          o_ref,
                          attn_sc,
                          *, num_heads, eps, bt, seq):
    D = x_ref.shape[-1]
    H = num_heads
    hd = D // H
    R = bt * seq
    f32 = jnp.float32

    # Seq-major rows (row = s*bt + b) are fine for every row-wise op; only the
    # attention einsums need batch-grouped rows.
    x_bf = x_ref[...].reshape(R, D).astype(jnp.bfloat16)

    # seq-major -> batch-major via an exact one-hot permutation matmul (MXU).
    if bt > 1:
        x_bm = jnp.dot(ps2b_ref[...], x_bf,
                       preferred_element_type=f32).astype(jnp.bfloat16)
    else:
        x_bm = x_bf

    # ---- fused Q/K/V projection (dense block-diag weight, pre-transposed,
    #      1/sqrt(hd) already folded into the Q columns) ----------------------
    qkv = jnp.dot(x_bm, wqkv_ref[...],
                  preferred_element_type=f32) + bqkv_ref[...]       # (R, 3D)

    q3 = qkv[:, 0 * D:1 * D].reshape(bt, seq, D).astype(jnp.bfloat16)
    k3 = qkv[:, 1 * D:2 * D].reshape(bt, seq, D).astype(jnp.bfloat16)
    v3 = qkv[:, 2 * D:3 * D].reshape(bt, seq, D).astype(jnp.bfloat16)

    # ---- attention: short static head loop, each head batched over the tile.
    # attention dropout: identity at inference.
    for h in range(H):                                   # H is small & static
        sl = slice(h * hd, (h + 1) * hd)
        s = jnp.einsum('bqd,bkd->bqk', q3[:, :, sl], k3[:, :, sl],
                       preferred_element_type=f32)                  # (bt,S,S)
        s = s - jnp.max(s, axis=-1, keepdims=True)       # stable softmax
        e = jnp.exp(s)
        inv = pl.reciprocal(jnp.sum(e, axis=-1, keepdims=True), approx=True)
        p = (e * inv).astype(jnp.bfloat16)
        attn_sc[:, :, sl] = jnp.einsum('bqk,bkd->bqd', p, v3[:, :, sl],
                                       preferred_element_type=f32
                                       ).astype(jnp.bfloat16)

    attn_bm = attn_sc[...].reshape(R, D)                 # bf16, batch-major

    # batch-major -> seq-major (exact on the bf16 values the out-proj consumes)
    if bt > 1:
        attn = jnp.dot(pb2s_ref[...], attn_bm,
                       preferred_element_type=f32).astype(jnp.bfloat16)
    else:
        attn = attn_bm

    # ---- output projection + residual + LayerNorm 1 (f32) -------------------
    sa = jnp.dot(attn, wo_ref[...], preferred_element_type=f32) + bo_ref[...]
    # dropout1: identity at inference.  x is re-read here rather than kept live
    # across the whole attention section.
    h1 = x_ref[...].reshape(R, D) + sa
    mu1 = jnp.mean(h1, axis=-1, keepdims=True)
    var1 = jnp.mean((h1 - mu1) ** 2, axis=-1, keepdims=True)
    xn = (h1 - mu1) * jax.lax.rsqrt(var1 + eps) * g1_ref[...] + be1_ref[...]

    # ---- block-diagonal FFN (dense weights) -> ReLU -> second DiagLinear ----
    hmid = jnp.dot(xn.astype(jnp.bfloat16), w1_ref[...],
                   preferred_element_type=f32) + b1_ref[...]
    hmid = jnp.maximum(hmid, 0.0)                        # ReLU
    ff = jnp.dot(hmid.astype(jnp.bfloat16), w2_ref[...],
                 preferred_element_type=f32) + b2_ref[...]
    # dropout / dropout2: identity at inference

    # ---- residual + LayerNorm 2 ---------------------------------------------
    h2 = xn + ff
    mu2 = jnp.mean(h2, axis=-1, keepdims=True)
    var2 = jnp.mean((h2 - mu2) ** 2, axis=-1, keepdims=True)
    y = (h2 - mu2) * jax.lax.rsqrt(var2 + eps) * g2_ref[...] + be2_ref[...]

    # Lane-dense (width D) store, already in the native (S, B, D) HBM layout.
    o_ref[...] = y.reshape(seq, bt, D).astype(o_ref.dtype)


# ----------------------------------------------------------------------------
# Wrapper helpers
# ----------------------------------------------------------------------------
def _block_diag_t(w_stack, dtype):
    """(P, dp, dp) stack of (out, in) blocks -> dense (D_in, D_out) matrix,
    pre-transposed so the kernel can do `x @ W` directly.

    NOTE: densification multiplies projection FLOPs by P.  At P<=2 the MXU-fill
    benefit outweighs the extra FLOPs; for P >= 4 the projections should be
    kept as P batched (D/P)-wide contractions instead (grid over partitions).
    """
    P, dp, _ = w_stack.shape
    D = P * dp
    dense = jnp.zeros((D, D), jnp.float32)
    for p in range(P):
        dense = dense.at[p * dp:(p + 1) * dp, p * dp:(p + 1) * dp].set(w_stack[p].T)
    return dense.astype(dtype)


def _legal_batch_tiles(B):
    # The second-minor block dim (bt) must be a multiple of 8 or equal to the
    # full batch extent to satisfy the (8, 128) block-shape constraint.
    return [c for c in range(B, 0, -1) if B % c == 0 and (c == B or c % 8 == 0)]


def _tile_vmem_bytes(bt, S, D):
    R = bt * S
    act = R * D * 4                      # one f32 activation tile
    io = 2 * 2 * act                     # x + out tiles, double-buffered
    perm = 2 * 2 * (R * R * 2)           # two bf16 (R,R) permutation matrices
    weights = 2 * 12 * D * D             # bf16 qkv/out/ffn weights, dbl-buffered
    scratch = R * D * 2                  # bf16 attention scratch
    inter = 20 * act                     # rough bound on live f32 intermediates
    return io + perm + weights + scratch + inter + (2 << 20)


def _pick_batch_tile(B, S, D, target_rows, vmem_budget):
    legal = _legal_batch_tiles(B)
    fitting = [c for c in legal if _tile_vmem_bytes(c, S, D) <= vmem_budget]
    if not fitting:
        fitting = [legal[-1]]
    bt = next((c for c in fitting if c * S <= target_rows), fitting[-1])
    # Prefer >= 2 grid steps so both v7x TensorCores get work, as long as that
    # does not shrink the tile below ~half the row target.
    if B // bt < 2:
        for c in fitting:
            if B // c >= 2 and 2 * c * S >= min(target_rows, bt * S):
                bt = c
                break
    return bt


def partitioned_encoder_layer(src, params, *, num_heads, num_partitions,
                              eps=1e-5, target_rows=512,
                              out_dtype=jnp.float32):
    """src: (S, B, D) float32, PyTorch batch_first=False layout (no src_mask)."""
    S, B, D = src.shape
    P = num_partitions
    assert D % P == 0, "dim_input must be divisible by num_partitions"
    assert num_heads % P == 0, "num_heads must be divisible by num_partitions"
    dp = D // P
    hpp = num_heads // P
    assert dp % hpp == 0, "partition width must be divisible by heads/partition"
    assert D % num_heads == 0
    hd = D // num_heads
    assert num_heads * hd == D, "head slices must exactly cover dim_input"
    # Layout guards: keep in-kernel reshapes / lane slices copy-free & legal.
    assert D % 128 == 0, "dim_input must be a multiple of 128 (lane width)"
    assert S % 8 == 0, "sequence length must be a multiple of 8 (sublane width)"
    scale = 1.0 / math.sqrt(hd)

    vmem_budget = 48 * 1024 * 1024       # stays well under v7x's 64 MiB VMEM
    bt = _pick_batch_tile(B, S, D, target_rows, vmem_budget)
    R = bt * S
    vmem_limit = int(min(vmem_budget,
                         max(_tile_vmem_bytes(bt, S, D), 32 * 1024 * 1024)))

    # One-hot permutation matrices (seq-major <-> batch-major row regrouping),
    # built once on the host side; resident in VMEM across the grid.
    ii = jnp.arange(R, dtype=jnp.int32)[:, None]
    jj = jnp.arange(R, dtype=jnp.int32)[None, :]
    p_s2b = ((jj // bt == ii % S) & (jj % bt == ii // S)).astype(jnp.bfloat16)
    p_b2s = ((jj // S == ii % bt) & (jj % S == ii // bt)).astype(jnp.bfloat16)

    wdt = jnp.bfloat16
    # fused, pre-transposed, scale-folded Q/K/V weight (D, 3D)
    wq = _block_diag_t(params["wq"], jnp.float32) * scale
    wk = _block_diag_t(params["wk"], jnp.float32)
    wv = _block_diag_t(params["wv"], jnp.float32)
    wqkv = jnp.concatenate([wq, wk, wv], axis=1).astype(wdt)
    bqkv = jnp.concatenate([params["bq"].reshape(-1) * scale,
                            params["bk"].reshape(-1),
                            params["bv"].reshape(-1)]).reshape(1, 3 * D)
    wo = _block_diag_t(params["wo"], wdt)
    bo = params["bo"].reshape(1, D)
    w1 = _block_diag_t(params["w1"], wdt)
    b1 = params["b1"].reshape(1, D)
    w2 = _block_diag_t(params["w2"], wdt)
    b2 = params["b2"].reshape(1, D)

    kernel = functools.partial(_encoder_layer_kernel,
                               num_heads=num_heads, eps=eps, bt=bt, seq=S)

    # Activations are tiled along the batch axis *in place* (no HBM transpose).
    x_spec = pl.BlockSpec((S, bt, D), lambda b: (0, b, 0))
    pm_spec = pl.BlockSpec((R, R), lambda b: (0, 0))
    wqkv_spec = pl.BlockSpec((D, 3 * D), lambda b: (0, 0))
    bqkv_spec = pl.BlockSpec((1, 3 * D), lambda b: (0, 0))
    w_spec = pl.BlockSpec((D, D), lambda b: (0, 0))
    v_spec = pl.BlockSpec((1, D), lambda b: (0, 0))
    # NOTE: pipeline_mode=pl.Buffered(1) on the constant weight/permutation
    # specs would halve their VMEM footprint (helps v7x); default buffering is
    # kept here for maximum lowering portability across generations.

    out = pl.pallas_call(
        kernel,
        out_shape=jax.ShapeDtypeStruct((S, B, D), out_dtype),
        grid=(B // bt,),
        in_specs=[x_spec,
                  pm_spec, pm_spec,
                  wqkv_spec, bqkv_spec,
                  w_spec, v_spec,
                  w_spec, v_spec,
                  w_spec, v_spec,
                  v_spec, v_spec, v_spec, v_spec],
        out_specs=x_spec,
        scratch_shapes=[pltpu.VMEM((bt, S, D), jnp.bfloat16)],
        compiler_params=pltpu.CompilerParams(
            dimension_semantics=("parallel",),
            vmem_limit_bytes=vmem_limit,
        ),
    )(src,
      p_s2b, p_b2s,
      wqkv, bqkv, wo, bo, w1, b1, w2, b2,
      params["g1"], params["be1"], params["g2"], params["be2"])

    return out                                           # (S, B, D)


# ----------------------------------------------------------------------------
# Deterministic parameter init (shapes implied by the module __init__).
# Per-partition weights are stacked along a leading P axis (block-diagonal).
# ----------------------------------------------------------------------------
def init_params(key, D, P):
    dp = D // P
    ks = jax.random.split(key, 12)

    def w(k):
        return jax.random.normal(k, (P, dp, dp), jnp.float32) * 0.05

    def b(k):
        return jax.random.normal(k, (P, dp), jnp.float32) * 0.01

    return dict(
        wq=w(ks[0]), bq=b(ks[1]),
        wk=w(ks[2]), bk=b(ks[3]),
        wv=w(ks[4]), bv=b(ks[5]),
        wo=w(ks[6]), bo=b(ks[7]),
        w1=w(ks[8]), b1=b(ks[9]),
        w2=w(ks[10]), b2=b(ks[11]),
        g1=jnp.ones((1, D), jnp.float32), be1=jnp.zeros((1, D), jnp.float32),
        g2=jnp.ones((1, D), jnp.float32), be2=jnp.zeros((1, D), jnp.float32),
    )


# ----------------------------------------------------------------------------
# Pure-JAX f32 reference (same math as the PyTorch module) for correctness.
# ----------------------------------------------------------------------------
def reference(src, params, *, num_heads, num_partitions, eps=1e-5):
    S, B, D = src.shape
    P = num_partitions
    dp = D // P
    hpp = num_heads // P
    hd = dp // hpp
    x = jnp.transpose(src, (1, 0, 2))                    # (B, S, D)

    def layer_norm(h, g, b):
        mu = jnp.mean(h, axis=-1, keepdims=True)
        var = jnp.mean((h - mu) ** 2, axis=-1, keepdims=True)
        return (h - mu) * jax.lax.rsqrt(var + eps) * g + b

    sa_parts = []
    for p in range(P):
        xp = x[:, :, p * dp:(p + 1) * dp]
        q = jnp.einsum("bsd,ed->bse", xp, params["wq"][p]) + params["bq"][p]
        k = jnp.einsum("bsd,ed->bse", xp, params["wk"][p]) + params["bk"][p]
        v = jnp.einsum("bsd,ed->bse", xp, params["wv"][p]) + params["bv"][p]
        heads = []
        for h in range(hpp):
            qh = q[..., h * hd:(h + 1) * hd] / math.sqrt(hd)
            kh = k[..., h * hd:(h + 1) * hd]
            vh = v[..., h * hd:(h + 1) * hd]
            s = jnp.einsum("bqd,bkd->bqk", qh, kh)
            a = jax.nn.softmax(s, axis=-1)
            heads.append(jnp.einsum("bqk,bkd->bqd", a, vh))
        attn_p = jnp.concatenate(heads, axis=-1)
        sa_parts.append(jnp.einsum("bsd,ed->bse", attn_p, params["wo"][p])
                        + params["bo"][p])
    sa = jnp.concatenate(sa_parts, axis=-1)

    xn = layer_norm(x + sa, params["g1"][0], params["be1"][0])

    ff_parts = []
    for p in range(P):
        xp = xn[:, :, p * dp:(p + 1) * dp]
        hmid = jax.nn.relu(jnp.einsum("bsd,ed->bse", xp, params["w1"][p])
                           + params["b1"][p])
        ff_parts.append(jnp.einsum("bsd,ed->bse", hmid, params["w2"][p])
                        + params["b2"][p])
    ff = jnp.concatenate(ff_parts, axis=-1)

    out = layer_norm(xn + ff, params["g2"][0], params["be2"][0])
    return jnp.transpose(out, (1, 0, 2))


if __name__ == "__main__":
    # Small, module-consistent shapes: seq=16, batch=2, dim_input=128,
    # num_heads=4, num_partitions=2 (-> 2 heads of dim 32 per partition).
    S, B, D = 16, 2, 128
    NUM_HEADS = 4
    NUM_PARTITIONS = 2

    key = jax.random.PRNGKey(0)
    k_src, k_par = jax.random.split(key)
    src = jax.random.normal(k_src, (S, B, D), jnp.float32)   # (S, B, D) seq-first
    params = init_params(k_par, D, NUM_PARTITIONS)

    out = partitioned_encoder_layer(src, params,
                                    num_heads=NUM_HEADS,
                                    num_partitions=NUM_PARTITIONS)
    out = jax.block_until_ready(out)

    ref = jax.block_until_ready(
        reference(src, params, num_heads=NUM_HEADS,
                  num_partitions=NUM_PARTITIONS))

    assert out.shape == (S, B, D)
    # bf16 matmul inputs (f32 accumulation) + approx reciprocal -> ~1e-2
    # agreement with the pure-f32 reference is expected.
    err = float(jnp.max(jnp.abs(out - ref)))
    assert jnp.allclose(out, ref, atol=2e-2, rtol=2e-2), err

    print("KERNEL_OK")
</pallas_src>

<mosaic_0001>
module attributes {stable_mosaic.version = 11 : i64} {
  func.func @_encoder_layer_kernel(%arg0: i32, %arg1: memref<16x2x128xf32, #tpu.memory_space<vmem>>, %arg2: memref<32x32xbf16, #tpu.memory_space<vmem>>, %arg3: memref<32x32xbf16, #tpu.memory_space<vmem>>, %arg4: memref<128x384xbf16, #tpu.memory_space<vmem>>, %arg5: memref<1x384xf32, #tpu.memory_space<vmem>>, %arg6: memref<128x128xbf16, #tpu.memory_space<vmem>>, %arg7: memref<1x128xf32, #tpu.memory_space<vmem>>, %arg8: memref<128x128xbf16, #tpu.memory_space<vmem>>, %arg9: memref<1x128xf32, #tpu.memory_space<vmem>>, %arg10: memref<128x128xbf16, #tpu.memory_space<vmem>>, %arg11: memref<1x128xf32, #tpu.memory_space<vmem>>, %arg12: memref<1x128xf32, #tpu.memory_space<vmem>>, %arg13: memref<1x128xf32, #tpu.memory_space<vmem>>, %arg14: memref<1x128xf32, #tpu.memory_space<vmem>>, %arg15: memref<1x128xf32, #tpu.memory_space<vmem>>, %arg16: memref<16x2x128xf32, #tpu.memory_space<vmem>>, %arg17: memref<2x16x128xbf16, #tpu.memory_space<vmem>>) attributes {dimension_semantics = [#tpu.dimension_semantics<parallel>], iteration_bounds = array<i64: 1>, scalar_prefetch = 0 : i64, scratch_operands = 1 : i64, tpu.core_type = #tpu.core_type<tc>, window_params = [{transform_indices = @transform_0, window_bounds = array<i64: 16, 2, 128>}, {pipeline_mode = #tpu.pipeline_mode<synchronous>, transform_indices = @transform_1, window_bounds = array<i64: 32, 32>}, {pipeline_mode = #tpu.pipeline_mode<synchronous>, transform_indices = @transform_2, window_bounds = array<i64: 32, 32>}, {pipeline_mode = #tpu.pipeline_mode<synchronous>, transform_indices = @transform_3, window_bounds = array<i64: 128, 384>}, {pipeline_mode = #tpu.pipeline_mode<synchronous>, transform_indices = @transform_4, window_bounds = array<i64: 1, 384>}, {pipeline_mode = #tpu.pipeline_mode<synchronous>, transform_indices = @transform_5, window_bounds = array<i64: 128, 128>}, {pipeline_mode = #tpu.pipeline_mode<synchronous>, transform_indices = @transform_6, window_bounds = array<i64: 1, 128>}, {pipeline_mode = #tpu.pipeline_mode<synchronous>, transform_indices = @transform_7, window_bounds = array<i64: 128, 128>}, {pipeline_mode = #tpu.pipeline_mode<synchronous>, transform_indices = @transform_8, window_bounds = array<i64: 1, 128>}, {pipeline_mode = #tpu.pipeline_mode<synchronous>, transform_indices = @transform_9, window_bounds = array<i64: 128, 128>}, {pipeline_mode = #tpu.pipeline_mode<synchronous>, transform_indices = @transform_10, window_bounds = array<i64: 1, 128>}, {pipeline_mode = #tpu.pipeline_mode<synchronous>, transform_indices = @transform_11, window_bounds = array<i64: 1, 128>}, {pipeline_mode = #tpu.pipeline_mode<synchronous>, transform_indices = @transform_12, window_bounds = array<i64: 1, 128>}, {pipeline_mode = #tpu.pipeline_mode<synchronous>, transform_indices = @transform_13, window_bounds = array<i64: 1, 128>}, {pipeline_mode = #tpu.pipeline_mode<synchronous>, transform_indices = @transform_14, window_bounds = array<i64: 1, 128>}, {transform_indices = @transform_15, window_bounds = array<i64: 16, 2, 128>}]} {
    %c0 = arith.constant 0 : index
    %c0_0 = arith.constant 0 : index
    %c0_1 = arith.constant 0 : index
    %0 = vector.load %arg1[%c0, %c0_0, %c0_1] : memref<16x2x128xf32, #tpu.memory_space<vmem>>, vector<16x2x128xf32>
    %1 = vector.shape_cast %0 : vector<16x2x128xf32> to vector<32x128xf32>
    %2 = arith.truncf %1 : vector<32x128xf32> to vector<32x128xbf16>
    %c0_2 = arith.constant 0 : index
    %c0_3 = arith.constant 0 : index
    %3 = vector.load %arg2[%c0_2, %c0_3] : memref<32x32xbf16, #tpu.memory_space<vmem>>, vector<32x32xbf16>
    %cst = arith.constant dense<0.000000e+00> : vector<32x128xf32>
    %4 = tpu.matmul %3, %2, %cst {dimension_numbers = #tpu.dot_dimension_numbers<[1], [0], [0], [1], [0, 0, 1, 1], [], []>} : vector<32x32xbf16>, vector<32x128xbf16>, vector<32x128xf32> -> vector<32x128xf32>
    %5 = arith.truncf %4 : vector<32x128xf32> to vector<32x128xbf16>
    %c0_4 = arith.constant 0 : index
    %c0_5 = arith.constant 0 : index
    %6 = vector.load %arg4[%c0_4, %c0_5] : memref<128x384xbf16, #tpu.memory_space<vmem>>, vector<128x384xbf16>
    %cst_6 = arith.constant dense<0.000000e+00> : vector<32x384xf32>
    %7 = tpu.matmul %5, %6, %cst_6 {dimension_numbers = #tpu.dot_dimension_numbers<[1], [0], [0], [1], [0, 0, 1, 1], [], []>} : vector<32x128xbf16>, vector<128x384xbf16>, vector<32x384xf32> -> vector<32x384xf32>
    %c0_7 = arith.constant 0 : index
    %c0_8 = arith.constant 0 : index
    %8 = vector.load %arg5[%c0_7, %c0_8] : memref<1x384xf32, #tpu.memory_space<vmem>>, vector<1x384xf32>
    %9 = vector.broadcast %8 : vector<1x384xf32> to vector<32x384xf32>
    %10 = arith.addf %7, %9 : vector<32x384xf32>
    %11 = vector.extract_strided_slice %10 {offsets = [0, 0], sizes = [32, 128], strides = [1, 1]} : vector<32x384xf32> to vector<32x128xf32>
    %12 = vector.shape_cast %11 : vector<32x128xf32> to vector<2x16x128xf32>
    %13 = arith.truncf %12 : vector<2x16x128xf32> to vector<2x16x128xbf16>
    %14 = vector.extract_strided_slice %10 {offsets = [0, 128], sizes = [32, 128], strides = [1, 1]} : vector<32x384xf32> to vector<32x128xf32>
    %15 = vector.shape_cast %14 : vector<32x128xf32> to vector<2x16x128xf32>
    %16 = arith.truncf %15 : vector<2x16x128xf32> to vector<2x16x128xbf16>
    %17 = vector.extract_strided_slice %10 {offsets = [0, 256], sizes = [32, 128], strides = [1, 1]} : vector<32x384xf32> to vector<32x128xf32>
    %18 = vector.shape_cast %17 : vector<32x128xf32> to vector<2x16x128xf32>
    %19 = arith.truncf %18 : vector<2x16x128xf32> to vector<2x16x128xbf16>
    %20 = vector.extract_strided_slice %13 {offsets = [0, 0, 0], sizes = [2, 16, 32], strides = [1, 1, 1]} : vector<2x16x128xbf16> to vector<2x16x32xbf16>
    %21 = vector.extract_strided_slice %16 {offsets = [0, 0, 0], sizes = [2, 16, 32], strides = [1, 1, 1]} : vector<2x16x128xbf16> to vector<2x16x32xbf16>
    "tpu.trace_start"() <{level = 10 : i32, message = "bqd,bkd->bqk"}> : () -> ()
    %cst_9 = arith.constant dense<0.000000e+00> : vector<2x16x16xf32>
    %22 = tpu.matmul %20, %21, %cst_9 {dimension_numbers = #tpu.dot_dimension_numbers<[2], [2], [1], [1], [0, 0, 0, 1, 1, 1], [0], [0]>} : vector<2x16x32xbf16>, vector<2x16x32xbf16>, vector<2x16x16xf32> -> vector<2x16x16xf32>
    "tpu.trace_stop"() : () -> ()
    %cst_10 = arith.constant dense<0xFF800000> : vector<2x16xf32>
    %23 = vector.multi_reduction <maximumf>, %22, %cst_10 [2] : vector<2x16x16xf32> to vector<2x16xf32>
    %24 = vector.shape_cast %23 : vector<2x16xf32> to vector<2x16x1xf32>
    %25 = vector.broadcast %24 : vector<2x16x1xf32> to vector<2x16x16xf32>
    %26 = arith.subf %22, %25 : vector<2x16x16xf32>
    %27 = math.exp %26 : vector<2x16x16xf32>
    %cst_11 = arith.constant dense<0.000000e+00> : vector<2x16xf32>
    %28 = vector.multi_reduction <add>, %27, %cst_11 [2] : vector<2x16x16xf32> to vector<2x16xf32>
    %29 = vector.shape_cast %28 : vector<2x16xf32> to vector<2x16x1xf32>
    %30 = tpu.reciprocal %29 {approx = true} : vector<2x16x1xf32> -> vector<2x16x1xf32>
    %31 = vector.broadcast %30 : vector<2x16x1xf32> to vector<2x16x16xf32>
    %32 = arith.mulf %27, %31 : vector<2x16x16xf32>
    %33 = arith.truncf %32 : vector<2x16x16xf32> to vector<2x16x16xbf16>
    %34 = vector.extract_strided_slice %19 {offsets = [0, 0, 0], sizes = [2, 16, 32], strides = [1, 1, 1]} : vector<2x16x128xbf16> to vector<2x16x32xbf16>
    "tpu.trace_start"() <{level = 10 : i32, message = "bqk,bkd->bqd"}> : () -> ()
    %cst_12 = arith.constant dense<0.000000e+00> : vector<2x16x32xf32>
    %35 = tpu.matmul %33, %34, %cst_12 {dimension_numbers = #tpu.dot_dimension_numbers<[2], [1], [1], [2], [0, 0, 0, 1, 1, 2], [0], [0]>} : vector<2x16x16xbf16>, vector<2x16x32xbf16>, vector<2x16x32xf32> -> vector<2x16x32xf32>
    "tpu.trace_stop"() : () -> ()
    %36 = arith.truncf %35 : vector<2x16x32xf32> to vector<2x16x32xbf16>
    %c0_13 = arith.constant 0 : index
    %c0_14 = arith.constant 0 : index
    %c0_15 = arith.constant 0 : index
    %37 = vector.load %arg17[%c0_13, %c0_14, %c0_15] : memref<2x16x128xbf16, #tpu.memory_space<vmem>>, vector<2x16x32xbf16>
    tpu.vector_store %arg17[%c0_13, %c0_14, %c0_15], %36 {strides = array<i32>} : memref<2x16x128xbf16, #tpu.memory_space<vmem>>, vector<2x16x32xbf16>,
    %38 = vector.extract_strided_slice %13 {offsets = [0, 0, 32], sizes = [2, 16, 32], strides = [1, 1, 1]} : vector<2x16x128xbf16> to vector<2x16x32xbf16>
    %39 = vector.extract_strided_slice %16 {offsets = [0, 0, 32], sizes = [2, 16, 32], strides = [1, 1, 1]} : vector<2x16x128xbf16> to vector<2x16x32xbf16>
    "tpu.trace_start"() <{level = 10 : i32, message = "bqd,bkd->bqk"}> : () -> ()
    %cst_16 = arith.constant dense<0.000000e+00> : vector<2x16x16xf32>
    %40 = tpu.matmul %38, %39, %cst_16 {dimension_numbers = #tpu.dot_dimension_numbers<[2], [2], [1], [1], [0, 0, 0, 1, 1, 1], [0], [0]>} : vector<2x16x32xbf16>, vector<2x16x32xbf16>, vector<2x16x16xf32> -> vector<2x16x16xf32>
    "tpu.trace_stop"() : () -> ()
    %cst_17 = arith.constant dense<0xFF800000> : vector<2x16xf32>
    %41 = vector.multi_reduction <maximumf>, %40, %cst_17 [2] : vector<2x16x16xf32> to vector<2x16xf32>
    %42 = vector.shape_cast %41 : vector<2x16xf32> to vector<2x16x1xf32>
    %43 = vector.broadcast %42 : vector<2x16x1xf32> to vector<2x16x16xf32>
    %44 = arith.subf %40, %43 : vector<2x16x16xf32>
    %45 = math.exp %44 : vector<2x16x16xf32>
    %cst_18 = arith.constant dense<0.000000e+00> : vector<2x16xf32>
    %46 = vector.multi_reduction <add>, %45, %cst_18 [2] : vector<2x16x16xf32> to vector<2x16xf32>
    %47 = vector.shape_cast %46 : vector<2x16xf32> to vector<2x16x1xf32>
    %48 = tpu.reciprocal %47 {approx = true} : vector<2x16x1xf32> -> vector<2x16x1xf32>
    %49 = vector.broadcast %48 : vector<2x16x1xf32> to vector<2x16x16xf32>
    %50 = arith.mulf %45, %49 : vector<2x16x16xf32>
    %51 = arith.truncf %50 : vector<2x16x16xf32> to vector<2x16x16xbf16>
    %52 = vector.extract_strided_slice %19 {offsets = [0, 0, 32], sizes = [2, 16, 32], strides = [1, 1, 1]} : vector<2x16x128xbf16> to vector<2x16x32xbf16>
    "tpu.trace_start"() <{level = 10 : i32, message = "bqk,bkd->bqd"}> : () -> ()
    %cst_19 = arith.constant dense<0.000000e+00> : vector<2x16x32xf32>
    %53 = tpu.matmul %51, %52, %cst_19 {dimension_numbers = #tpu.dot_dimension_numbers<[2], [1], [1], [2], [0, 0, 0, 1, 1, 2], [0], [0]>} : vector<2x16x16xbf16>, vector<2x16x32xbf16>, vector<2x16x32xf32> -> vector<2x16x32xf32>
    "tpu.trace_stop"() : () -> ()
    %54 = arith.truncf %53 : vector<2x16x32xf32> to vector<2x16x32xbf16>
    %c0_20 = arith.constant 0 : index
    %c0_21 = arith.constant 0 : index
    %c32 = arith.constant 32 : index
    %55 = vector.load %arg17[%c0_20, %c0_21, %c32] : memref<2x16x128xbf16, #tpu.memory_space<vmem>>, vector<2x16x32xbf16>
    tpu.vector_store %arg17[%c0_20, %c0_21, %c32], %54 {strides = array<i32>} : memref<2x16x128xbf16, #tpu.memory_space<vmem>>, vector<2x16x32xbf16>,
    %56 = vector.extract_strided_slice %13 {offsets = [0, 0, 64], sizes = [2, 16, 32], strides = [1, 1, 1]} : vector<2x16x128xbf16> to vector<2x16x32xbf16>
    %57 = vector.extract_strided_slice %16 {offsets = [0, 0, 64], sizes = [2, 16, 32], strides = [1, 1, 1]} : vector<2x16x128xbf16> to vector<2x16x32xbf16>
    "tpu.trace_start"() <{level = 10 : i32, message = "bqd,bkd->bqk"}> : () -> ()
    %cst_22 = arith.constant dense<0.000000e+00> : vector<2x16x16xf32>
    %58 = tpu.matmul %56, %57, %cst_22 {dimension_numbers = #tpu.dot_dimension_numbers<[2], [2], [1], [1], [0, 0, 0, 1, 1, 1], [0], [0]>} : vector<2x16x32xbf16>, vector<2x16x32xbf16>, vector<2x16x16xf32> -> vector<2x16x16xf32>
    "tpu.trace_stop"() : () -> ()
    %cst_23 = arith.constant dense<0xFF800000> : vector<2x16xf32>
    %59 = vector.multi_reduction <maximumf>, %58, %cst_23 [2] : vector<2x16x16xf32> to vector<2x16xf32>
    %60 = vector.shape_cast %59 : vector<2x16xf32> to vector<2x16x1xf32>
    %61 = vector.broadcast %60 : vector<2x16x1xf32> to vector<2x16x16xf32>
    %62 = arith.subf %58, %61 : vector<2x16x16xf32>
    %63 = math.exp %62 : vector<2x16x16xf32>
    %cst_24 = arith.constant dense<0.000000e+00> : vector<2x16xf32>
    %64 = vector.multi_reduction <add>, %63, %cst_24 [2] : vector<2x16x16xf32> to vector<2x16xf32>
    %65 = vector.shape_cast %64 : vector<2x16xf32> to vector<2x16x1xf32>
    %66 = tpu.reciprocal %65 {approx = true} : vector<2x16x1xf32> -> vector<2x16x1xf32>
    %67 = vector.broadcast %66 : vector<2x16x1xf32> to vector<2x16x16xf32>
    %68 = arith.mulf %63, %67 : vector<2x16x16xf32>
    %69 = arith.truncf %68 : vector<2x16x16xf32> to vector<2x16x16xbf16>
    %70 = vector.extract_strided_slice %19 {offsets = [0, 0, 64], sizes = [2, 16, 32], strides = [1, 1, 1]} : vector<2x16x128xbf16> to vector<2x16x32xbf16>
    "tpu.trace_start"() <{level = 10 : i32, message = "bqk,bkd->bqd"}> : () -> ()
    %cst_25 = arith.constant dense<0.000000e+00> : vector<2x16x32xf32>
    %71 = tpu.matmul %69, %70, %cst_25 {dimension_numbers = #tpu.dot_dimension_numbers<[2], [1], [1], [2], [0, 0, 0, 1, 1, 2], [0], [0]>} : vector<2x16x16xbf16>, vector<2x16x32xbf16>, vector<2x16x32xf32> -> vector<2x16x32xf32>
    "tpu.trace_stop"() : () -> ()
    %72 = arith.truncf %71 : vector<2x16x32xf32> to vector<2x16x32xbf16>
    %c0_26 = arith.constant 0 : index
    %c0_27 = arith.constant 0 : index
    %c64 = arith.constant 64 : index
    %73 = vector.load %arg17[%c0_26, %c0_27, %c64] : memref<2x16x128xbf16, #tpu.memory_space<vmem>>, vector<2x16x32xbf16>
    tpu.vector_store %arg17[%c0_26, %c0_27, %c64], %72 {strides = array<i32>} : memref<2x16x128xbf16, #tpu.memory_space<vmem>>, vector<2x16x32xbf16>,
    %74 = vector.extract_strided_slice %13 {offsets = [0, 0, 96], sizes = [2, 16, 32], strides = [1, 1, 1]} : vector<2x16x128xbf16> to vector<2x16x32xbf16>
    %75 = vector.extract_strided_slice %16 {offsets = [0, 0, 96], sizes = [2, 16, 32], strides = [1, 1, 1]} : vector<2x16x128xbf16> to vector<2x16x32xbf16>
    "tpu.trace_start"() <{level = 10 : i32, message = "bqd,bkd->bqk"}> : () -> ()
    %cst_28 = arith.constant dense<0.000000e+00> : vector<2x16x16xf32>
    %76 = tpu.matmul %74, %75, %cst_28 {dimension_numbers = #tpu.dot_dimension_numbers<[2], [2], [1], [1], [0, 0, 0, 1, 1, 1], [0], [0]>} : vector<2x16x32xbf16>, vector<2x16x32xbf16>, vector<2x16x16xf32> -> vector<2x16x16xf32>
    "tpu.trace_stop"() : () -> ()
    %cst_29 = arith.constant dense<0xFF800000> : vector<2x16xf32>
    %77 = vector.multi_reduction <maximumf>, %76, %cst_29 [2] : vector<2x16x16xf32> to vector<2x16xf32>
    %78 = vector.shape_cast %77 : vector<2x16xf32> to vector<2x16x1xf32>
    %79 = vector.broadcast %78 : vector<2x16x1xf32> to vector<2x16x16xf32>
    %80 = arith.subf %76, %79 : vector<2x16x16xf32>
    %81 = math.exp %80 : vector<2x16x16xf32>
    %cst_30 = arith.constant dense<0.000000e+00> : vector<2x16xf32>
    %82 = vector.multi_reduction <add>, %81, %cst_30 [2] : vector<2x16x16xf32> to vector<2x16xf32>
    %83 = vector.shape_cast %82 : vector<2x16xf32> to vector<2x16x1xf32>
    %84 = tpu.reciprocal %83 {approx = true} : vector<2x16x1xf32> -> vector<2x16x1xf32>
    %85 = vector.broadcast %84 : vector<2x16x1xf32> to vector<2x16x16xf32>
    %86 = arith.mulf %81, %85 : vector<2x16x16xf32>
    %87 = arith.truncf %86 : vector<2x16x16xf32> to vector<2x16x16xbf16>
    %88 = vector.extract_strided_slice %19 {offsets = [0, 0, 96], sizes = [2, 16, 32], strides = [1, 1, 1]} : vector<2x16x128xbf16> to vector<2x16x32xbf16>
    "tpu.trace_start"() <{level = 10 : i32, message = "bqk,bkd->bqd"}> : () -> ()
    %cst_31 = arith.constant dense<0.000000e+00> : vector<2x16x32xf32>
    %89 = tpu.matmul %87, %88, %cst_31 {dimension_numbers = #tpu.dot_dimension_numbers<[2], [1], [1], [2], [0, 0, 0, 1, 1, 2], [0], [0]>} : vector<2x16x16xbf16>, vector<2x16x32xbf16>, vector<2x16x32xf32> -> vector<2x16x32xf32>
    "tpu.trace_stop"() : () -> ()
    %90 = arith.truncf %89 : vector<2x16x32xf32> to vector<2x16x32xbf16>
    %c0_32 = arith.constant 0 : index
    %c0_33 = arith.constant 0 : index
    %c96 = arith.constant 96 : index
    %91 = vector.load %arg17[%c0_32, %c0_33, %c96] : memref<2x16x128xbf16, #tpu.memory_space<vmem>>, vector<2x16x32xbf16>
    tpu.vector_store %arg17[%c0_32, %c0_33, %c96], %90 {strides = array<i32>} : memref<2x16x128xbf16, #tpu.memory_space<vmem>>, vector<2x16x32xbf16>,
    %c0_34 = arith.constant 0 : index
    %c0_35 = arith.constant 0 : index
    %c0_36 = arith.constant 0 : index
    %92 = vector.load %arg17[%c0_34, %c0_35, %c0_36] : memref<2x16x128xbf16, #tpu.memory_space<vmem>>, vector<2x16x128xbf16>
    %93 = vector.shape_cast %92 : vector<2x16x128xbf16> to vector<32x128xbf16>
    %c0_37 = arith.constant 0 : index
    %c0_38 = arith.constant 0 : index
    %94 = vector.load %arg3[%c0_37, %c0_38] : memref<32x32xbf16, #tpu.memory_space<vmem>>, vector<32x32xbf16>
    %cst_39 = arith.constant dense<0.000000e+00> : vector<32x128xf32>
    %95 = tpu.matmul %94, %93, %cst_39 {dimension_numbers = #tpu.dot_dimension_numbers<[1], [0], [0], [1], [0, 0, 1, 1], [], []>} : vector<32x32xbf16>, vector<32x128xbf16>, vector<32x128xf32> -> vector<32x128xf32>
    %96 = arith.truncf %95 : vector<32x128xf32> to vector<32x128xbf16>
    %c0_40 = arith.constant 0 : index
    %c0_41 = arith.constant 0 : index
    %97 = vector.load %arg6[%c0_40, %c0_41] : memref<128x128xbf16, #tpu.memory_space<vmem>>, vector<128x128xbf16>
    %cst_42 = arith.constant dense<0.000000e+00> : vector<32x128xf32>
    %98 = tpu.matmul %96, %97, %cst_42 {dimension_numbers = #tpu.dot_dimension_numbers<[1], [0], [0], [1], [0, 0, 1, 1], [], []>} : vector<32x128xbf16>, vector<128x128xbf16>, vector<32x128xf32> -> vector<32x128xf32>
    %c0_43 = arith.constant 0 : index
    %c0_44 = arith.constant 0 : index
    %99 = vector.load %arg7[%c0_43, %c0_44] : memref<1x128xf32, #tpu.memory_space<vmem>>, vector<1x128xf32>
    %100 = vector.broadcast %99 : vector<1x128xf32> to vector<32x128xf32>
    %101 = arith.addf %98, %100 : vector<32x128xf32>
    %c0_45 = arith.constant 0 : index
    %c0_46 = arith.constant 0 : index
    %c0_47 = arith.constant 0 : index
    %102 = vector.load %arg1[%c0_45, %c0_46, %c0_47] : memref<16x2x128xf32, #tpu.memory_space<vmem>>, vector<16x2x128xf32>
    %103 = vector.shape_cast %102 : vector<16x2x128xf32> to vector<32x128xf32>
    %104 = arith.addf %103, %101 : vector<32x128xf32>
    %cst_48 = arith.constant dense<0.000000e+00> : vector<32xf32>
    %105 = vector.multi_reduction <add>, %104, %cst_48 [1] : vector<32x128xf32> to vector<32xf32>
    %106 = vector.shape_cast %105 : vector<32xf32> to vector<32x1xf32>
    %cst_49 = arith.constant 1.280000e+02 : f32
    %107 = vector.broadcast %cst_49 : f32 to vector<32x1xf32>
    %108 = arith.divf %106, %107 : vector<32x1xf32>
    %109 = vector.broadcast %108 : vector<32x1xf32> to vector<32x128xf32>
    %110 = arith.subf %104, %109 : vector<32x128xf32>
    %111 = arith.mulf %110, %110 : vector<32x128xf32>
    %cst_50 = arith.constant dense<0.000000e+00> : vector<32xf32>
    %112 = vector.multi_reduction <add>, %111, %cst_50 [1] : vector<32x128xf32> to vector<32xf32>
    %113 = vector.shape_cast %112 : vector<32xf32> to vector<32x1xf32>
    %cst_51 = arith.constant 1.280000e+02 : f32
    %114 = vector.broadcast %cst_51 : f32 to vector<32x1xf32>
    %115 = arith.divf %113, %114 : vector<32x1xf32>
    %116 = vector.broadcast %108 : vector<32x1xf32> to vector<32x128xf32>
    %117 = arith.subf %104, %116 : vector<32x128xf32>
    %cst_52 = arith.constant 9.99999974E-6 : f32
    %118 = vector.broadcast %cst_52 : f32 to vector<32x1xf32>
    %119 = arith.addf %115, %118 : vector<32x1xf32>
    %120 = math.rsqrt %119 : vector<32x1xf32>
    %121 = vector.broadcast %120 : vector<32x1xf32> to vector<32x128xf32>
    %122 = arith.mulf %117, %121 : vector<32x128xf32>
    %c0_53 = arith.constant 0 : index
    %c0_54 = arith.constant 0 : index
    %123 = vector.load %arg12[%c0_53, %c0_54] : memref<1x128xf32, #tpu.memory_space<vmem>>, vector<1x128xf32>
    %124 = vector.broadcast %123 : vector<1x128xf32> to vector<32x128xf32>
    %125 = arith.mulf %122, %124 : vector<32x128xf32>
    %c0_55 = arith.constant 0 : index
    %c0_56 = arith.constant 0 : index
    %126 = vector.load %arg13[%c0_55, %c0_56] : memref<1x128xf32, #tpu.memory_space<vmem>>, vector<1x128xf32>
    %127 = vector.broadcast %126 : vector<1x128xf32> to vector<32x128xf32>
    %128 = arith.addf %125, %127 : vector<32x128xf32>
    %129 = arith.truncf %128 : vector<32x128xf32> to vector<32x128xbf16>
    %c0_57 = arith.constant 0 : index
    %c0_58 = arith.constant 0 : index
    %130 = vector.load %arg8[%c0_57, %c0_58] : memref<128x128xbf16, #tpu.memory_space<vmem>>, vector<128x128xbf16>
    %cst_59 = arith.constant dense<0.000000e+00> : vector<32x128xf32>
    %131 = tpu.matmul %129, %130, %cst_59 {dimension_numbers = #tpu.dot_dimension_numbers<[1], [0], [0], [1], [0, 0, 1, 1], [], []>} : vector<32x128xbf16>, vector<128x128xbf16>, vector<32x128xf32> -> vector<32x128xf32>
    %c0_60 = arith.constant 0 : index
    %c0_61 = arith.constant 0 : index
    %132 = vector.load %arg9[%c0_60, %c0_61] : memref<1x128xf32, #tpu.memory_space<vmem>>, vector<1x128xf32>
    %133 = vector.broadcast %132 : vector<1x128xf32> to vector<32x128xf32>
    %134 = arith.addf %131, %133 : vector<32x128xf32>
    %cst_62 = arith.constant 0.000000e+00 : f32
    %135 = vector.broadcast %cst_62 : f32 to vector<32x128xf32>
    %136 = arith.maximumf %134, %135 : vector<32x128xf32>
    %137 = arith.truncf %136 : vector<32x128xf32> to vector<32x128xbf16>
    %c0_63 = arith.constant 0 : index
    %c0_64 = arith.constant 0 : index
    %138 = vector.load %arg10[%c0_63, %c0_64] : memref<128x128xbf16, #tpu.memory_space<vmem>>, vector<128x128xbf16>
    %cst_65 = arith.constant dense<0.000000e+00> : vector<32x128xf32>
    %139 = tpu.matmul %137, %138, %cst_65 {dimension_numbers = #tpu.dot_dimension_numbers<[1], [0], [0], [1], [0, 0, 1, 1], [], []>} : vector<32x128xbf16>, vector<128x128xbf16>, vector<32x128xf32> -> vector<32x128xf32>
    %c0_66 = arith.constant 0 : index
    %c0_67 = arith.constant 0 : index
    %140 = vector.load %arg11[%c0_66, %c0_67] : memref<1x128xf32, #tpu.memory_space<vmem>>, vector<1x128xf32>
    %141 = vector.broadcast %140 : vector<1x128xf32> to vector<32x128xf32>
    %142 = arith.addf %139, %141 : vector<32x128xf32>
    %143 = arith.addf %128, %142 : vector<32x128xf32>
    %cst_68 = arith.constant dense<0.000000e+00> : vector<32xf32>
    %144 = vector.multi_reduction <add>, %143, %cst_68 [1] : vector<32x128xf32> to vector<32xf32>
    %145 = vector.shape_cast %144 : vector<32xf32> to vector<32x1xf32>
    %cst_69 = arith.constant 1.280000e+02 : f32
    %146 = vector.broadcast %cst_69 : f32 to vector<32x1xf32>
    %147 = arith.divf %145, %146 : vector<32x1xf32>
    %148 = vector.broadcast %147 : vector<32x1xf32> to vector<32x128xf32>
    %149 = arith.subf %143, %148 : vector<32x128xf32>
    %150 = arith.mulf %149, %149 : vector<32x128xf32>
    %cst_70 = arith.constant dense<0.000000e+00> : vector<32xf32>
    %151 = vector.multi_reduction <add>, %150, %cst_70 [1] : vector<32x128xf32> to vector<32xf32>
    %152 = vector.shape_cast %151 : vector<32xf32> to vector<32x1xf32>
    %cst_71 = arith.constant 1.280000e+02 : f32
    %153 = vector.broadcast %cst_71 : f32 to vector<32x1xf32>
    %154 = arith.divf %152, %153 : vector<32x1xf32>
    %155 = vector.broadcast %147 : vector<32x1xf32> to vector<32x128xf32>
    %156 = arith.subf %143, %155 : vector<32x128xf32>
    %cst_72 = arith.constant 9.99999974E-6 : f32
    %157 = vector.broadcast %cst_72 : f32 to vector<32x1xf32>
    %158 = arith.addf %154, %157 : vector<32x1xf32>
    %159 = math.rsqrt %158 : vector<32x1xf32>
    %160 = vector.broadcast %159 : vector<32x1xf32> to vector<32x128xf32>
    %161 = arith.mulf %156, %160 : vector<32x128xf32>
    %c0_73 = arith.constant 0 : index
    %c0_74 = arith.constant 0 : index
    %162 = vector.load %arg14[%c0_73, %c0_74] : memref<1x128xf32, #tpu.memory_space<vmem>>, vector<1x128xf32>
    %163 = vector.broadcast %162 : vector<1x128xf32> to vector<32x128xf32>
    %164 = arith.mulf %161, %163 : vector<32x128xf32>
    %c0_75 = arith.constant 0 : index
    %c0_76 = arith.constant 0 : index
    %165 = vector.load %arg15[%c0_75, %c0_76] : memref<1x128xf32, #tpu.memory_space<vmem>>, vector<1x128xf32>
    %166 = vector.broadcast %165 : vector<1x128xf32> to vector<32x128xf32>
    %167 = arith.addf %164, %166 : vector<32x128xf32>
    %168 = vector.shape_cast %167 : vector<32x128xf32> to vector<16x2x128xf32>
    %c0_77 = arith.constant 0 : index
    %c0_78 = arith.constant 0 : index
    %c0_79 = arith.constant 0 : index
    %169 = vector.load %arg16[%c0_77, %c0_78, %c0_79] : memref<16x2x128xf32, #tpu.memory_space<vmem>>, vector<16x2x128xf32>
    tpu.vector_store %arg16[%c0_77, %c0_78, %c0_79], %168 {strides = array<i32>} : memref<16x2x128xf32, #tpu.memory_space<vmem>>, vector<16x2x128xf32>,
    return
  }
  func.func @transform_0(%arg0: i32) -> (i32, i32, i32) {
    %c0_i32 = arith.constant 0 : i32
    %c0_i32_0 = arith.constant 0 : i32
    %c0_i32_1 = arith.constant 0 : i32
    return %c0_i32, %arg0, %c0_i32_0 : i32, i32, i32
  }
  func.func @transform_1(%arg0: i32) -> (i32, i32) {
    %c0_i32 = arith.constant 0 : i32
    %c0_i32_0 = arith.constant 0 : i32
    %c0_i32_1 = arith.constant 0 : i32
    return %c0_i32, %c0_i32_0 : i32, i32
  }
  func.func @transform_2(%arg0: i32) -> (i32, i32) {
    %c0_i32 = arith.constant 0 : i32
    %c0_i32_0 = arith.constant 0 : i32
    %c0_i32_1 = arith.constant 0 : i32
    return %c0_i32, %c0_i32_0 : i32, i32
  }
  func.func @transform_3(%arg0: i32) -> (i32, i32) {
    %c0_i32 = arith.constant 0 : i32
    %c0_i32_0 = arith.constant 0 : i32
    %c0_i32_1 = arith.constant 0 : i32
    return %c0_i32, %c0_i32_0 : i32, i32
  }
  func.func @transform_4(%arg0: i32) -> (i32, i32) {
    %c0_i32 = arith.constant 0 : i32
    %c0_i32_0 = arith.constant 0 : i32
    %c0_i32_1 = arith.constant 0 : i32
    return %c0_i32, %c0_i32_0 : i32, i32
  }
  func.func @transform_5(%arg0: i32) -> (i32, i32) {
    %c0_i32 = arith.constant 0 : i32
    %c0_i32_0 = arith.constant 0 : i32
    %c0_i32_1 = arith.constant 0 : i32
    return %c0_i32, %c0_i32_0 : i32, i32
  }
  func.func @transform_6(%arg0: i32) -> (i32, i32) {
    %c0_i32 = arith.constant 0 : i32
    %c0_i32_0 = arith.constant 0 : i32
    %c0_i32_1 = arith.constant 0 : i32
    return %c0_i32, %c0_i32_0 : i32, i32
  }
  func.func @transform_7(%arg0: i32) -> (i32, i32) {
    %c0_i32 = arith.constant 0 : i32
    %c0_i32_0 = arith.constant 0 : i32
    %c0_i32_1 = arith.constant 0 : i32
    return %c0_i32, %c0_i32_0 : i32, i32
  }
  func.func @transform_8(%arg0: i32) -> (i32, i32) {
    %c0_i32 = arith.constant 0 : i32
    %c0_i32_0 = arith.constant 0 : i32
    %c0_i32_1 = arith.constant 0 : i32
    return %c0_i32, %c0_i32_0 : i32, i32
  }
  func.func @transform_9(%arg0: i32) -> (i32, i32) {
    %c0_i32 = arith.constant 0 : i32
    %c0_i32_0 = arith.constant 0 : i32
    %c0_i32_1 = arith.constant 0 : i32
    return %c0_i32, %c0_i32_0 : i32, i32
  }
  func.func @transform_10(%arg0: i32) -> (i32, i32) {
    %c0_i32 = arith.constant 0 : i32
    %c0_i32_0 = arith.constant 0 : i32
    %c0_i32_1 = arith.constant 0 : i32
    return %c0_i32, %c0_i32_0 : i32, i32
  }
  func.func @transform_11(%arg0: i32) -> (i32, i32) {
    %c0_i32 = arith.constant 0 : i32
    %c0_i32_0 = arith.constant 0 : i32
    %c0_i32_1 = arith.constant 0 : i32
    return %c0_i32, %c0_i32_0 : i32, i32
  }
  func.func @transform_12(%arg0: i32) -> (i32, i32) {
    %c0_i32 = arith.constant 0 : i32
    %c0_i32_0 = arith.constant 0 : i32
    %c0_i32_1 = arith.constant 0 : i32
    return %c0_i32, %c0_i32_0 : i32, i32
  }
  func.func @transform_13(%arg0: i32) -> (i32, i32) {
    %c0_i32 = arith.constant 0 : i32
    %c0_i32_0 = arith.constant 0 : i32
    %c0_i32_1 = arith.constant 0 : i32
    return %c0_i32, %c0_i32_0 : i32, i32
  }
  func.func @transform_14(%arg0: i32) -> (i32, i32) {
    %c0_i32 = arith.constant 0 : i32
    %c0_i32_0 = arith.constant 0 : i32
    %c0_i32_1 = arith.constant 0 : i32
    return %c0_i32, %c0_i32_0 : i32, i32
  }
  func.func @transform_15(%arg0: i32) -> (i32, i32, i32) {
    %c0_i32 = arith.constant 0 : i32
    %c0_i32_0 = arith.constant 0 : i32
    %c0_i32_1 = arith.constant 0 : i32
    return %c0_i32, %arg0, %c0_i32_0 : i32, i32, i32
  }
}

</mosaic_0001>

<llo_original>
// kernel: tpu_custom_call.1
$region0: #{tpu_custom_call.1}
  #allocation0 [shape = 'u32[]', space=smem, size = 0x4, offset = 0x4, fixed_abs, tag = 'smem constant byte address 0x4 - core index']
  #allocation1 [shape = 'u32[144,128]{1,0:T(1,128)}', space=vmem, size = 0x12000, scoped, tag = 'internal scratch']
  #allocation2 [shape = 'bf16[2,16,128]{2,1,0:T(8,128)(2,1)}', space=vmem, size = 0x2000, scoped, tag = 'scratch operand']
  %s0 = inlined_call_operand.hbm [shape: f32[16,2,128], index: 0, kind: input, shape index: {}]
  %s1 = inlined_call_operand.hbm [shape: bf16[32,32], index: 1, kind: input, shape index: {}]
  %s2 = inlined_call_operand.hbm [shape: bf16[32,32], index: 2, kind: input, shape index: {}]
  %s3 = inlined_call_operand.hbm [shape: bf16[128,384], index: 3, kind: input, shape index: {}]
  %s4 = inlined_call_operand.vmem [shape: f32[1,384], index: 4, kind: input, shape index: {}]
  %s5 = inlined_call_operand.hbm [shape: bf16[128,128], index: 5, kind: input, shape index: {}]
  %s6 = inlined_call_operand.vmem [shape: f32[1,128], index: 6, kind: input, shape index: {}]
  %s7 = inlined_call_operand.hbm [shape: bf16[128,128], index: 7, kind: input, shape index: {}]
  %s8 = inlined_call_operand.vmem [shape: f32[1,128], index: 8, kind: input, shape index: {}]
  %s9 = inlined_call_operand.hbm [shape: bf16[128,128], index: 9, kind: input, shape index: {}]
  %s10 = inlined_call_operand.vmem [shape: f32[1,128], index: 10, kind: input, shape index: {}]
  %s11 = inlined_call_operand.vmem [shape: f32[1,128], index: 11, kind: input, shape index: {}]
  %s12 = inlined_call_operand.vmem [shape: f32[1,128], index: 12, kind: input, shape index: {}]
  %s13 = inlined_call_operand.vmem [shape: f32[1,128], index: 13, kind: input, shape index: {}]
  %s14 = inlined_call_operand.vmem [shape: f32[1,128], index: 14, kind: input, shape index: {}]
  %s15 = inlined_call_operand.hbm [shape: f32[16,2,128], index: 15, kind: output, shape index: {}]
  %s16 = sld [smem:[#allocation0]]
  $region98: #{tpu_custom_call.1} parent=0
    _
  %s18 = ssub.s32 1, %s16
  %s19 = scalar_select 0, %s18, %s16
  $region1: #{tpu_custom_call.1} parent=0
    #allocation3 [shape = 'u8[16384]{0}', space=vmem, size = 0x4000, scoped, tag = 'input window, operand 0, single buffered']
    #allocation4 [shape = 's32[1]{0}', space=sflag, size = 0x4, scoped, tag = 'scoped memory for tpu_custom_call.1']
    #allocation5 [shape = 's32[1]{0}', space=sflag, size = 0x4, scoped, tag = 'scoped memory for tpu_custom_call.1']
    #allocation6 [shape = 'u8[8192]{0}', space=vmem, size = 0x2000, scoped, tag = 'input window, operand 1, single buffered']
    #allocation7 [shape = 's32[1]{0}', space=sflag, size = 0x4, scoped, tag = 'scoped memory for tpu_custom_call.1']
    #allocation8 [shape = 'u8[8192]{0}', space=vmem, size = 0x2000, scoped, tag = 'input window, operand 2, single buffered']
    #allocation9 [shape = 'u8[98304]{0}', space=vmem, size = 0x18000, scoped, tag = 'input window, operand 3, single buffered']
    #allocation10 [shape = 's32[1]{0}', space=sflag, size = 0x4, scoped, tag = 'scoped memory for tpu_custom_call.1']
    #allocation11 [shape = 'u8[32768]{0}', space=vmem, size = 0x8000, scoped, tag = 'input window, operand 5, single buffered']
    #allocation12 [shape = 'u8[32768]{0}', space=vmem, size = 0x8000, scoped, tag = 'input window, operand 7, single buffered']
    #allocation13 [shape = 's32[1]{0}', space=sflag, size = 0x4, scoped, tag = 'scoped memory for tpu_custom_call.1']
    #allocation14 [shape = 'u8[32768]{0}', space=vmem, size = 0x8000, scoped, tag = 'input window, operand 9, single buffered']
    #allocation15 [shape = 'u8[16384]{0}', space=vmem, size = 0x4000, scoped, tag = 'output window, operand 0, single buffered']
    %20 = vsyncpa [#allocation4], 0
    %21 = vsyncpa [#allocation7], 0
    %22 = vsyncpa [#allocation10], 0
    %23 = vsyncpa [#allocation13], 0
    %24 = vsyncpa [#allocation5], 0
    // Predicated region
    $region2: #{tpu_custom_call.1} parent=1 // pred_check
      _
    $region3: #{tpu_custom_call.1} parent=1 // pred_check_branch
      %26 = sbr.rel (0) target = $region5
    $region4: #{tpu_custom_call.1} parent=1 // pred_region
      %s28 = ssub.s32 512, 512
      %29 = vsyncadd [#allocation4], %s28
      %s30 = sshll.u32 [#allocation3], 4
      %s31 = int_to_ptr.vmem [resolvable:$true] %s30
      %36 = dma.hbm_to_vmem [thread:$0]  %s0, 512, %s31, [#allocation4], 32, 32, 2
    $region5: #{tpu_custom_call.1} parent=1 // pred_fallthru
      _
    // Predicated region
    $region6: #{tpu_custom_call.1} parent=1 // pred_check
      _
    $region7: #{tpu_custom_call.1} parent=1 // pred_check_branch
      %38 = sbr.rel (0) target = $region9
    $region8: #{tpu_custom_call.1} parent=1 // pred_region
      %s40 = ssub.s32 256, 256
      %41 = vsyncadd [#allocation7], %s40
      %s42 = sshll.u32 [#allocation6], 4
      %s43 = int_to_ptr.vmem [resolvable:$true] %s42
      %48 = dma.hbm_to_vmem [thread:$0]  %s1, 256, %s43, [#allocation7], 64, 64, 4
    $region9: #{tpu_custom_call.1} parent=1 // pred_fallthru
      _
    // Predicated region
    $region10: #{tpu_custom_call.1} parent=1 // pred_check
      _
    $region11: #{tpu_custom_call.1} parent=1 // pred_check_branch
      %50 = sbr.rel (0) target = $region13
    $region12: #{tpu_custom_call.1} parent=1 // pred_region
      %s52 = ssub.s32 256, 256
      %53 = vsyncadd [#allocation7], %s52
      %s54 = sshll.u32 [#allocation8], 4
      %s55 = int_to_ptr.vmem [resolvable:$true] %s54
      %60 = dma.hbm_to_vmem [thread:$0]  %s2, 256, %s55, [#allocation7], 64, 64, 4
    $region13: #{tpu_custom_call.1} parent=1 // pred_fallthru
      _
    // Predicated region
    $region14: #{tpu_custom_call.1} parent=1 // pred_check
      _
    $region15: #{tpu_custom_call.1} parent=1 // pred_check_branch
      %62 = sbr.rel (0) target = $region17
    $region16: #{tpu_custom_call.1} parent=1 // pred_region
      %s64 = ssub.s32 3072, 3072
      %65 = vsyncadd [#allocation10], %s64
      %s66 = sshll.u32 [#allocation9], 4
      %s67 = int_to_ptr.vmem [resolvable:$true] %s66
      %72 = dma.hbm_to_vmem [thread:$0]  %s3, 3072, %s67, [#allocation10], 192, 192, 12
    $region17: #{tpu_custom_call.1} parent=1 // pred_fallthru
      _
    // Predicated region
    $region18: #{tpu_custom_call.1} parent=1 // pred_check
      _
    $region19: #{tpu_custom_call.1} parent=1 // pred_check_branch
      %74 = sbr.rel (0) target = $region21
    $region20: #{tpu_custom_call.1} parent=1 // pred_region
      _
    $region21: #{tpu_custom_call.1} parent=1 // pred_fallthru
      _
    // Predicated region
    $region22: #{tpu_custom_call.1} parent=1 // pred_check
      _
    $region23: #{tpu_custom_call.1} parent=1 // pred_check_branch
      %76 = sbr.rel (0) target = $region25
    $region24: #{tpu_custom_call.1} parent=1 // pred_region
      %s78 = ssub.s32 1024, 1024
      %79 = vsyncadd [#allocation10], %s78
      %s80 = sshll.u32 [#allocation11], 4
      %s81 = int_to_ptr.vmem [resolvable:$true] %s80
      %86 = dma.hbm_to_vmem [thread:$0]  %s5, 1024, %s81, [#allocation10], 64, 64, 4
    $region25: #{tpu_custom_call.1} parent=1 // pred_fallthru
      _
    // Predicated region
    $region26: #{tpu_custom_call.1} parent=1 // pred_check
      _
    $region27: #{tpu_custom_call.1} parent=1 // pred_check_branch
      %88 = sbr.rel (0) target = $region29
    $region28: #{tpu_custom_call.1} parent=1 // pred_region
      _
    $region29: #{tpu_custom_call.1} parent=1 // pred_fallthru
      _
    // Predicated region
    $region30: #{tpu_custom_call.1} parent=1 // pred_check
      _
    $region31: #{tpu_custom_call.1} parent=1 // pred_check_branch
      %90 = sbr.rel (0) target = $region33
    $region32: #{tpu_custom_call.1} parent=1 // pred_region
      %s92 = ssub.s32 1024, 1024
      %93 = vsyncadd [#allocation13], %s92
      %s94 = sshll.u32 [#allocation12], 4
      %s95 = int_to_ptr.vmem [resolvable:$true] %s94
      %100 = dma.hbm_to_vmem [thread:$0]  %s7, 1024, %s95, [#allocation13], 64, 64, 4
    $region33: #{tpu_custom_call.1} parent=1 // pred_fallthru
      _
    // Predicated region
    $region34: #{tpu_custom_call.1} parent=1 // pred_check
      _
    $region35: #{tpu_custom_call.1} parent=1 // pred_check_branch
      %102 = sbr.rel (0) target = $region37
    $region36: #{tpu_custom_call.1} parent=1 // pred_region
      _
    $region37: #{tpu_custom_call.1} parent=1 // pred_fallthru
      _
    // Predicated region
    $region38: #{tpu_custom_call.1} parent=1 // pred_check
      _
    $region39: #{tpu_custom_call.1} parent=1 // pred_check_branch
      %104 = sbr.rel (0) target = $region41
    $region40: #{tpu_custom_call.1} parent=1 // pred_region
      %s106 = ssub.s32 1024, 1024
      %107 = vsyncadd [#allocation13], %s106
      %s108 = sshll.u32 [#allocation14], 4
      %s109 = int_to_ptr.vmem [resolvable:$true] %s108
      %114 = dma.hbm_to_vmem [thread:$0]  %s9, 1024, %s109, [#allocation13], 64, 64, 4
    $region41: #{tpu_custom_call.1} parent=1 // pred_fallthru
      _
    // Predicated region
    $region42: #{tpu_custom_call.1} parent=1 // pred_check
      _
    $region43: #{tpu_custom_call.1} parent=1 // pred_check_branch
      %116 = sbr.rel (0) target = $region45
    $region44: #{tpu_custom_call.1} parent=1 // pred_region
      _
    $region45: #{tpu_custom_call.1} parent=1 // pred_fallthru
      _
    // Predicated region
    $region46: #{tpu_custom_call.1} parent=1 // pred_check
      _
    $region47: #{tpu_custom_call.1} parent=1 // pred_check_branch
      %118 = sbr.rel (0) target = $region49
    $region48: #{tpu_custom_call.1} parent=1 // pred_region
      _
    $region49: #{tpu_custom_call.1} parent=1 // pred_fallthru
      _
    // Predicated region
    $region50: #{tpu_custom_call.1} parent=1 // pred_check
      _
    $region51: #{tpu_custom_call.1} parent=1 // pred_check_branch
      %120 = sbr.rel (0) target = $region53
    $region52: #{tpu_custom_call.1} parent=1 // pred_region
      _
    $region53: #{tpu_custom_call.1} parent=1 // pred_fallthru
      _
    // Predicated region
    $region54: #{tpu_custom_call.1} parent=1 // pred_check
      _
    $region55: #{tpu_custom_call.1} parent=1 // pred_check_branch
      %122 = sbr.rel (0) target = $region57
    $region56: #{tpu_custom_call.1} parent=1 // pred_region
      _
    $region57: #{tpu_custom_call.1} parent=1 // pred_fallthru
      _
    // Predicated region
    $region58: #{tpu_custom_call.1} parent=1 // pred_check
      _
    $region59: #{tpu_custom_call.1} parent=1 // pred_check_branch
      %124 = sbr.rel (0) target = $region61
    $region60: #{tpu_custom_call.1} parent=1 // pred_region
      _
    $region61: #{tpu_custom_call.1} parent=1 // pred_fallthru
      _
    // Predicated region
    $region62: #{tpu_custom_call.1} parent=1 // pred_check
      _
    $region63: #{tpu_custom_call.1} parent=1 // pred_check_branch
      %126 = sbr.rel (0) target = $region65
    $region64: #{tpu_custom_call.1} parent=1 // pred_region
      %127 = dma.done [#allocation4], 512
    $region65: #{tpu_custom_call.1} parent=1 // pred_fallthru
      _
    // Predicated region
    $region66: #{tpu_custom_call.1} parent=1 // pred_check
      _
    $region67: #{tpu_custom_call.1} parent=1 // pred_check_branch
      %129 = sbr.rel (0) target = $region69
    $region68: #{tpu_custom_call.1} parent=1 // pred_region
      %130 = dma.done [#allocation7], 256
    $region69: #{tpu_custom_call.1} parent=1 // pred_fallthru
      _
    // Predicated region
    $region70: #{tpu_custom_call.1} parent=1 // pred_check
      _
    $region71: #{tpu_custom_call.1} parent=1 // pred_check_branch
      %132 = sbr.rel (0) target = $region73
    $region72: #{tpu_custom_call.1} parent=1 // pred_region
      %133 = dma.done [#allocation7], 256
    $region73: #{tpu_custom_call.1} parent=1 // pred_fallthru
      _
    // Predicated region
    $region74: #{tpu_custom_call.1} parent=1 // pred_check
      _
    $region75: #{tpu_custom_call.1} parent=1 // pred_check_branch
      %135 = sbr.rel (0) target = $region77
    $region76: #{tpu_custom_call.1} parent=1 // pred_region
      %136 = dma.done [#allocation10], 3072
    $region77: #{tpu_custom_call.1} parent=1 // pred_fallthru
      _
    // Predicated region
    $region78: #{tpu_custom_call.1} parent=1 // pred_check
      _
    $region79: #{tpu_custom_call.1} parent=1 // pred_check_branch
      %138 = sbr.rel (0) target = $region81
    $region80: #{tpu_custom_call.1} parent=1 // pred_region
      %139 = dma.done [#allocation10], 1024
    $region81: #{tpu_custom_call.1} parent=1 // pred_fallthru
      _
    // Predicated region
    $region82: #{tpu_custom_call.1} parent=1 // pred_check
      _
    $region83: #{tpu_custom_call.1} parent=1 // pred_check_branch
      %141 = sbr.rel (0) target = $region85
    $region84: #{tpu_custom_call.1} parent=1 // pred_region
      %142 = dma.done [#allocation13], 1024
    $region85: #{tpu_custom_call.1} parent=1 // pred_fallthru
      _
    // Predicated region
    $region86: #{tpu_custom_call.1} parent=1 // pred_check
      _
    $region87: #{tpu_custom_call.1} parent=1 // pred_check_branch
      %144 = sbr.rel (0) target = $region89
    $region88: #{tpu_custom_call.1} parent=1 // pred_region
      %145 = dma.done [#allocation13], 1024
    $region89: #{tpu_custom_call.1} parent=1 // pred_fallthru
      _
    %v147 = vld [vmem:[#allocation3] sm:$0x3]
    %v148 = vld [vmem:[#allocation3 + $0x2] sm:$0x3]
    %v149 = vld [vmem:[#allocation3 + $0x4] sm:$0x3]
    %v150 = vld [vmem:[#allocation3 + $0x6] sm:$0x3]
    %v151 = vld [vmem:[#allocation3 + $0x8] sm:$0x3]
    %v152 = vld [vmem:[#allocation3 + $0xa] sm:$0x3]
    %v153 = vld [vmem:[#allocation3 + $0xc] sm:$0x3]
    %v154 = vld [vmem:[#allocation3 + $0xe] sm:$0x3]
    %v155 = vld [vmem:[#allocation3 + $0x10] sm:$0x3]
    %v156 = vld [vmem:[#allocation3 + $0x12] sm:$0x3]
    %v157 = vld [vmem:[#allocation3 + $0x14] sm:$0x3]
    %v158 = vld [vmem:[#allocation3 + $0x16] sm:$0x3]
    %v159 = vld [vmem:[#allocation3 + $0x18] sm:$0x3]
    %v160 = vld [vmem:[#allocation3 + $0x1a] sm:$0x3]
    %v161 = vld [vmem:[#allocation3 + $0x1c] sm:$0x3]
    %v162 = vld [vmem:[#allocation3 + $0x1e] sm:$0x3]
    %v179 = vcombine.low %v147, %v148
    %v180 = vcombine.low %v149, %v150
    %v182 = vunpack.c.l.s4 1983009808
    %v183 = vunpack.c.0.s8 %v182
    %v184 = vlaneseq
    %v185 = vshrl.u32 %v184, 7
    %v186 = vsub.s32 %v183, %v185
    %v187 = vrot.slane %v179, %v186
    %v189 = vunpack.c.l.s4 1983009808
    %v190 = vunpack.c.0.s8 %v189
    %v191 = vlaneseq
    %v192 = vshrl.u32 %v191, 7
    %v193 = vsub.s32 %v190, %v192
    %v194 = vrot.slane %v180, %v193
    %v195 = vcombine.low %v187, %v194
    %v196 = vcombine.low %v151, %v152
    %v197 = vcombine.low %v153, %v154
    %v199 = vunpack.c.l.s4 1983009808
    %v200 = vunpack.c.0.s8 %v199
    %v201 = vlaneseq
    %v202 = vshrl.u32 %v201, 7
    %v203 = vsub.s32 %v200, %v202
    %v204 = vrot.slane %v196, %v203
    %v206 = vunpack.c.l.s4 1983009808
    %v207 = vunpack.c.0.s8 %v206
    %v208 = vlaneseq
    %v209 = vshrl.u32 %v208, 7
    %v210 = vsub.s32 %v207, %v209
    %v211 = vrot.slane %v197, %v210
    %v212 = vcombine.low %v204, %v211
    %v213 = vcombine.low %v155, %v156
    %v214 = vcombine.low %v157, %v158
    %v216 = vunpack.c.l.s4 1983009808
    %v217 = vunpack.c.0.s8 %v216
    %v218 = vlaneseq
    %v219 = vshrl.u32 %v218, 7
    %v220 = vsub.s32 %v217, %v219
    %v221 = vrot.slane %v213, %v220
    %v223 = vunpack.c.l.s4 1983009808
    %v224 = vunpack.c.0.s8 %v223
    %v225 = vlaneseq
    %v226 = vshrl.u32 %v225, 7
    %v227 = vsub.s32 %v224, %v226
    %v228 = vrot.slane %v214, %v227
    %v229 = vcombine.low %v221, %v228
    %v230 = vcombine.low %v159, %v160
    %v231 = vcombine.low %v161, %v162
    %v233 = vunpack.c.l.s4 1983009808
    %v234 = vunpack.c.0.s8 %v233
    %v235 = vlaneseq
    %v236 = vshrl.u32 %v235, 7
    %v237 = vsub.s32 %v234, %v236
    %v238 = vrot.slane %v230, %v237
    %v240 = vunpack.c.l.s4 1983009808
    %v241 = vunpack.c.0.s8 %v240
    %v242 = vlaneseq
    %v243 = vshrl.u32 %v242, 7
    %v244 = vsub.s32 %v241, %v243
    %v245 = vrot.slane %v231, %v244
    %v246 = vcombine.low %v238, %v245
    %v251 = vpack.c.bf16 %v212, %v195
    %v252 = vpack.c.bf16 %v246, %v229
    %v253 = vld [vmem:[#allocation6] sm:$0xf]
    %v254 = vld [vmem:[#allocation6 + $0x4] sm:$0xf]
    %v255 = vld [vmem:[#allocation6 + $0x8] sm:$0xf]
    %v256 = vld [vmem:[#allocation6 + $0xc] sm:$0xf]
    %v261 = vunpack.c.l.b16 %v253
    %v262 = vunpack.c.l.b16 %v254
    %v263 = vunpack.c.l.b16 %v255
    %v264 = vunpack.c.l.b16 %v256
    %v265 = vpack.c.b16 %v262, %v261
    %v266 = vpack.c.b16 %v264, %v263
    %vm267 = vcmask 261120
    %v269 = vsel %vm267, %v265, 0
    %v272 = vsel %vm267, %v266, 0
    %274 = vmatprep.subr.bf16.mxu0 0
    %275 = vmatpush1.bf16.msra.mxu0 0
    %276 = vmatprep.subr.bf16.mxu0 0
    %277 = vmatpush1.bf16.msra.mxu0 0
    %278 = vmatprep.subr.bf16.mxu0 0
    %279 = vmatpush1.bf16.msra.mxu0 0
    %280 = vmatprep.subr.bf16.mxu0 0
    %281 = vmatpush1.bf16.msra.mxu0 0
    %282 = vmatprep.subr.bf16.mxu0 0
    %283 = vmatpush1.bf16.msra.mxu0 0
    %284 = vmatprep.subr.bf16.mxu0 0
    %285 = vmatpush1.bf16.msra.mxu0 0
    %286 = vmatprep.subr.bf16.mxu0 0
    %287 = vmatpush1.bf16.msra.mxu0 %v252
    %288 = vmatprep.subr.bf16.mxu0 0
    %289 = vmatpush1.bf16.msra.mxu0 %v251
    %290 = vmatprep.subr.bf16.mxu0 0
    %291 = vmatpush2.bf16.msra.mxu0 0
    %292 = vmatprep.subr.bf16.mxu0 0
    %293 = vmatpush2.bf16.msra.mxu0 0
    %294 = vmatprep.subr.bf16.mxu0 0
    %295 = vmatpush2.bf16.msra.mxu0 0
    %296 = vmatprep.subr.bf16.mxu0 0
    %297 = vmatpush2.bf16.msra.mxu0 0
    %298 = vmatprep.subr.bf16.mxu0 0
    %299 = vmatpush2.bf16.msra.mxu0 0
    %300 = vmatprep.subr.bf16.mxu0 0
    %301 = vmatpush2.bf16.msra.mxu0 0
    %302 = vmatprep.subr.bf16.mxu0 0
    %303 = vmatpush2.bf16.msra.mxu0 0
    %304 = vmatprep.subr.bf16.mxu0 0
    %305 = vmatpush2.bf16.msra.mxu0 0
    %306 = vmatprep.mubr.bf16.mxu0 0
    %307 = vmatmul.mubr.bf16.gmra.mxu0 %v269
    %v308 = vpop.f32.mrf.mxu0
    %v309 = vadd.f32 0.0, %v308
    %v310 = vpop.f32.mrf.mxu0
    %v311 = vpop.f32.mrf.mxu0
    %v312 = vadd.f32 0.0, %v311
    %v313 = vpop.f32.mrf.mxu0
    %314 = vmatprep.mubr.bf16.mxu0 0
    %315 = vmatmul.mubr.bf16.gmra.mxu0 %v272
    %v316 = vpop.f32.mrf.mxu0
    %v317 = vadd.f32 0.0, %v316
    %v318 = vpop.f32.mrf.mxu0
    %v319 = vpop.f32.mrf.mxu0
    %v320 = vadd.f32 0.0, %v319
    %v321 = vpop.f32.mrf.mxu0
    %322 = vdwg.mxu0
    %v323 = vpack.c.bf16 %v312, %v309
    %v324 = vpack.c.bf16 %v320, %v317
    %v325 = vld [vmem:[#allocation9] sm:$0xff]
    %v326 = vld [vmem:[#allocation9 + $0x8] sm:$0xf]
    %v327 = vld [vmem:[#allocation9 + $0xc] sm:$0xff]
    %v328 = vld [vmem:[#allocation9 + $0x14] sm:$0xf]
    %v329 = vld [vmem:[#allocation9 + $0x18] sm:$0xff]
    %v330 = vld [vmem:[#allocation9 + $0x20] sm:$0xf]
    %v331 = vld [vmem:[#allocation9 + $0x24] sm:$0xff]
    %v332 = vld [vmem:[#allocation9 + $0x2c] sm:$0xf]
    %v333 = vld [vmem:[#allocation9 + $0x30] sm:$0xff]
    %v334 = vld [vmem:[#allocation9 + $0x38] sm:$0xf]
    %v335 = vld [vmem:[#allocation9 + $0x3c] sm:$0xff]
    %v336 = vld [vmem:[#allocation9 + $0x44] sm:$0xf]
    %v337 = vld [vmem:[#allocation9 + $0x48] sm:$0xff]
    %v338 = vld [vmem:[#allocation9 + $0x50] sm:$0xf]
    %v339 = vld [vmem:[#allocation9 + $0x54] sm:$0xff]
    %v340 = vld [vmem:[#allocation9 + $0x5c] sm:$0xf]
    %v341 = vld [vmem:[#allocation9 + $0x60] sm:$0xff]
    %v342 = vld [vmem:[#allocation9 + $0x68] sm:$0xf]
    %v343 = vld [vmem:[#allocation9 + $0x6c] sm:$0xff]
    %v344 = vld [vmem:[#allocation9 + $0x74] sm:$0xf]
    %v345 = vld [vmem:[#allocation9 + $0x78] sm:$0xff]
    %v346 = vld [vmem:[#allocation9 + $0x80] sm:$0xf]
    %v347 = vld [vmem:[#allocation9 + $0x84] sm:$0xff]
    %v348 = vld [vmem:[#allocation9 + $0x8c] sm:$0xf]
    %v349 = vld [vmem:[#allocation9 + $0x90] sm:$0xff]
    %v350 = vld [vmem:[#allocation9 + $0x98] sm:$0xf]
    %v351 = vld [vmem:[#allocation9 + $0x9c] sm:$0xff]
    %v352 = vld [vmem:[#allocation9 + $0xa4] sm:$0xf]
    %v353 = vld [vmem:[#allocation9 + $0xa8] sm:$0xff]
    %v354 = vld [vmem:[#allocation9 + $0xb0] sm:$0xf]
    %v355 = vld [vmem:[#allocation9 + $0xb4] sm:$0xff]
    %v356 = vld [vmem:[#allocation9 + $0xbc] sm:$0xf]
    %v357 = vld [vmem:[%s4] sm:$0x7]
    %v359 = vlaneseq
    %v360 = vshrl.u32 %v359, 7
    %v361 = vsub.s32 0, %v360
    %v362 = vrot.slane %v357, %v361
    %v363 = vlaneseq
    %v364 = vshrl.u32 %v363, 7
    %v365 = vsub.s32 1, %v364
    %v366 = vrot.slane %v357, %v365
    %v367 = vlaneseq
    %v368 = vshrl.u32 %v367, 7
    %v369 = vsub.s32 2, %v368
    %v370 = vrot.slane %v357, %v369
    %v406 = vunpack.c.l.b16 %v325
    %v407 = vunpack.c.h.b16 %v325
    %v408 = vunpack.c.l.b16 %v326
    %v409 = vunpack.c.l.b16 %v327
    %v410 = vunpack.c.h.b16 %v327
    %v411 = vunpack.c.l.b16 %v328
    %v412 = vunpack.c.l.b16 %v329
    %v413 = vunpack.c.h.b16 %v329
    %v414 = vunpack.c.l.b16 %v330
    %v415 = vunpack.c.l.b16 %v331
    %v416 = vunpack.c.h.b16 %v331
    %v417 = vunpack.c.l.b16 %v332
    %v418 = vunpack.c.l.b16 %v333
    %v419 = vunpack.c.h.b16 %v333
    %v420 = vunpack.c.l.b16 %v334
    %v421 = vunpack.c.l.b16 %v335
    %v422 = vunpack.c.h.b16 %v335
    %v423 = vunpack.c.l.b16 %v336
    %v424 = vunpack.c.l.b16 %v337
    %v425 = vunpack.c.h.b16 %v337
    %v426 = vunpack.c.l.b16 %v338
    %v427 = vunpack.c.l.b16 %v339
    %v428 = vunpack.c.h.b16 %v339
    %v429 = vunpack.c.l.b16 %v340
    %v430 = vunpack.c.l.b16 %v341
    %v431 = vunpack.c.h.b16 %v341
    %v432 = vunpack.c.l.b16 %v342
    %v433 = vunpack.c.l.b16 %v343
    %v434 = vunpack.c.h.b16 %v343
    %v435 = vunpack.c.l.b16 %v344
    %v436 = vunpack.c.l.b16 %v345
    %v437 = vunpack.c.h.b16 %v345
    %v438 = vunpack.c.l.b16 %v346
    %v439 = vunpack.c.l.b16 %v347
    %v440 = vunpack.c.h.b16 %v347
    %v441 = vunpack.c.l.b16 %v348
    %v442 = vunpack.c.l.b16 %v349
    %v443 = vunpack.c.h.b16 %v349
    %v444 = vunpack.c.l.b16 %v350
    %v445 = vunpack.c.l.b16 %v351
    %v446 = vunpack.c.h.b16 %v351
    %v447 = vunpack.c.l.b16 %v352
    %v448 = vunpack.c.l.b16 %v353
    %v449 = vunpack.c.h.b16 %v353
    %v450 = vunpack.c.l.b16 %v354
    %v451 = vunpack.c.l.b16 %v355
    %v452 = vunpack.c.h.b16 %v355
    %v453 = vunpack.c.l.b16 %v356
    %v454 = vpack.c.b16 %v409, %v406
    %v455 = vpack.c.b16 %v410, %v407
    %v456 = vpack.c.b16 %v411, %v408
    %v457 = vpack.c.b16 %v415, %v412
    %v458 = vpack.c.b16 %v416, %v413
    %v459 = vpack.c.b16 %v417, %v414
    %v460 = vpack.c.b16 %v421, %v418
    %v461 = vpack.c.b16 %v422, %v419
    %v462 = vpack.c.b16 %v423, %v420
    %v463 = vpack.c.b16 %v427, %v424
    %v464 = vpack.c.b16 %v428, %v425
    %v465 = vpack.c.b16 %v429, %v426
    %v466 = vpack.c.b16 %v433, %v430
    %v467 = vpack.c.b16 %v434, %v431
    %v468 = vpack.c.b16 %v435, %v432
    %v469 = vpack.c.b16 %v439, %v436
    %v470 = vpack.c.b16 %v440, %v437
    %v471 = vpack.c.b16 %v441, %v438
    %v472 = vpack.c.b16 %v445, %v442
    %v473 = vpack.c.b16 %v446, %v443
    %v474 = vpack.c.b16 %v447, %v444
    %v475 = vpack.c.b16 %v451, %v448
    %v476 = vpack.c.b16 %v452, %v449
    %v477 = vpack.c.b16 %v453, %v450
    %502 = vmatprep.subr.bf16.mxu0 %v476
    %503 = vmatpush1.bf16.msra.mxu0 %v475
    %504 = vmatprep.subr.bf16.mxu0 %v473
    %505 = vmatpush1.bf16.msra.mxu0 %v472
    %506 = vmatprep.subr.bf16.mxu0 %v470
    %507 = vmatpush1.bf16.msra.mxu0 %v469
    %508 = vmatprep.subr.bf16.mxu0 %v467
    %509 = vmatpush1.bf16.msra.mxu0 %v466
    %510 = vmatprep.subr.bf16.mxu0 %v464
    %511 = vmatpush1.bf16.msra.mxu0 %v463
    %512 = vmatprep.subr.bf16.mxu0 %v461
    %513 = vmatpush1.bf16.msra.mxu0 %v460
    %514 = vmatprep.subr.bf16.mxu0 %v458
    %515 = vmatpush1.bf16.msra.mxu0 %v457
    %516 = vmatprep.subr.bf16.mxu0 %v455
    %517 = vmatpush1.bf16.msra.mxu0 %v454
    %518 = vmatprep.subr.bf16.mxu0 0
    %519 = vmatpush2.bf16.msra.mxu0 0
    %520 = vmatprep.subr.bf16.mxu0 0
    %521 = vmatpush2.bf16.msra.mxu0 0
    %522 = vmatprep.subr.bf16.mxu0 0
    %523 = vmatpush2.bf16.msra.mxu0 0
    %524 = vmatprep.subr.bf16.mxu0 0
    %525 = vmatpush2.bf16.msra.mxu0 0
    %526 = vmatprep.subr.bf16.mxu0 0
    %527 = vmatpush2.bf16.msra.mxu0 0
    %528 = vmatprep.subr.bf16.mxu0 0
    %529 = vmatpush2.bf16.msra.mxu0 0
    %530 = vmatprep.subr.bf16.mxu0 0
    %531 = vmatpush2.bf16.msra.mxu0 0
    %532 = vmatprep.subr.bf16.mxu0 0
    %533 = vmatpush2.bf16.msra.mxu0 0
    %534 = vmatprep.mubr.bf16.mxu0 0
    %535 = vmatmul.mubr.bf16.gmra.mxu0 %v323
    %v536 = vpop.f32.mrf.mxu0
    %v537 = vadd.f32 %v362, %v536
    %v538 = vpop.f32.mrf.mxu0
    %v539 = vadd.f32 %v366, %v538
    %v540 = vpop.f32.mrf.mxu0
    %v541 = vadd.f32 %v362, %v540
    %v542 = vpop.f32.mrf.mxu0
    %v543 = vadd.f32 %v366, %v542
    %544 = vmatprep.mubr.bf16.mxu0 0
    %545 = vmatmul.mubr.bf16.gmra.mxu0 %v324
    %v546 = vpop.f32.mrf.mxu0
    %v547 = vadd.f32 %v362, %v546
    %v548 = vpop.f32.mrf.mxu0
    %v549 = vadd.f32 %v366, %v548
    %v550 = vpop.f32.mrf.mxu0
    %v551 = vadd.f32 %v362, %v550
    %v552 = vpop.f32.mrf.mxu0
    %v553 = vadd.f32 %v366, %v552
    %554 = vdwg.mxu0
    %555 = vmatprep.subr.bf16.mxu0 0
    %556 = vmatpush1.bf16.msra.mxu0 %v477
    %557 = vmatprep.subr.bf16.mxu0 0
    %558 = vmatpush1.bf16.msra.mxu0 %v474
    %559 = vmatprep.subr.bf16.mxu0 0
    %560 = vmatpush1.bf16.msra.mxu0 %v471
    %561 = vmatprep.subr.bf16.mxu0 0
    %562 = vmatpush1.bf16.msra.mxu0 %v468
    %563 = vmatprep.subr.bf16.mxu0 0
    %564 = vmatpush1.bf16.msra.mxu0 %v465
    %565 = vmatprep.subr.bf16.mxu0 0
    %566 = vmatpush1.bf16.msra.mxu0 %v462
    %567 = vmatprep.subr.bf16.mxu0 0
    %568 = vmatpush1.bf16.msra.mxu0 %v459
    %569 = vmatprep.subr.bf16.mxu0 0
    %570 = vmatpush1.bf16.msra.mxu0 %v456
    %571 = vmatprep.subr.bf16.mxu0 0
    %572 = vmatpush2.bf16.msra.mxu0 0
    %573 = vmatprep.subr.bf16.mxu0 0
    %574 = vmatpush2.bf16.msra.mxu0 0
    %575 = vmatprep.subr.bf16.mxu0 0
    %576 = vmatpush2.bf16.msra.mxu0 0
    %577 = vmatprep.subr.bf16.mxu0 0
    %578 = vmatpush2.bf16.msra.mxu0 0
    %579 = vmatprep.subr.bf16.mxu0 0
    %580 = vmatpush2.bf16.msra.mxu0 0
    %581 = vmatprep.subr.bf16.mxu0 0
    %582 = vmatpush2.bf16.msra.mxu0 0
    %583 = vmatprep.subr.bf16.mxu0 0
    %584 = vmatpush2.bf16.msra.mxu0 0
    %585 = vmatprep.subr.bf16.mxu0 0
    %586 = vmatpush2.bf16.msra.mxu0 0
    %587 = vmatprep.mubr.bf16.mxu0 0
    %588 = vmatmul.mubr.bf16.gmra.mxu0 %v323
    %v589 = vpop.f32.mrf.mxu0
    %v590 = vadd.f32 %v370, %v589
    %v591 = vpop.f32.mrf.mxu0
    %v592 = vpop.f32.mrf.mxu0
    %v593 = vadd.f32 %v370, %v592
    %v594 = vpop.f32.mrf.mxu0
    %595 = vmatprep.mubr.bf16.mxu0 0
    %596 = vmatmul.mubr.bf16.gmra.mxu0 %v324
    %v597 = vpop.f32.mrf.mxu0
    %v598 = vadd.f32 %v370, %v597
    %v599 = vpop.f32.mrf.mxu0
    %v600 = vpop.f32.mrf.mxu0
    %v601 = vadd.f32 %v370, %v600
    %v602 = vpop.f32.mrf.mxu0
    %603 = vdwg.mxu0
    %v604 = vpack.c.bf16 %v541, %v537
    %v605 = vpack.c.bf16 %v551, %v547
    %v606 = vpack.c.bf16 %v543, %v539
    %v607 = vpack.c.bf16 %v553, %v549
    %v608 = vpack.c.bf16 %v593, %v590
    %v609 = vpack.c.bf16 %v601, %v598
    %v611 = vsel %vm267, %v604, 0
    %v614 = vsel %vm267, %v606, 0
    %616 = vmatprep.subr.bf16.mxu0 0
    %617 = vmatpush1.bf16.xpose.msra.mxu0 0
    %618 = vmatprep.subr.bf16.mxu0 0
    %619 = vmatpush1.bf16.xpose.msra.mxu0 0
    %620 = vmatprep.subr.bf16.mxu0 0
    %621 = vmatpush1.bf16.xpose.msra.mxu0 0
    %622 = vmatprep.subr.bf16.mxu0 0
    %623 = vmatpush1.bf16.xpose.msra.mxu0 0
    %624 = vmatprep.subr.bf16.mxu0 0
    %625 = vmatpush1.bf16.xpose.msra.mxu0 0
    %626 = vmatprep.subr.bf16.mxu0 0
    %627 = vmatpush1.bf16.xpose.msra.mxu0 0
    %628 = vmatprep.subr.bf16.mxu0 0
    %629 = vmatpush1.bf16.xpose.msra.mxu0 0
    %630 = vmatprep.subr.bf16.mxu0 0
    %631 = vmatpush1.bf16.xpose.msra.mxu0 %v614
    %632 = vmatprep.subr.bf16.mxu0 0
    %633 = vmatpush2.bf16.xpose.msra.mxu0 0
    %634 = vmatprep.subr.bf16.mxu0 0
    %635 = vmatpush2.bf16.xpose.msra.mxu0 0
    %636 = vmatprep.subr.bf16.mxu0 0
    %637 = vmatpush2.bf16.xpose.msra.mxu0 0
    %638 = vmatprep.subr.bf16.mxu0 0
    %639 = vmatpush2.bf16.xpose.msra.mxu0 0
    %640 = vmatprep.subr.bf16.mxu0 0
    %641 = vmatpush2.bf16.xpose.msra.mxu0 0
    %642 = vmatprep.subr.bf16.mxu0 0
    %643 = vmatpush2.bf16.xpose.msra.mxu0 0
    %644 = vmatprep.subr.bf16.mxu0 0
    %645 = vmatpush2.bf16.xpose.msra.mxu0 0
    %646 = vmatprep.subr.bf16.mxu0 0
    %647 = vmatpush2.bf16.xpose.msra.mxu0 0
    %648 = vmatprep.mubr.bf16.mxu0 0
    %649 = vmatmul.mubr.bf16.gmra.mxu0 %v611
    %v650 = vpop.f32.mrf.mxu0
    %v651 = vadd.f32 0.0, %v650
    %v652 = vpop.f32.mrf.mxu0
    %v653 = vpop.f32.mrf.mxu0
    %v654 = vadd.f32 0.0, %v653
    %v655 = vpop.f32.mrf.mxu0
    %656 = vdwg.mxu0
    %v658 = vsel %vm267, %v605, 0
    %v661 = vsel %vm267, %v607, 0
    %663 = vmatprep.subr.bf16.mxu0 0
    %664 = vmatpush1.bf16.xpose.msra.mxu0 0
    %665 = vmatprep.subr.bf16.mxu0 0
    %666 = vmatpush1.bf16.xpose.msra.mxu0 0
    %667 = vmatprep.subr.bf16.mxu0 0
    %668 = vmatpush1.bf16.xpose.msra.mxu0 0
    %669 = vmatprep.subr.bf16.mxu0 0
    %670 = vmatpush1.bf16.xpose.msra.mxu0 0
    %671 = vmatprep.subr.bf16.mxu0 0
    %672 = vmatpush1.bf16.xpose.msra.mxu0 0
    %673 = vmatprep.subr.bf16.mxu0 0
    %674 = vmatpush1.bf16.xpose.msra.mxu0 0
    %675 = vmatprep.subr.bf16.mxu0 0
    %676 = vmatpush1.bf16.xpose.msra.mxu0 0
    %677 = vmatprep.subr.bf16.mxu0 0
    %678 = vmatpush1.bf16.xpose.msra.mxu0 %v661
    %679 = vmatprep.subr.bf16.mxu0 0
    %680 = vmatpush2.bf16.xpose.msra.mxu0 0
    %681 = vmatprep.subr.bf16.mxu0 0
    %682 = vmatpush2.bf16.xpose.msra.mxu0 0
    %683 = vmatprep.subr.bf16.mxu0 0
    %684 = vmatpush2.bf16.xpose.msra.mxu0 0
    %685 = vmatprep.subr.bf16.mxu0 0
    %686 = vmatpush2.bf16.xpose.msra.mxu0 0
    %687 = vmatprep.subr.bf16.mxu0 0
    %688 = vmatpush2.bf16.xpose.msra.mxu0 0
    %689 = vmatprep.subr.bf16.mxu0 0
    %690 = vmatpush2.bf16.xpose.msra.mxu0 0
    %691 = vmatprep.subr.bf16.mxu0 0
    %692 = vmatpush2.bf16.xpose.msra.mxu0 0
    %693 = vmatprep.subr.bf16.mxu0 0
    %694 = vmatpush2.bf16.xpose.msra.mxu0 0
    %695 = vmatprep.mubr.bf16.mxu0 0
    %696 = vmatmul.mubr.bf16.gmra.mxu0 %v658
    %v697 = vpop.f32.mrf.mxu0
    %v698 = vadd.f32 0.0, %v697
    %v699 = vpop.f32.mrf.mxu0
    %v700 = vpop.f32.mrf.mxu0
    %v701 = vadd.f32 0.0, %v700
    %v702 = vpop.f32.mrf.mxu0
    %703 = vdwg.mxu0
    %vm704 = vcmask 130048
    %v705 = vsel %vm704, %v651, -inf
    %706 = vmax.xlane.f32.xlu0 %v705
    %v707 = vpop.xlane.xlu0 %706
    %v708 = vsel %vm704, %v654, -inf
    %709 = vmax.xlane.f32.xlu0 %v708
    %v710 = vpop.xlane.xlu0 %709
    %v711 = vsel %vm704, %v698, -inf
    %712 = vmax.xlane.f32.xlu0 %v711
    %v713 = vpop.xlane.xlu0 %712
    %v714 = vsel %vm704, %v701, -inf
    %715 = vmax.xlane.f32.xlu0 %v714
    %v716 = vpop.xlane.xlu0 %715
    %v717 = vsub.f32 %v651, %v707
    %v718 = vsub.f32 %v654, %v710
    %v719 = vsub.f32 %v698, %v713
    %v720 = vsub.f32 %v701, %v716
    %v721 = vmul.f32 %v717, 1.442695
    %v722 = vpow.pop %v721
    %v723 = vmul.f32 %v718, 1.442695
    %v724 = vpow.pop %v723
    %v725 = vmul.f32 %v719, 1.442695
    %v726 = vpow.pop %v725
    %v727 = vmul.f32 %v720, 1.442695
    %v728 = vpow.pop %v727
    %v729 = vsel %vm704, %v722, 0.0
    %730 = vadd.xlane.f32.xlu0 %v729
    %v731 = vpop.xlane.xlu0 %730
    %v732 = vsel %vm704, %v724, 0.0
    %733 = vadd.xlane.f32.xlu0 %v732
    %v734 = vpop.xlane.xlu0 %733
    %v735 = vsel %vm704, %v726, 0.0
    %736 = vadd.xlane.f32.xlu0 %v735
    %v737 = vpop.xlane.xlu0 %736
    %v738 = vsel %vm704, %v728, 0.0
    %739 = vadd.xlane.f32.xlu0 %v738
    %v740 = vpop.xlane.xlu0 %739
    %v741 = vrcp.pop %v731
    %v742 = vrcp.pop %v734
    %v743 = vrcp.pop %v737
    %v744 = vrcp.pop %v740
    %v745 = vmul.f32 %v722, %v741
    %v746 = vmul.f32 %v724, %v742
    %v747 = vmul.f32 %v726, %v743
    %v748 = vmul.f32 %v728, %v744
    %v749 = vpack.c.bf16 %v746, %v745
    %v750 = vpack.c.bf16 %v748, %v747
    %v752 = vsel %vm704, %v749, 0
    %754 = vmatprep.subr.bf16.mxu0 0
    %755 = vmatpush1.bf16.msra.mxu0 0
    %756 = vmatprep.subr.bf16.mxu0 0
    %757 = vmatpush1.bf16.msra.mxu0 0
    %758 = vmatprep.subr.bf16.mxu0 0
    %759 = vmatpush1.bf16.msra.mxu0 0
    %760 = vmatprep.subr.bf16.mxu0 0
    %761 = vmatpush1.bf16.msra.mxu0 0
    %762 = vmatprep.subr.bf16.mxu0 0
    %763 = vmatpush1.bf16.msra.mxu0 0
    %764 = vmatprep.subr.bf16.mxu0 0
    %765 = vmatpush1.bf16.msra.mxu0 0
    %766 = vmatprep.subr.bf16.mxu0 0
    %767 = vmatpush1.bf16.msra.mxu0 0
    %768 = vmatprep.subr.bf16.mxu0 0
    %769 = vmatpush1.bf16.msra.mxu0 %v608
    %770 = vmatprep.subr.bf16.mxu0 0
    %771 = vmatpush2.bf16.msra.mxu0 0
    %772 = vmatprep.subr.bf16.mxu0 0
    %773 = vmatpush2.bf16.msra.mxu0 0
    %774 = vmatprep.subr.bf16.mxu0 0
    %775 = vmatpush2.bf16.msra.mxu0 0
    %776 = vmatprep.subr.bf16.mxu0 0
    %777 = vmatpush2.bf16.msra.mxu0 0
    %778 = vmatprep.subr.bf16.mxu0 0
    %779 = vmatpush2.bf16.msra.mxu0 0
    %780 = vmatprep.subr.bf16.mxu0 0
    %781 = vmatpush2.bf16.msra.mxu0 0
    %782 = vmatprep.subr.bf16.mxu0 0
    %783 = vmatpush2.bf16.msra.mxu0 0
    %784 = vmatprep.subr.bf16.mxu0 0
    %785 = vmatpush2.bf16.msra.mxu0 0
    %786 = vmatprep.mubr.bf16.mxu0 0
    %787 = vmatmul.mubr.bf16.gmra.mxu0 %v752
    %v788 = vpop.f32.mrf.mxu0
    %v789 = vadd.f32 0.0, %v788
    %v790 = vpop.f32.mrf.mxu0
    %v791 = vpop.f32.mrf.mxu0
    %v792 = vadd.f32 0.0, %v791
    %v793 = vpop.f32.mrf.mxu0
    %794 = vdwg.mxu0
    %v796 = vsel %vm704, %v750, 0
    %798 = vmatprep.subr.bf16.mxu0 0
    %799 = vmatpush1.bf16.msra.mxu0 0
    %800 = vmatprep.subr.bf16.mxu0 0
    %801 = vmatpush1.bf16.msra.mxu0 0
    %802 = vmatprep.subr.bf16.mxu0 0
    %803 = vmatpush1.bf16.msra.mxu0 0
    %804 = vmatprep.subr.bf16.mxu0 0
    %805 = vmatpush1.bf16.msra.mxu0 0
    %806 = vmatprep.subr.bf16.mxu0 0
    %807 = vmatpush1.bf16.msra.mxu0 0
    %808 = vmatprep.subr.bf16.mxu0 0
    %809 = vmatpush1.bf16.msra.mxu0 0
    %810 = vmatprep.subr.bf16.mxu0 0
    %811 = vmatpush1.bf16.msra.mxu0 0
    %812 = vmatprep.subr.bf16.mxu0 0
    %813 = vmatpush1.bf16.msra.mxu0 %v609
    %814 = vmatprep.subr.bf16.mxu0 0
    %815 = vmatpush2.bf16.msra.mxu0 0
    %816 = vmatprep.subr.bf16.mxu0 0
    %817 = vmatpush2.bf16.msra.mxu0 0
    %818 = vmatprep.subr.bf16.mxu0 0
    %819 = vmatpush2.bf16.msra.mxu0 0
    %820 = vmatprep.subr.bf16.mxu0 0
    %821 = vmatpush2.bf16.msra.mxu0 0
    %822 = vmatprep.subr.bf16.mxu0 0
    %823 = vmatpush2.bf16.msra.mxu0 0
    %824 = vmatprep.subr.bf16.mxu0 0
    %825 = vmatpush2.bf16.msra.mxu0 0
    %826 = vmatprep.subr.bf16.mxu0 0
    %827 = vmatpush2.bf16.msra.mxu0 0
    %828 = vmatprep.subr.bf16.mxu0 0
    %829 = vmatpush2.bf16.msra.mxu0 0
    %830 = vmatprep.mubr.bf16.mxu0 0
    %831 = vmatmul.mubr.bf16.gmra.mxu0 %v796
    %v832 = vpop.f32.mrf.mxu0
    %v833 = vadd.f32 0.0, %v832
    %v834 = vpop.f32.mrf.mxu0
    %v835 = vpop.f32.mrf.mxu0
    %v836 = vadd.f32 0.0, %v835
    %v837 = vpop.f32.mrf.mxu0
    %838 = vdwg.mxu0
    %v839 = vpack.c.bf16 %v792, %v789
    %v840 = vpack.c.bf16 %v836, %v833
    %v843 = vunpack.c.l.b16 %v839
    %v844 = vunpack.c.h.b16 %v839
    %v845 = vunpack.c.l.b16 %v840
    %v846 = vunpack.c.h.b16 %v840
    %v847 = vpack.c.b16 %v843, %v843
    %v848 = vpack.c.b16 %v844, %v844
    %v849 = vpack.c.b16 %v845, %v845
    %v850 = vpack.c.b16 %v846, %v846
    %vm855 = vcmask 257024
    %856 = vst.msk [vmem:[#allocation2] sm:$0xf] %vm855, %v847
    %857 = vst.msk [vmem:[#allocation2 + $0x4] sm:$0xf] %vm855, %v848
    %858 = vst.msk [vmem:[#allocation2 + $0x8] sm:$0xf] %vm855, %v849
    %859 = vst.msk [vmem:[#allocation2 + $0xc] sm:$0xf] %vm855, %v850
    %861 = vrot.lane.b32.xlu0 %v604, 96
    %v862 = vpop.permute.xlu0 %861
    %864 = vrot.lane.b32.xlu0 %v606, 96
    %v865 = vpop.permute.xlu0 %864
    %v867 = vsel %vm267, %v862, 0
    %v870 = vsel %vm267, %v865, 0
    %872 = vmatprep.subr.bf16.mxu0 0
    %873 = vmatpush1.bf16.xpose.msra.mxu0 0
    %874 = vmatprep.subr.bf16.mxu0 0
    %875 = vmatpush1.bf16.xpose.msra.mxu0 0
    %876 = vmatprep.subr.bf16.mxu0 0
    %877 = vmatpush1.bf16.xpose.msra.mxu0 0
    %878 = vmatprep.subr.bf16.mxu0 0
    %879 = vmatpush1.bf16.xpose.msra.mxu0 0
    %880 = vmatprep.subr.bf16.mxu0 0
    %881 = vmatpush1.bf16.xpose.msra.mxu0 0
    %882 = vmatprep.subr.bf16.mxu0 0
    %883 = vmatpush1.bf16.xpose.msra.mxu0 0
    %884 = vmatprep.subr.bf16.mxu0 0
    %885 = vmatpush1.bf16.xpose.msra.mxu0 0
    %886 = vmatprep.subr.bf16.mxu0 0
    %887 = vmatpush1.bf16.xpose.msra.mxu0 %v870
    %888 = vmatprep.subr.bf16.mxu0 0
    %889 = vmatpush2.bf16.xpose.msra.mxu0 0
    %890 = vmatprep.subr.bf16.mxu0 0
    %891 = vmatpush2.bf16.xpose.msra.mxu0 0
    %892 = vmatprep.subr.bf16.mxu0 0
    %893 = vmatpush2.bf16.xpose.msra.mxu0 0
    %894 = vmatprep.subr.bf16.mxu0 0
    %895 = vmatpush2.bf16.xpose.msra.mxu0 0
    %896 = vmatprep.subr.bf16.mxu0 0
    %897 = vmatpush2.bf16.xpose.msra.mxu0 0
    %898 = vmatprep.subr.bf16.mxu0 0
    %899 = vmatpush2.bf16.xpose.msra.mxu0 0
    %900 = vmatprep.subr.bf16.mxu0 0
    %901 = vmatpush2.bf16.xpose.msra.mxu0 0
    %902 = vmatprep.subr.bf16.mxu0 0
    %903 = vmatpush2.bf16.xpose.msra.mxu0 0
    %904 = vmatprep.mubr.bf16.mxu0 0
    %905 = vmatmul.mubr.bf16.gmra.mxu0 %v867
    %v906 = vpop.f32.mrf.mxu0
    %v907 = vadd.f32 0.0, %v906
    %v908 = vpop.f32.mrf.mxu0
    %v909 = vpop.f32.mrf.mxu0
    %v910 = vadd.f32 0.0, %v909
    %v911 = vpop.f32.mrf.mxu0
    %912 = vdwg.mxu0
    %914 = vrot.lane.b32.xlu0 %v605, 96
    %v915 = vpop.permute.xlu0 %914
    %917 = vrot.lane.b32.xlu0 %v607, 96
    %v918 = vpop.permute.xlu0 %917
    %v920 = vsel %vm267, %v915, 0
    %v923 = vsel %vm267, %v918, 0
    %925 = vmatprep.subr.bf16.mxu0 0
    %926 = vmatpush1.bf16.xpose.msra.mxu0 0
    %927 = vmatprep.subr.bf16.mxu0 0
    %928 = vmatpush1.bf16.xpose.msra.mxu0 0
    %929 = vmatprep.subr.bf16.mxu0 0
    %930 = vmatpush1.bf16.xpose.msra.mxu0 0
    %931 = vmatprep.subr.bf16.mxu0 0
    %932 = vmatpush1.bf16.xpose.msra.mxu0 0
    %933 = vmatprep.subr.bf16.mxu0 0
    %934 = vmatpush1.bf16.xpose.msra.mxu0 0
    %935 = vmatprep.subr.bf16.mxu0 0
    %936 = vmatpush1.bf16.xpose.msra.mxu0 0
    %937 = vmatprep.subr.bf16.mxu0 0
    %938 = vmatpush1.bf16.xpose.msra.mxu0 0
    %939 = vmatprep.subr.bf16.mxu0 0
    %940 = vmatpush1.bf16.xpose.msra.mxu0 %v923
    %941 = vmatprep.subr.bf16.mxu0 0
    %942 = vmatpush2.bf16.xpose.msra.mxu0 0
    %943 = vmatprep.subr.bf16.mxu0 0
    %944 = vmatpush2.bf16.xpose.msra.mxu0 0
    %945 = vmatprep.subr.bf16.mxu0 0
    %946 = vmatpush2.bf16.xpose.msra.mxu0 0
    %947 = vmatprep.subr.bf16.mxu0 0
    %948 = vmatpush2.bf16.xpose.msra.mxu0 0
    %949 = vmatprep.subr.bf16.mxu0 0
    %950 = vmatpush2.bf16.xpose.msra.mxu0 0
    %951 = vmatprep.subr.bf16.mxu0 0
    %952 = vmatpush2.bf16.xpose.msra.mxu0 0
    %953 = vmatprep.subr.bf16.mxu0 0
    %954 = vmatpush2.bf16.xpose.msra.mxu0 0
    %955 = vmatprep.subr.bf16.mxu0 0
    %956 = vmatpush2.bf16.xpose.msra.mxu0 0
    %957 = vmatprep.mubr.bf16.mxu0 0
    %958 = vmatmul.mubr.bf16.gmra.mxu0 %v920
    %v959 = vpop.f32.mrf.mxu0
    %v960 = vadd.f32 0.0, %v959
    %v961 = vpop.f32.mrf.mxu0
    %v962 = vpop.f32.mrf.mxu0
    %v963 = vadd.f32 0.0, %v962
    %v964 = vpop.f32.mrf.mxu0
    %965 = vdwg.mxu0
    %v966 = vsel %vm704, %v907, -inf
    %967 = vmax.xlane.f32.xlu0 %v966
    %v968 = vpop.xlane.xlu0 %967
    %v969 = vsel %vm704, %v910, -inf
    %970 = vmax.xlane.f32.xlu0 %v969
    %v971 = vpop.xlane.xlu0 %970
    %v972 = vsel %vm704, %v960, -inf
    %973 = vmax.xlane.f32.xlu0 %v972
    %v974 = vpop.xlane.xlu0 %973
    %v975 = vsel %vm704, %v963, -inf
    %976 = vmax.xlane.f32.xlu0 %v975
    %v977 = vpop.xlane.xlu0 %976
    %v978 = vsub.f32 %v907, %v968
    %v979 = vsub.f32 %v910, %v971
    %v980 = vsub.f32 %v960, %v974
    %v981 = vsub.f32 %v963, %v977
    %v982 = vmul.f32 %v978, 1.442695
    %v983 = vpow.pop %v982
    %v984 = vmul.f32 %v979, 1.442695
    %v985 = vpow.pop %v984
    %v986 = vmul.f32 %v980, 1.442695
    %v987 = vpow.pop %v986
    %v988 = vmul.f32 %v981, 1.442695
    %v989 = vpow.pop %v988
    %v990 = vsel %vm704, %v983, 0.0
    %991 = vadd.xlane.f32.xlu0 %v990
    %v992 = vpop.xlane.xlu0 %991
    %v993 = vsel %vm704, %v985, 0.0
    %994 = vadd.xlane.f32.xlu0 %v993
    %v995 = vpop.xlane.xlu0 %994
    %v996 = vsel %vm704, %v987, 0.0
    %997 = vadd.xlane.f32.xlu0 %v996
    %v998 = vpop.xlane.xlu0 %997
    %v999 = vsel %vm704, %v989, 0.0
    %1000 = vadd.xlane.f32.xlu0 %v999
    %v1001 = vpop.xlane.xlu0 %1000
    %v1002 = vrcp.pop %v992
    %v1003 = vrcp.pop %v995
    %v1004 = vrcp.pop %v998
    %v1005 = vrcp.pop %v1001
    %v1006 = vmul.f32 %v983, %v1002
    %v1007 = vmul.f32 %v985, %v1003
    %v1008 = vmul.f32 %v987, %v1004
    %v1009 = vmul.f32 %v989, %v1005
    %v1010 = vpack.c.bf16 %v1007, %v1006
    %v1011 = vpack.c.bf16 %v1009, %v1008
    %1013 = vrot.lane.b32.xlu0 %v608, 96
    %v1014 = vpop.permute.xlu0 %1013
    %v1017 = vsel %vm704, %v1010, 0
    %1019 = vmatprep.subr.bf16.mxu0 0
    %1020 = vmatpush1.bf16.msra.mxu0 0
    %1021 = vmatprep.subr.bf16.mxu0 0
    %1022 = vmatpush1.bf16.msra.mxu0 0
    %1023 = vmatprep.subr.bf16.mxu0 0
    %1024 = vmatpush1.bf16.msra.mxu0 0
    %1025 = vmatprep.subr.bf16.mxu0 0
    %1026 = vmatpush1.bf16.msra.mxu0 0
    %1027 = vmatprep.subr.bf16.mxu0 0
    %1028 = vmatpush1.bf16.msra.mxu0 0
    %1029 = vmatprep.subr.bf16.mxu0 0
    %1030 = vmatpush1.bf16.msra.mxu0 0
    %1031 = vmatprep.subr.bf16.mxu0 0
    %1032 = vmatpush1.bf16.msra.mxu0 0
    %1033 = vmatprep.subr.bf16.mxu0 0
    %1034 = vmatpush1.bf16.msra.mxu0 %v1014
    %1035 = vmatprep.subr.bf16.mxu0 0
    %1036 = vmatpush2.bf16.msra.mxu0 0
    %1037 = vmatprep.subr.bf16.mxu0 0
    %1038 = vmatpush2.bf16.msra.mxu0 0
    %1039 = vmatprep.subr.bf16.mxu0 0
    %1040 = vmatpush2.bf16.msra.mxu0 0
    %1041 = vmatprep.subr.bf16.mxu0 0
    %1042 = vmatpush2.bf16.msra.mxu0 0
    %1043 = vmatprep.subr.bf16.mxu0 0
    %1044 = vmatpush2.bf16.msra.mxu0 0
    %1045 = vmatprep.subr.bf16.mxu0 0
    %1046 = vmatpush2.bf16.msra.mxu0 0
    %1047 = vmatprep.subr.bf16.mxu0 0
    %1048 = vmatpush2.bf16.msra.mxu0 0
    %1049 = vmatprep.subr.bf16.mxu0 0
    %1050 = vmatpush2.bf16.msra.mxu0 0
    %1051 = vmatprep.mubr.bf16.mxu0 0
    %1052 = vmatmul.mubr.bf16.gmra.mxu0 %v1017
    %v1053 = vpop.f32.mrf.mxu0
    %v1054 = vadd.f32 0.0, %v1053
    %v1055 = vpop.f32.mrf.mxu0
    %v1056 = vpop.f32.mrf.mxu0
    %v1057 = vadd.f32 0.0, %v1056
    %v1058 = vpop.f32.mrf.mxu0
    %1059 = vdwg.mxu0
    %1061 = vrot.lane.b32.xlu0 %v609, 96
    %v1062 = vpop.permute.xlu0 %1061
    %v1065 = vsel %vm704, %v1011, 0
    %1067 = vmatprep.subr.bf16.mxu0 0
    %1068 = vmatpush1.bf16.msra.mxu0 0
    %1069 = vmatprep.subr.bf16.mxu0 0
    %1070 = vmatpush1.bf16.msra.mxu0 0
    %1071 = vmatprep.subr.bf16.mxu0 0
    %1072 = vmatpush1.bf16.msra.mxu0 0
    %1073 = vmatprep.subr.bf16.mxu0 0
    %1074 = vmatpush1.bf16.msra.mxu0 0
    %1075 = vmatprep.subr.bf16.mxu0 0
    %1076 = vmatpush1.bf16.msra.mxu0 0
    %1077 = vmatprep.subr.bf16.mxu0 0
    %1078 = vmatpush1.bf16.msra.mxu0 0
    %1079 = vmatprep.subr.bf16.mxu0 0
    %1080 = vmatpush1.bf16.msra.mxu0 0
    %1081 = vmatprep.subr.bf16.mxu0 0
    %1082 = vmatpush1.bf16.msra.mxu0 %v1062
    %1083 = vmatprep.subr.bf16.mxu0 0
    %1084 = vmatpush2.bf16.msra.mxu0 0
    %1085 = vmatprep.subr.bf16.mxu0 0
    %1086 = vmatpush2.bf16.msra.mxu0 0
    %1087 = vmatprep.subr.bf16.mxu0 0
    %1088 = vmatpush2.bf16.msra.mxu0 0
    %1089 = vmatprep.subr.bf16.mxu0 0
    %1090 = vmatpush2.bf16.msra.mxu0 0
    %1091 = vmatprep.subr.bf16.mxu0 0
    %1092 = vmatpush2.bf16.msra.mxu0 0
    %1093 = vmatprep.subr.bf16.mxu0 0
    %1094 = vmatpush2.bf16.msra.mxu0 0
    %1095 = vmatprep.subr.bf16.mxu0 0
    %1096 = vmatpush2.bf16.msra.mxu0 0
    %1097 = vmatprep.subr.bf16.mxu0 0
    %1098 = vmatpush2.bf16.msra.mxu0 0
    %1099 = vmatprep.mubr.bf16.mxu0 0
    %1100 = vmatmul.mubr.bf16.gmra.mxu0 %v1065
    %v1101 = vpop.f32.mrf.mxu0
    %v1102 = vadd.f32 0.0, %v1101
    %v1103 = vpop.f32.mrf.mxu0
    %v1104 = vpop.f32.mrf.mxu0
    %v1105 = vadd.f32 0.0, %v1104
    %v1106 = vpop.f32.mrf.mxu0
    %1107 = vdwg.mxu0
    %v1108 = vpack.c.bf16 %v1057, %v1054
    %v1109 = vpack.c.bf16 %v1105, %v1102
    %v1112 = vunpack.c.l.b16 %v1108
    %v1113 = vunpack.c.h.b16 %v1108
    %v1114 = vunpack.c.l.b16 %v1109
    %v1115 = vunpack.c.h.b16 %v1109
    %v1116 = vpack.c.b16 %v1112, %v1112
    %v1117 = vpack.c.b16 %v1113, %v1113
    %v1118 = vpack.c.b16 %v1114, %v1114
    %v1119 = vpack.c.b16 %v1115, %v1115
    %1120 = vrot.lane.b32.xlu0 %v1116, 32
    %v1121 = vpop.permute.xlu0 %1120
    %1122 = vrot.lane.b32.xlu0 %v1117, 32
    %v1123 = vpop.permute.xlu0 %1122
    %1124 = vrot.lane.b32.xlu0 %v1118, 32
    %v1125 = vpop.permute.xlu0 %1124
    %1126 = vrot.lane.b32.xlu0 %v1119, 32
    %v1127 = vpop.permute.xlu0 %1126
    %vm1132 = vcmask 519424
    %1133 = vst.msk [vmem:[#allocation2] sm:$0xf] %vm1132, %v1121
    %1134 = vst.msk [vmem:[#allocation2 + $0x4] sm:$0xf] %vm1132, %v1123
    %1135 = vst.msk [vmem:[#allocation2 + $0x8] sm:$0xf] %vm1132, %v1125
    %1136 = vst.msk [vmem:[#allocation2 + $0xc] sm:$0xf] %vm1132, %v1127
    %1137 = vrot.lane.b32.xlu0 %v604, 64
    %v1138 = vpop.permute.xlu0 %1137
    %1139 = vrot.lane.b32.xlu0 %v606, 64
    %v1140 = vpop.permute.xlu0 %1139
    %v1142 = vsel %vm267, %v1138, 0
    %v1145 = vsel %vm267, %v1140, 0
    %1147 = vmatprep.subr.bf16.mxu0 0
    %1148 = vmatpush1.bf16.xpose.msra.mxu0 0
    %1149 = vmatprep.subr.bf16.mxu0 0
    %1150 = vmatpush1.bf16.xpose.msra.mxu0 0
    %1151 = vmatprep.subr.bf16.mxu0 0
    %1152 = vmatpush1.bf16.xpose.msra.mxu0 0
    %1153 = vmatprep.subr.bf16.mxu0 0
    %1154 = vmatpush1.bf16.xpose.msra.mxu0 0
    %1155 = vmatprep.subr.bf16.mxu0 0
    %1156 = vmatpush1.bf16.xpose.msra.mxu0 0
    %1157 = vmatprep.subr.bf16.mxu0 0
    %1158 = vmatpush1.bf16.xpose.msra.mxu0 0
    %1159 = vmatprep.subr.bf16.mxu0 0
    %1160 = vmatpush1.bf16.xpose.msra.mxu0 0
    %1161 = vmatprep.subr.bf16.mxu0 0
    %1162 = vmatpush1.bf16.xpose.msra.mxu0 %v1145
    %1163 = vmatprep.subr.bf16.mxu0 0
    %1164 = vmatpush2.bf16.xpose.msra.mxu0 0
    %1165 = vmatprep.subr.bf16.mxu0 0
    %1166 = vmatpush2.bf16.xpose.msra.mxu0 0
    %1167 = vmatprep.subr.bf16.mxu0 0
    %1168 = vmatpush2.bf16.xpose.msra.mxu0 0
    %1169 = vmatprep.subr.bf16.mxu0 0
    %1170 = vmatpush2.bf16.xpose.msra.mxu0 0
    %1171 = vmatprep.subr.bf16.mxu0 0
    %1172 = vmatpush2.bf16.xpose.msra.mxu0 0
    %1173 = vmatprep.subr.bf16.mxu0 0
    %1174 = vmatpush2.bf16.xpose.msra.mxu0 0
    %1175 = vmatprep.subr.bf16.mxu0 0
    %1176 = vmatpush2.bf16.xpose.msra.mxu0 0
    %1177 = vmatprep.subr.bf16.mxu0 0
    %1178 = vmatpush2.bf16.xpose.msra.mxu0 0
    %1179 = vmatprep.mubr.bf16.mxu0 0
    %1180 = vmatmul.mubr.bf16.gmra.mxu0 %v1142
    %v1181 = vpop.f32.mrf.mxu0
    %v1182 = vadd.f32 0.0, %v1181
    %v1183 = vpop.f32.mrf.mxu0
    %v1184 = vpop.f32.mrf.mxu0
    %v1185 = vadd.f32 0.0, %v1184
    %v1186 = vpop.f32.mrf.mxu0
    %1187 = vdwg.mxu0
    %1188 = vrot.lane.b32.xlu0 %v605, 64
    %v1189 = vpop.permute.xlu0 %1188
    %1190 = vrot.lane.b32.xlu0 %v607, 64
    %v1191 = vpop.permute.xlu0 %1190
    %v1193 = vsel %vm267, %v1189, 0
    %v1196 = vsel %vm267, %v1191, 0
    %1198 = vmatprep.subr.bf16.mxu0 0
    %1199 = vmatpush1.bf16.xpose.msra.mxu0 0
    %1200 = vmatprep.subr.bf16.mxu0 0
    %1201 = vmatpush1.bf16.xpose.msra.mxu0 0
    %1202 = vmatprep.subr.bf16.mxu0 0
    %1203 = vmatpush1.bf16.xpose.msra.mxu0 0
    %1204 = vmatprep.subr.bf16.mxu0 0
    %1205 = vmatpush1.bf16.xpose.msra.mxu0 0
    %1206 = vmatprep.subr.bf16.mxu0 0
    %1207 = vmatpush1.bf16.xpose.msra.mxu0 0
    %1208 = vmatprep.subr.bf16.mxu0 0
    %1209 = vmatpush1.bf16.xpose.msra.mxu0 0
    %1210 = vmatprep.subr.bf16.mxu0 0
    %1211 = vmatpush1.bf16.xpose.msra.mxu0 0
    %1212 = vmatprep.subr.bf16.mxu0 0
    %1213 = vmatpush1.bf16.xpose.msra.mxu0 %v1196
    %1214 = vmatprep.subr.bf16.mxu0 0
    %1215 = vmatpush2.bf16.xpose.msra.mxu0 0
    %1216 = vmatprep.subr.bf16.mxu0 0
    %1217 = vmatpush2.bf16.xpose.msra.mxu0 0
    %1218 = vmatprep.subr.bf16.mxu0 0
    %1219 = vmatpush2.bf16.xpose.msra.mxu0 0
    %1220 = vmatprep.subr.bf16.mxu0 0
    %1221 = vmatpush2.bf16.xpose.msra.mxu0 0
    %1222 = vmatprep.subr.bf16.mxu0 0
    %1223 = vmatpush2.bf16.xpose.msra.mxu0 0
    %1224 = vmatprep.subr.bf16.mxu0 0
    %1225 = vmatpush2.bf16.xpose.msra.mxu0 0
    %1226 = vmatprep.subr.bf16.mxu0 0
    %1227 = vmatpush2.bf16.xpose.msra.mxu0 0
    %1228 = vmatprep.subr.bf16.mxu0 0
    %1229 = vmatpush2.bf16.xpose.msra.mxu0 0
    %1230 = vmatprep.mubr.bf16.mxu0 0
    %1231 = vmatmul.mubr.bf16.gmra.mxu0 %v1193
    %v1232 = vpop.f32.mrf.mxu0
    %v1233 = vadd.f32 0.0, %v1232
    %v1234 = vpop.f32.mrf.mxu0
    %v1235 = vpop.f32.mrf.mxu0
    %v1236 = vadd.f32 0.0, %v1235
    %v1237 = vpop.f32.mrf.mxu0
    %1238 = vdwg.mxu0
    %v1239 = vsel %vm704, %v1182, -inf
    %1240 = vmax.xlane.f32.xlu0 %v1239
    %v1241 = vpop.xlane.xlu0 %1240
    %v1242 = vsel %vm704, %v1185, -inf
    %1243 = vmax.xlane.f32.xlu0 %v1242
    %v1244 = vpop.xlane.xlu0 %1243
    %v1245 = vsel %vm704, %v1233, -inf
    %1246 = vmax.xlane.f32.xlu0 %v1245
    %v1247 = vpop.xlane.xlu0 %1246
    %v1248 = vsel %vm704, %v1236, -inf
    %1249 = vmax.xlane.f32.xlu0 %v1248
    %v1250 = vpop.xlane.xlu0 %1249
    %v1251 = vsub.f32 %v1182, %v1241
    %v1252 = vsub.f32 %v1185, %v1244
    %v1253 = vsub.f32 %v1233, %v1247
    %v1254 = vsub.f32 %v1236, %v1250
    %v1255 = vmul.f32 %v1251, 1.442695
    %v1256 = vpow.pop %v1255
    %v1257 = vmul.f32 %v1252, 1.442695
    %v1258 = vpow.pop %v1257
    %v1259 = vmul.f32 %v1253, 1.442695
    %v1260 = vpow.pop %v1259
    %v1261 = vmul.f32 %v1254, 1.442695
    %v1262 = vpow.pop %v1261
    %v1263 = vsel %vm704, %v1256, 0.0
    %1264 = vadd.xlane.f32.xlu0 %v1263
    %v1265 = vpop.xlane.xlu0 %1264
    %v1266 = vsel %vm704, %v1258, 0.0
    %1267 = vadd.xlane.f32.xlu0 %v1266
    %v1268 = vpop.xlane.xlu0 %1267
    %v1269 = vsel %vm704, %v1260, 0.0
    %1270 = vadd.xlane.f32.xlu0 %v1269
    %v1271 = vpop.xlane.xlu0 %1270
    %v1272 = vsel %vm704, %v1262, 0.0
    %1273 = vadd.xlane.f32.xlu0 %v1272
    %v1274 = vpop.xlane.xlu0 %1273
    %v1275 = vrcp.pop %v1265
    %v1276 = vrcp.pop %v1268
    %v1277 = vrcp.pop %v1271
    %v1278 = vrcp.pop %v1274
    %v1279 = vmul.f32 %v1256, %v1275
    %v1280 = vmul.f32 %v1258, %v1276
    %v1281 = vmul.f32 %v1260, %v1277
    %v1282 = vmul.f32 %v1262, %v1278
    %v1283 = vpack.c.bf16 %v1280, %v1279
    %v1284 = vpack.c.bf16 %v1282, %v1281
    %1285 = vrot.lane.b32.xlu0 %v608, 64
    %v1286 = vpop.permute.xlu0 %1285
    %v1289 = vsel %vm704, %v1283, 0
    %1291 = vmatprep.subr.bf16.mxu0 0
    %1292 = vmatpush1.bf16.msra.mxu0 0
    %1293 = vmatprep.subr.bf16.mxu0 0
    %1294 = vmatpush1.bf16.msra.mxu0 0
    %1295 = vmatprep.subr.bf16.mxu0 0
    %1296 = vmatpush1.bf16.msra.mxu0 0
    %1297 = vmatprep.subr.bf16.mxu0 0
    %1298 = vmatpush1.bf16.msra.mxu0 0
    %1299 = vmatprep.subr.bf16.mxu0 0
    %1300 = vmatpush1.bf16.msra.mxu0 0
    %1301 = vmatprep.subr.bf16.mxu0 0
    %1302 = vmatpush1.bf16.msra.mxu0 0
    %1303 = vmatprep.subr.bf16.mxu0 0
    %1304 = vmatpush1.bf16.msra.mxu0 0
    %1305 = vmatprep.subr.bf16.mxu0 0
    %1306 = vmatpush1.bf16.msra.mxu0 %v1286
    %1307 = vmatprep.subr.bf16.mxu0 0
    %1308 = vmatpush2.bf16.msra.mxu0 0
    %1309 = vmatprep.subr.bf16.mxu0 0
    %1310 = vmatpush2.bf16.msra.mxu0 0
    %1311 = vmatprep.subr.bf16.mxu0 0
    %1312 = vmatpush2.bf16.msra.mxu0 0
    %1313 = vmatprep.subr.bf16.mxu0 0
    %1314 = vmatpush2.bf16.msra.mxu0 0
    %1315 = vmatprep.subr.bf16.mxu0 0
    %1316 = vmatpush2.bf16.msra.mxu0 0
    %1317 = vmatprep.subr.bf16.mxu0 0
    %1318 = vmatpush2.bf16.msra.mxu0 0
    %1319 = vmatprep.subr.bf16.mxu0 0
    %1320 = vmatpush2.bf16.msra.mxu0 0
    %1321 = vmatprep.subr.bf16.mxu0 0
    %1322 = vmatpush2.bf16.msra.mxu0 0
    %1323 = vmatprep.mubr.bf16.mxu0 0
    %1324 = vmatmul.mubr.bf16.gmra.mxu0 %v1289
    %v1325 = vpop.f32.mrf.mxu0
    %v1326 = vadd.f32 0.0, %v1325
    %v1327 = vpop.f32.mrf.mxu0
    %v1328 = vpop.f32.mrf.mxu0
    %v1329 = vadd.f32 0.0, %v1328
    %v1330 = vpop.f32.mrf.mxu0
    %1331 = vdwg.mxu0
    %1332 = vrot.lane.b32.xlu0 %v609, 64
    %v1333 = vpop.permute.xlu0 %1332
    %v1336 = vsel %vm704, %v1284, 0
    %1338 = vmatprep.subr.bf16.mxu0 0
    %1339 = vmatpush1.bf16.msra.mxu0 0
    %1340 = vmatprep.subr.bf16.mxu0 0
    %1341 = vmatpush1.bf16.msra.mxu0 0
    %1342 = vmatprep.subr.bf16.mxu0 0
    %1343 = vmatpush1.bf16.msra.mxu0 0
    %1344 = vmatprep.subr.bf16.mxu0 0
    %1345 = vmatpush1.bf16.msra.mxu0 0
    %1346 = vmatprep.subr.bf16.mxu0 0
    %1347 = vmatpush1.bf16.msra.mxu0 0
    %1348 = vmatprep.subr.bf16.mxu0 0
    %1349 = vmatpush1.bf16.msra.mxu0 0
    %1350 = vmatprep.subr.bf16.mxu0 0
    %1351 = vmatpush1.bf16.msra.mxu0 0
    %1352 = vmatprep.subr.bf16.mxu0 0
    %1353 = vmatpush1.bf16.msra.mxu0 %v1333
    %1354 = vmatprep.subr.bf16.mxu0 0
    %1355 = vmatpush2.bf16.msra.mxu0 0
    %1356 = vmatprep.subr.bf16.mxu0 0
    %1357 = vmatpush2.bf16.msra.mxu0 0
    %1358 = vmatprep.subr.bf16.mxu0 0
    %1359 = vmatpush2.bf16.msra.mxu0 0
    %1360 = vmatprep.subr.bf16.mxu0 0
    %1361 = vmatpush2.bf16.msra.mxu0 0
    %1362 = vmatprep.subr.bf16.mxu0 0
    %1363 = vmatpush2.bf16.msra.mxu0 0
    %1364 = vmatprep.subr.bf16.mxu0 0
    %1365 = vmatpush2.bf16.msra.mxu0 0
    %1366 = vmatprep.subr.bf16.mxu0 0
    %1367 = vmatpush2.bf16.msra.mxu0 0
    %1368 = vmatprep.subr.bf16.mxu0 0
    %1369 = vmatpush2.bf16.msra.mxu0 0
    %1370 = vmatprep.mubr.bf16.mxu0 0
    %1371 = vmatmul.mubr.bf16.gmra.mxu0 %v1336
    %v1372 = vpop.f32.mrf.mxu0
    %v1373 = vadd.f32 0.0, %v1372
    %v1374 = vpop.f32.mrf.mxu0
    %v1375 = vpop.f32.mrf.mxu0
    %v1376 = vadd.f32 0.0, %v1375
    %v1377 = vpop.f32.mrf.mxu0
    %1378 = vdwg.mxu0
    %v1379 = vpack.c.bf16 %v1329, %v1326
    %v1380 = vpack.c.bf16 %v1376, %v1373
    %v1383 = vunpack.c.l.b16 %v1379
    %v1384 = vunpack.c.h.b16 %v1379
    %v1385 = vunpack.c.l.b16 %v1380
    %v1386 = vunpack.c.h.b16 %v1380
    %v1387 = vpack.c.b16 %v1383, %v1383
    %v1388 = vpack.c.b16 %v1384, %v1384
    %v1389 = vpack.c.b16 %v1385, %v1385
    %v1390 = vpack.c.b16 %v1386, %v1386
    %1391 = vrot.lane.b32.xlu0 %v1387, 64
    %v1392 = vpop.permute.xlu0 %1391
    %1393 = vrot.lane.b32.xlu0 %v1388, 64
    %v1394 = vpop.permute.xlu0 %1393
    %1395 = vrot.lane.b32.xlu0 %v1389, 64
    %v1396 = vpop.permute.xlu0 %1395
    %1397 = vrot.lane.b32.xlu0 %v1390, 64
    %v1398 = vpop.permute.xlu0 %1397
    %vm1403 = vcmask 781824
    %1404 = vst.msk [vmem:[#allocation2] sm:$0xf] %vm1403, %v1392
    %1405 = vst.msk [vmem:[#allocation2 + $0x4] sm:$0xf] %vm1403, %v1394
    %1406 = vst.msk [vmem:[#allocation2 + $0x8] sm:$0xf] %vm1403, %v1396
    %1407 = vst.msk [vmem:[#allocation2 + $0xc] sm:$0xf] %vm1403, %v1398
    %1408 = vrot.lane.b32.xlu0 %v604, 32
    %v1409 = vpop.permute.xlu0 %1408
    %1410 = vrot.lane.b32.xlu0 %v606, 32
    %v1411 = vpop.permute.xlu0 %1410
    %v1413 = vsel %vm267, %v1409, 0
    %v1416 = vsel %vm267, %v1411, 0
    %1418 = vmatprep.subr.bf16.mxu0 0
    %1419 = vmatpush1.bf16.xpose.msra.mxu0 0
    %1420 = vmatprep.subr.bf16.mxu0 0
    %1421 = vmatpush1.bf16.xpose.msra.mxu0 0
    %1422 = vmatprep.subr.bf16.mxu0 0
    %1423 = vmatpush1.bf16.xpose.msra.mxu0 0
    %1424 = vmatprep.subr.bf16.mxu0 0
    %1425 = vmatpush1.bf16.xpose.msra.mxu0 0
    %1426 = vmatprep.subr.bf16.mxu0 0
    %1427 = vmatpush1.bf16.xpose.msra.mxu0 0
    %1428 = vmatprep.subr.bf16.mxu0 0
    %1429 = vmatpush1.bf16.xpose.msra.mxu0 0
    %1430 = vmatprep.subr.bf16.mxu0 0
    %1431 = vmatpush1.bf16.xpose.msra.mxu0 0
    %1432 = vmatprep.subr.bf16.mxu0 0
    %1433 = vmatpush1.bf16.xpose.msra.mxu0 %v1416
    %1434 = vmatprep.subr.bf16.mxu0 0
    %1435 = vmatpush2.bf16.xpose.msra.mxu0 0
    %1436 = vmatprep.subr.bf16.mxu0 0
    %1437 = vmatpush2.bf16.xpose.msra.mxu0 0
    %1438 = vmatprep.subr.bf16.mxu0 0
    %1439 = vmatpush2.bf16.xpose.msra.mxu0 0
    %1440 = vmatprep.subr.bf16.mxu0 0
    %1441 = vmatpush2.bf16.xpose.msra.mxu0 0
    %1442 = vmatprep.subr.bf16.mxu0 0
    %1443 = vmatpush2.bf16.xpose.msra.mxu0 0
    %1444 = vmatprep.subr.bf16.mxu0 0
    %1445 = vmatpush2.bf16.xpose.msra.mxu0 0
    %1446 = vmatprep.subr.bf16.mxu0 0
    %1447 = vmatpush2.bf16.xpose.msra.mxu0 0
    %1448 = vmatprep.subr.bf16.mxu0 0
    %1449 = vmatpush2.bf16.xpose.msra.mxu0 0
    %1450 = vmatprep.mubr.bf16.mxu0 0
    %1451 = vmatmul.mubr.bf16.gmra.mxu0 %v1413
    %v1452 = vpop.f32.mrf.mxu0
    %v1453 = vadd.f32 0.0, %v1452
    %v1454 = vpop.f32.mrf.mxu0
    %v1455 = vpop.f32.mrf.mxu0
    %v1456 = vadd.f32 0.0, %v1455
    %v1457 = vpop.f32.mrf.mxu0
    %1458 = vdwg.mxu0
    %1459 = vrot.lane.b32.xlu0 %v605, 32
    %v1460 = vpop.permute.xlu0 %1459
    %1461 = vrot.lane.b32.xlu0 %v607, 32
    %v1462 = vpop.permute.xlu0 %1461
    %v1464 = vsel %vm267, %v1460, 0
    %v1467 = vsel %vm267, %v1462, 0
    %1469 = vmatprep.subr.bf16.mxu0 0
    %1470 = vmatpush1.bf16.xpose.msra.mxu0 0
    %1471 = vmatprep.subr.bf16.mxu0 0
    %1472 = vmatpush1.bf16.xpose.msra.mxu0 0
    %1473 = vmatprep.subr.bf16.mxu0 0
    %1474 = vmatpush1.bf16.xpose.msra.mxu0 0
    %1475 = vmatprep.subr.bf16.mxu0 0
    %1476 = vmatpush1.bf16.xpose.msra.mxu0 0
    %1477 = vmatprep.subr.bf16.mxu0 0
    %1478 = vmatpush1.bf16.xpose.msra.mxu0 0
    %1479 = vmatprep.subr.bf16.mxu0 0
    %1480 = vmatpush1.bf16.xpose.msra.mxu0 0
    %1481 = vmatprep.subr.bf16.mxu0 0
    %1482 = vmatpush1.bf16.xpose.msra.mxu0 0
    %1483 = vmatprep.subr.bf16.mxu0 0
    %1484 = vmatpush1.bf16.xpose.msra.mxu0 %v1467
    %1485 = vmatprep.subr.bf16.mxu0 0
    %1486 = vmatpush2.bf16.xpose.msra.mxu0 0
    %1487 = vmatprep.subr.bf16.mxu0 0
    %1488 = vmatpush2.bf16.xpose.msra.mxu0 0
    %1489 = vmatprep.subr.bf16.mxu0 0
    %1490 = vmatpush2.bf16.xpose.msra.mxu0 0
    %1491 = vmatprep.subr.bf16.mxu0 0
    %1492 = vmatpush2.bf16.xpose.msra.mxu0 0
    %1493 = vmatprep.subr.bf16.mxu0 0
    %1494 = vmatpush2.bf16.xpose.msra.mxu0 0
    %1495 = vmatprep.subr.bf16.mxu0 0
    %1496 = vmatpush2.bf16.xpose.msra.mxu0 0
    %1497 = vmatprep.subr.bf16.mxu0 0
    %1498 = vmatpush2.bf16.xpose.msra.mxu0 0
    %1499 = vmatprep.subr.bf16.mxu0 0
    %1500 = vmatpush2.bf16.xpose.msra.mxu0 0
    %1501 = vmatprep.mubr.bf16.mxu0 0
    %1502 = vmatmul.mubr.bf16.gmra.mxu0 %v1464
    %v1503 = vpop.f32.mrf.mxu0
    %v1504 = vadd.f32 0.0, %v1503
    %v1505 = vpop.f32.mrf.mxu0
    %v1506 = vpop.f32.mrf.mxu0
    %v1507 = vadd.f32 0.0, %v1506
    %v1508 = vpop.f32.mrf.mxu0
    %1509 = vdwg.mxu0
    %v1510 = vsel %vm704, %v1453, -inf
    %1511 = vmax.xlane.f32.xlu0 %v1510
    %v1512 = vpop.xlane.xlu0 %1511
    %v1513 = vsel %vm704, %v1456, -inf
    %1514 = vmax.xlane.f32.xlu0 %v1513
    %v1515 = vpop.xlane.xlu0 %1514
    %v1516 = vsel %vm704, %v1504, -inf
    %1517 = vmax.xlane.f32.xlu0 %v1516
    %v1518 = vpop.xlane.xlu0 %1517
    %v1519 = vsel %vm704, %v1507, -inf
    %1520 = vmax.xlane.f32.xlu0 %v1519
    %v1521 = vpop.xlane.xlu0 %1520
    %v1522 = vsub.f32 %v1453, %v1512
    %v1523 = vsub.f32 %v1456, %v1515
    %v1524 = vsub.f32 %v1504, %v1518
    %v1525 = vsub.f32 %v1507, %v1521
    %v1526 = vmul.f32 %v1522, 1.442695
    %v1527 = vpow.pop %v1526
    %v1528 = vmul.f32 %v1523, 1.442695
    %v1529 = vpow.pop %v1528
    %v1530 = vmul.f32 %v1524, 1.442695
    %v1531 = vpow.pop %v1530
    %v1532 = vmul.f32 %v1525, 1.442695
    %v1533 = vpow.pop %v1532
    %v1534 = vsel %vm704, %v1527, 0.0
    %1535 = vadd.xlane.f32.xlu0 %v1534
    %v1536 = vpop.xlane.xlu0 %1535
    %v1537 = vsel %vm704, %v1529, 0.0
    %1538 = vadd.xlane.f32.xlu0 %v1537
    %v1539 = vpop.xlane.xlu0 %1538
    %v1540 = vsel %vm704, %v1531, 0.0
    %1541 = vadd.xlane.f32.xlu0 %v1540
    %v1542 = vpop.xlane.xlu0 %1541
    %v1543 = vsel %vm704, %v1533, 0.0
    %1544 = vadd.xlane.f32.xlu0 %v1543
    %v1545 = vpop.xlane.xlu0 %1544
    %v1546 = vrcp.pop %v1536
    %v1547 = vrcp.pop %v1539
    %v1548 = vrcp.pop %v1542
    %v1549 = vrcp.pop %v1545
    %v1550 = vmul.f32 %v1527, %v1546
    %v1551 = vmul.f32 %v1529, %v1547
    %v1552 = vmul.f32 %v1531, %v1548
    %v1553 = vmul.f32 %v1533, %v1549
    %v1554 = vpack.c.bf16 %v1551, %v1550
    %v1555 = vpack.c.bf16 %v1553, %v1552
    %1556 = vrot.lane.b32.xlu0 %v608, 32
    %v1557 = vpop.permute.xlu0 %1556
    %v1560 = vsel %vm704, %v1554, 0
    %1562 = vmatprep.subr.bf16.mxu0 0
    %1563 = vmatpush1.bf16.msra.mxu0 0
    %1564 = vmatprep.subr.bf16.mxu0 0
    %1565 = vmatpush1.bf16.msra.mxu0 0
    %1566 = vmatprep.subr.bf16.mxu0 0
    %1567 = vmatpush1.bf16.msra.mxu0 0
    %1568 = vmatprep.subr.bf16.mxu0 0
    %1569 = vmatpush1.bf16.msra.mxu0 0
    %1570 = vmatprep.subr.bf16.mxu0 0
    %1571 = vmatpush1.bf16.msra.mxu0 0
    %1572 = vmatprep.subr.bf16.mxu0 0
    %1573 = vmatpush1.bf16.msra.mxu0 0
    %1574 = vmatprep.subr.bf16.mxu0 0
    %1575 = vmatpush1.bf16.msra.mxu0 0
    %1576 = vmatprep.subr.bf16.mxu0 0
    %1577 = vmatpush1.bf16.msra.mxu0 %v1557
    %1578 = vmatprep.subr.bf16.mxu0 0
    %1579 = vmatpush2.bf16.msra.mxu0 0
    %1580 = vmatprep.subr.bf16.mxu0 0
    %1581 = vmatpush2.bf16.msra.mxu0 0
    %1582 = vmatprep.subr.bf16.mxu0 0
    %1583 = vmatpush2.bf16.msra.mxu0 0
    %1584 = vmatprep.subr.bf16.mxu0 0
    %1585 = vmatpush2.bf16.msra.mxu0 0
    %1586 = vmatprep.subr.bf16.mxu0 0
    %1587 = vmatpush2.bf16.msra.mxu0 0
    %1588 = vmatprep.subr.bf16.mxu0 0
    %1589 = vmatpush2.bf16.msra.mxu0 0
    %1590 = vmatprep.subr.bf16.mxu0 0
    %1591 = vmatpush2.bf16.msra.mxu0 0
    %1592 = vmatprep.subr.bf16.mxu0 0
    %1593 = vmatpush2.bf16.msra.mxu0 0
    %1594 = vmatprep.mubr.bf16.mxu0 0
    %1595 = vmatmul.mubr.bf16.gmra.mxu0 %v1560
    %v1596 = vpop.f32.mrf.mxu0
    %v1597 = vadd.f32 0.0, %v1596
    %v1598 = vpop.f32.mrf.mxu0
    %v1599 = vpop.f32.mrf.mxu0
    %v1600 = vadd.f32 0.0, %v1599
    %v1601 = vpop.f32.mrf.mxu0
    %1602 = vdwg.mxu0
    %1603 = vrot.lane.b32.xlu0 %v609, 32
    %v1604 = vpop.permute.xlu0 %1603
    %v1607 = vsel %vm704, %v1555, 0
    %1609 = vmatprep.subr.bf16.mxu0 0
    %1610 = vmatpush1.bf16.msra.mxu0 0
    %1611 = vmatprep.subr.bf16.mxu0 0
    %1612 = vmatpush1.bf16.msra.mxu0 0
    %1613 = vmatprep.subr.bf16.mxu0 0
    %1614 = vmatpush1.bf16.msra.mxu0 0
    %1615 = vmatprep.subr.bf16.mxu0 0
    %1616 = vmatpush1.bf16.msra.mxu0 0
    %1617 = vmatprep.subr.bf16.mxu0 0
    %1618 = vmatpush1.bf16.msra.mxu0 0
    %1619 = vmatprep.subr.bf16.mxu0 0
    %1620 = vmatpush1.bf16.msra.mxu0 0
    %1621 = vmatprep.subr.bf16.mxu0 0
    %1622 = vmatpush1.bf16.msra.mxu0 0
    %1623 = vmatprep.subr.bf16.mxu0 0
    %1624 = vmatpush1.bf16.msra.mxu0 %v1604
    %1625 = vmatprep.subr.bf16.mxu0 0
    %1626 = vmatpush2.bf16.msra.mxu0 0
    %1627 = vmatprep.subr.bf16.mxu0 0
    %1628 = vmatpush2.bf16.msra.mxu0 0
    %1629 = vmatprep.subr.bf16.mxu0 0
    %1630 = vmatpush2.bf16.msra.mxu0 0
    %1631 = vmatprep.subr.bf16.mxu0 0
    %1632 = vmatpush2.bf16.msra.mxu0 0
    %1633 = vmatprep.subr.bf16.mxu0 0
    %1634 = vmatpush2.bf16.msra.mxu0 0
    %1635 = vmatprep.subr.bf16.mxu0 0
    %1636 = vmatpush2.bf16.msra.mxu0 0
    %1637 = vmatprep.subr.bf16.mxu0 0
    %1638 = vmatpush2.bf16.msra.mxu0 0
    %1639 = vmatprep.subr.bf16.mxu0 0
    %1640 = vmatpush2.bf16.msra.mxu0 0
    %1641 = vmatprep.mubr.bf16.mxu0 0
    %1642 = vmatmul.mubr.bf16.gmra.mxu0 %v1607
    %v1643 = vpop.f32.mrf.mxu0
    %v1644 = vadd.f32 0.0, %v1643
    %v1645 = vpop.f32.mrf.mxu0
    %v1646 = vpop.f32.mrf.mxu0
    %v1647 = vadd.f32 0.0, %v1646
    %v1648 = vpop.f32.mrf.mxu0
    %1649 = vdwg.mxu0
    %v1650 = vpack.c.bf16 %v1600, %v1597
    %v1651 = vpack.c.bf16 %v1647, %v1644
    %v1654 = vunpack.c.l.b16 %v1650
    %v1655 = vunpack.c.h.b16 %v1650
    %v1656 = vunpack.c.l.b16 %v1651
    %v1657 = vunpack.c.h.b16 %v1651
    %v1658 = vpack.c.b16 %v1654, %v1654
    %v1659 = vpack.c.b16 %v1655, %v1655
    %v1660 = vpack.c.b16 %v1656, %v1656
    %v1661 = vpack.c.b16 %v1657, %v1657
    %1662 = vrot.lane.b32.xlu0 %v1658, 96
    %v1663 = vpop.permute.xlu0 %1662
    %1664 = vrot.lane.b32.xlu0 %v1659, 96
    %v1665 = vpop.permute.xlu0 %1664
    %1666 = vrot.lane.b32.xlu0 %v1660, 96
    %v1667 = vpop.permute.xlu0 %1666
    %1668 = vrot.lane.b32.xlu0 %v1661, 96
    %v1669 = vpop.permute.xlu0 %1668
    %vm1674 = vcmask 1044224
    %1675 = vst.msk [vmem:[#allocation2] sm:$0xf] %vm1674, %v1663
    %1676 = vst.msk [vmem:[#allocation2 + $0x4] sm:$0xf] %vm1674, %v1665
    %1677 = vst.msk [vmem:[#allocation2 + $0x8] sm:$0xf] %vm1674, %v1667
    %1678 = vst.msk [vmem:[#allocation2 + $0xc] sm:$0xf] %vm1674, %v1669
    %v1679 = vld [vmem:[#allocation2] sm:$0xf]
    %v1680 = vld [vmem:[#allocation2 + $0x4] sm:$0xf]
    %v1681 = vld [vmem:[#allocation2 + $0x8] sm:$0xf]
    %v1682 = vld [vmem:[#allocation2 + $0xc] sm:$0xf]
    %v1683 = vld [vmem:[#allocation8] sm:$0xf]
    %v1684 = vld [vmem:[#allocation8 + $0x4] sm:$0xf]
    %v1685 = vld [vmem:[#allocation8 + $0x8] sm:$0xf]
    %v1686 = vld [vmem:[#allocation8 + $0xc] sm:$0xf]
    %v1691 = vunpack.c.l.b16 %v1683
    %v1692 = vunpack.c.l.b16 %v1684
    %v1693 = vunpack.c.l.b16 %v1685
    %v1694 = vunpack.c.l.b16 %v1686
    %v1695 = vpack.c.b16 %v1692, %v1691
    %v1696 = vpack.c.b16 %v1694, %v1693
    %v1701 = vunpack.c.l.b16 %v1679
    %v1702 = vunpack.c.l.b16 %v1680
    %v1703 = vunpack.c.l.b16 %v1681
    %v1704 = vunpack.c.l.b16 %v1682
    %v1705 = vpack.c.b16 %v1702, %v1701
    %v1706 = vpack.c.b16 %v1704, %v1703
    %v1710 = vsel %vm267, %v1695, 0
    %v1713 = vsel %vm267, %v1696, 0
    %1715 = vmatprep.subr.bf16.mxu0 0
    %1716 = vmatpush1.bf16.msra.mxu0 0
    %1717 = vmatprep.subr.bf16.mxu0 0
    %1718 = vmatpush1.bf16.msra.mxu0 0
    %1719 = vmatprep.subr.bf16.mxu0 0
    %1720 = vmatpush1.bf16.msra.mxu0 0
    %1721 = vmatprep.subr.bf16.mxu0 0
    %1722 = vmatpush1.bf16.msra.mxu0 0
    %1723 = vmatprep.subr.bf16.mxu0 0
    %1724 = vmatpush1.bf16.msra.mxu0 0
    %1725 = vmatprep.subr.bf16.mxu0 0
    %1726 = vmatpush1.bf16.msra.mxu0 0
    %1727 = vmatprep.subr.bf16.mxu0 0
    %1728 = vmatpush1.bf16.msra.mxu0 %v1706
    %1729 = vmatprep.subr.bf16.mxu0 0
    %1730 = vmatpush1.bf16.msra.mxu0 %v1705
    %1731 = vmatprep.subr.bf16.mxu0 0
    %1732 = vmatpush2.bf16.msra.mxu0 0
    %1733 = vmatprep.subr.bf16.mxu0 0
    %1734 = vmatpush2.bf16.msra.mxu0 0
    %1735 = vmatprep.subr.bf16.mxu0 0
    %1736 = vmatpush2.bf16.msra.mxu0 0
    %1737 = vmatprep.subr.bf16.mxu0 0
    %1738 = vmatpush2.bf16.msra.mxu0 0
    %1739 = vmatprep.subr.bf16.mxu0 0
    %1740 = vmatpush2.bf16.msra.mxu0 0
    %1741 = vmatprep.subr.bf16.mxu0 0
    %1742 = vmatpush2.bf16.msra.mxu0 0
    %1743 = vmatprep.subr.bf16.mxu0 0
    %1744 = vmatpush2.bf16.msra.mxu0 0
    %1745 = vmatprep.subr.bf16.mxu0 0
    %1746 = vmatpush2.bf16.msra.mxu0 0
    %1747 = vmatprep.mubr.bf16.mxu0 0
    %1748 = vmatmul.mubr.bf16.gmra.mxu0 %v1710
    %v1749 = vpop.f32.mrf.mxu0
    %v1750 = vadd.f32 0.0, %v1749
    %v1751 = vpop.f32.mrf.mxu0
    %v1752 = vpop.f32.mrf.mxu0
    %v1753 = vadd.f32 0.0, %v1752
    %v1754 = vpop.f32.mrf.mxu0
    %1755 = vmatprep.mubr.bf16.mxu0 0
    %1756 = vmatmul.mubr.bf16.gmra.mxu0 %v1713
    %v1757 = vpop.f32.mrf.mxu0
    %v1758 = vadd.f32 0.0, %v1757
    %v1759 = vpop.f32.mrf.mxu0
    %v1760 = vpop.f32.mrf.mxu0
    %v1761 = vadd.f32 0.0, %v1760
    %v1762 = vpop.f32.mrf.mxu0
    %1763 = vdwg.mxu0
    %v1764 = vpack.c.bf16 %v1753, %v1750
    %v1765 = vpack.c.bf16 %v1761, %v1758
    %v1766 = vld [vmem:[#allocation11] sm:$0xf]
    %v1767 = vld [vmem:[#allocation11 + $0x4] sm:$0xf]
    %v1768 = vld [vmem:[#allocation11 + $0x8] sm:$0xf]
    %v1769 = vld [vmem:[#allocation11 + $0xc] sm:$0xf]
    %v1770 = vld [vmem:[#allocation11 + $0x10] sm:$0xf]
    %v1771 = vld [vmem:[#allocation11 + $0x14] sm:$0xf]
    %v1772 = vld [vmem:[#allocation11 + $0x18] sm:$0xf]
    %v1773 = vld [vmem:[#allocation11 + $0x1c] sm:$0xf]
    %v1774 = vld [vmem:[#allocation11 + $0x20] sm:$0xf]
    %v1775 = vld [vmem:[#allocation11 + $0x24] sm:$0xf]
    %v1776 = vld [vmem:[#allocation11 + $0x28] sm:$0xf]
    %v1777 = vld [vmem:[#allocation11 + $0x2c] sm:$0xf]
    %v1778 = vld [vmem:[#allocation11 + $0x30] sm:$0xf]
    %v1779 = vld [vmem:[#allocation11 + $0x34] sm:$0xf]
    %v1780 = vld [vmem:[#allocation11 + $0x38] sm:$0xf]
    %v1781 = vld [vmem:[#allocation11 + $0x3c] sm:$0xf]
    %v1782 = vld [vmem:[%s6] sm:$0x1]
    %v1784 = vlaneseq
    %v1785 = vshrl.u32 %v1784, 7
    %v1786 = vsub.s32 0, %v1785
    %v1787 = vrot.slane %v1782, %v1786
    %v1805 = vunpack.c.l.b16 %v1766
    %v1806 = vunpack.c.l.b16 %v1767
    %v1807 = vunpack.c.l.b16 %v1768
    %v1808 = vunpack.c.l.b16 %v1769
    %v1809 = vunpack.c.l.b16 %v1770
    %v1810 = vunpack.c.l.b16 %v1771
    %v1811 = vunpack.c.l.b16 %v1772
    %v1812 = vunpack.c.l.b16 %v1773
    %v1813 = vunpack.c.l.b16 %v1774
    %v1814 = vunpack.c.l.b16 %v1775
    %v1815 = vunpack.c.l.b16 %v1776
    %v1816 = vunpack.c.l.b16 %v1777
    %v1817 = vunpack.c.l.b16 %v1778
    %v1818 = vunpack.c.l.b16 %v1779
    %v1819 = vunpack.c.l.b16 %v1780
    %v1820 = vunpack.c.l.b16 %v1781
    %v1821 = vpack.c.b16 %v1806, %v1805
    %v1822 = vpack.c.b16 %v1808, %v1807
    %v1823 = vpack.c.b16 %v1810, %v1809
    %v1824 = vpack.c.b16 %v1812, %v1811
    %v1825 = vpack.c.b16 %v1814, %v1813
    %v1826 = vpack.c.b16 %v1816, %v1815
    %v1827 = vpack.c.b16 %v1818, %v1817
    %v1828 = vpack.c.b16 %v1820, %v1819
    %1837 = vmatprep.subr.bf16.mxu0 0
    %1838 = vmatpush1.bf16.msra.mxu0 %v1828
    %1839 = vmatprep.subr.bf16.mxu0 0
    %1840 = vmatpush1.bf16.msra.mxu0 %v1827
    %1841 = vmatprep.subr.bf16.mxu0 0
    %1842 = vmatpush1.bf16.msra.mxu0 %v1826
    %1843 = vmatprep.subr.bf16.mxu0 0
    %1844 = vmatpush1.bf16.msra.mxu0 %v1825
    %1845 = vmatprep.subr.bf16.mxu0 0
    %1846 = vmatpush1.bf16.msra.mxu0 %v1824
    %1847 = vmatprep.subr.bf16.mxu0 0
    %1848 = vmatpush1.bf16.msra.mxu0 %v1823
    %1849 = vmatprep.subr.bf16.mxu0 0
    %1850 = vmatpush1.bf16.msra.mxu0 %v1822
    %1851 = vmatprep.subr.bf16.mxu0 0
    %1852 = vmatpush1.bf16.msra.mxu0 %v1821
    %1853 = vmatprep.subr.bf16.mxu0 0
    %1854 = vmatpush2.bf16.msra.mxu0 0
    %1855 = vmatprep.subr.bf16.mxu0 0
    %1856 = vmatpush2.bf16.msra.mxu0 0
    %1857 = vmatprep.subr.bf16.mxu0 0
    %1858 = vmatpush2.bf16.msra.mxu0 0
    %1859 = vmatprep.subr.bf16.mxu0 0
    %1860 = vmatpush2.bf16.msra.mxu0 0
    %1861 = vmatprep.subr.bf16.mxu0 0
    %1862 = vmatpush2.bf16.msra.mxu0 0
    %1863 = vmatprep.subr.bf16.mxu0 0
    %1864 = vmatpush2.bf16.msra.mxu0 0
    %1865 = vmatprep.subr.bf16.mxu0 0
    %1866 = vmatpush2.bf16.msra.mxu0 0
    %1867 = vmatprep.subr.bf16.mxu0 0
    %1868 = vmatpush2.bf16.msra.mxu0 0
    %1869 = vmatprep.mubr.bf16.mxu0 0
    %1870 = vmatmul.mubr.bf16.gmra.mxu0 %v1764
    %v1871 = vpop.f32.mrf.mxu0
    %v1872 = vadd.f32 %v1787, %v1871
    %v1873 = vpop.f32.mrf.mxu0
    %v1874 = vpop.f32.mrf.mxu0
    %v1875 = vadd.f32 %v1787, %v1874
    %v1876 = vpop.f32.mrf.mxu0
    %1877 = vmatprep.mubr.bf16.mxu0 0
    %1878 = vmatmul.mubr.bf16.gmra.mxu0 %v1765
    %v1879 = vpop.f32.mrf.mxu0
    %v1880 = vadd.f32 %v1787, %v1879
    %v1881 = vpop.f32.mrf.mxu0
    %v1882 = vpop.f32.mrf.mxu0
    %v1883 = vadd.f32 %v1787, %v1882
    %v1884 = vpop.f32.mrf.mxu0
    %1885 = vdwg.mxu0
    %v1886 = vld [vmem:[#allocation3] sm:$0x3]
    %v1887 = vld [vmem:[#allocation3 + $0x2] sm:$0x3]
    %v1888 = vld [vmem:[#allocation3 + $0x4] sm:$0x3]
    %v1889 = vld [vmem:[#allocation3 + $0x6] sm:$0x3]
    %v1890 = vld [vmem:[#allocation3 + $0x8] sm:$0x3]
    %v1891 = vld [vmem:[#allocation3 + $0xa] sm:$0x3]
    %v1892 = vld [vmem:[#allocation3 + $0xc] sm:$0x3]
    %v1893 = vld [vmem:[#allocation3 + $0xe] sm:$0x3]
    %v1894 = vld [vmem:[#allocation3 + $0x10] sm:$0x3]
    %v1895 = vld [vmem:[#allocation3 + $0x12] sm:$0x3]
    %v1896 = vld [vmem:[#allocation3 + $0x14] sm:$0x3]
    %v1897 = vld [vmem:[#allocation3 + $0x16] sm:$0x3]
    %v1898 = vld [vmem:[#allocation3 + $0x18] sm:$0x3]
    %v1899 = vld [vmem:[#allocation3 + $0x1a] sm:$0x3]
    %v1900 = vld [vmem:[#allocation3 + $0x1c] sm:$0x3]
    %v1901 = vld [vmem:[#allocation3 + $0x1e] sm:$0x3]
    %v1906 = vcombine.high %v1872, %v1872
    %v1908 = vunpack.c.l.s4 1983009808
    %v1909 = vunpack.c.0.s8 %v1908
    %v1910 = vlaneseq
    %v1911 = vshrl.u32 %v1910, 7
    %v1912 = vsub.s32 %v1909, %v1911
    %v1913 = vrot.slane %v1872, %v1912
    %v1915 = vunpack.c.l.s4 1983009808
    %v1916 = vunpack.c.0.s8 %v1915
    %v1917 = vlaneseq
    %v1918 = vshrl.u32 %v1917, 7
    %v1919 = vsub.s32 %v1916, %v1918
    %v1920 = vrot.slane %v1906, %v1919
    %v1921 = vcombine.high %v1913, %v1913
    %v1922 = vcombine.high %v1920, %v1920
    %v1923 = vcombine.high %v1875, %v1875
    %v1925 = vunpack.c.l.s4 1983009808
    %v1926 = vunpack.c.0.s8 %v1925
    %v1927 = vlaneseq
    %v1928 = vshrl.u32 %v1927, 7
    %v1929 = vsub.s32 %v1926, %v1928
    %v1930 = vrot.slane %v1875, %v1929
    %v1932 = vunpack.c.l.s4 1983009808
    %v1933 = vunpack.c.0.s8 %v1932
    %v1934 = vlaneseq
    %v1935 = vshrl.u32 %v1934, 7
    %v1936 = vsub.s32 %v1933, %v1935
    %v1937 = vrot.slane %v1923, %v1936
    %v1938 = vcombine.high %v1930, %v1930
    %v1939 = vcombine.high %v1937, %v1937
    %v1940 = vcombine.high %v1880, %v1880
    %v1942 = vunpack.c.l.s4 1983009808
    %v1943 = vunpack.c.0.s8 %v1942
    %v1944 = vlaneseq
    %v1945 = vshrl.u32 %v1944, 7
    %v1946 = vsub.s32 %v1943, %v1945
    %v1947 = vrot.slane %v1880, %v1946
    %v1949 = vunpack.c.l.s4 1983009808
    %v1950 = vunpack.c.0.s8 %v1949
    %v1951 = vlaneseq
    %v1952 = vshrl.u32 %v1951, 7
    %v1953 = vsub.s32 %v1950, %v1952
    %v1954 = vrot.slane %v1940, %v1953
    %v1955 = vcombine.high %v1947, %v1947
    %v1956 = vcombine.high %v1954, %v1954
    %v1957 = vcombine.high %v1883, %v1883
    %v1959 = vunpack.c.l.s4 1983009808
    %v1960 = vunpack.c.0.s8 %v1959
    %v1961 = vlaneseq
    %v1962 = vshrl.u32 %v1961, 7
    %v1963 = vsub.s32 %v1960, %v1962
    %v1964 = vrot.slane %v1883, %v1963
    %v1966 = vunpack.c.l.s4 1983009808
    %v1967 = vunpack.c.0.s8 %v1966
    %v1968 = vlaneseq
    %v1969 = vshrl.u32 %v1968, 7
    %v1970 = vsub.s32 %v1967, %v1969
    %v1971 = vrot.slane %v1957, %v1970
    %v1972 = vcombine.high %v1964, %v1964
    %v1973 = vcombine.high %v1971, %v1971
    %v1990 = vadd.f32 %v1886, %v1913
    %v1991 = vadd.f32 %v1887, %v1921
    %v1992 = vadd.f32 %v1888, %v1920
    %v1993 = vadd.f32 %v1889, %v1922
    %v1994 = vadd.f32 %v1890, %v1930
    %v1995 = vadd.f32 %v1891, %v1938
    %v1996 = vadd.f32 %v1892, %v1937
    %v1997 = vadd.f32 %v1893, %v1939
    %v1998 = vadd.f32 %v1894, %v1947
    %v1999 = vadd.f32 %v1895, %v1955
    %v2000 = vadd.f32 %v1896, %v1954
    %v2001 = vadd.f32 %v1897, %v1956
    %v2002 = vadd.f32 %v1898, %v1964
    %v2003 = vadd.f32 %v1899, %v1972
    %v2004 = vadd.f32 %v1900, %v1971
    %v2005 = vadd.f32 %v1901, %v1973
    %v2022 = vcombine.low %v1990, %v1991
    %v2023 = vcombine.low %v1992, %v1993
    %v2025 = vunpack.c.l.s4 1983009808
    %v2026 = vunpack.c.0.s8 %v2025
    %v2027 = vlaneseq
    %v2028 = vshrl.u32 %v2027, 7
    %v2029 = vsub.s32 %v2026, %v2028
    %v2030 = vrot.slane %v2022, %v2029
    %v2032 = vunpack.c.l.s4 1983009808
    %v2033 = vunpack.c.0.s8 %v2032
    %v2034 = vlaneseq
    %v2035 = vshrl.u32 %v2034, 7
    %v2036 = vsub.s32 %v2033, %v2035
    %v2037 = vrot.slane %v2023, %v2036
    %v2038 = vcombine.low %v2030, %v2037
    %v2039 = vcombine.low %v1994, %v1995
    %v2040 = vcombine.low %v1996, %v1997
    %v2042 = vunpack.c.l.s4 1983009808
    %v2043 = vunpack.c.0.s8 %v2042
    %v2044 = vlaneseq
    %v2045 = vshrl.u32 %v2044, 7
    %v2046 = vsub.s32 %v2043, %v2045
    %v2047 = vrot.slane %v2039, %v2046
    %v2049 = vunpack.c.l.s4 1983009808
    %v2050 = vunpack.c.0.s8 %v2049
    %v2051 = vlaneseq
    %v2052 = vshrl.u32 %v2051, 7
    %v2053 = vsub.s32 %v2050, %v2052
    %v2054 = vrot.slane %v2040, %v2053
    %v2055 = vcombine.low %v2047, %v2054
    %v2056 = vcombine.low %v1998, %v1999
    %v2057 = vcombine.low %v2000, %v2001
    %v2059 = vunpack.c.l.s4 1983009808
    %v2060 = vunpack.c.0.s8 %v2059
    %v2061 = vlaneseq
    %v2062 = vshrl.u32 %v2061, 7
    %v2063 = vsub.s32 %v2060, %v2062
    %v2064 = vrot.slane %v2056, %v2063
    %v2066 = vunpack.c.l.s4 1983009808
    %v2067 = vunpack.c.0.s8 %v2066
    %v2068 = vlaneseq
    %v2069 = vshrl.u32 %v2068, 7
    %v2070 = vsub.s32 %v2067, %v2069
    %v2071 = vrot.slane %v2057, %v2070
    %v2072 = vcombine.low %v2064, %v2071
    %v2073 = vcombine.low %v2002, %v2003
    %v2074 = vcombine.low %v2004, %v2005
    %v2076 = vunpack.c.l.s4 1983009808
    %v2077 = vunpack.c.0.s8 %v2076
    %v2078 = vlaneseq
    %v2079 = vshrl.u32 %v2078, 7
    %v2080 = vsub.s32 %v2077, %v2079
    %v2081 = vrot.slane %v2073, %v2080
    %v2083 = vunpack.c.l.s4 1983009808
    %v2084 = vunpack.c.0.s8 %v2083
    %v2085 = vlaneseq
    %v2086 = vshrl.u32 %v2085, 7
    %v2087 = vsub.s32 %v2084, %v2086
    %v2088 = vrot.slane %v2074, %v2087
    %v2089 = vcombine.low %v2081, %v2088
    %2094 = vadd.xlane.f32.xlu0 %v2038
    %v2095 = vpop.xlane.xlu0 %2094
    %2096 = vadd.xlane.f32.xlu0 %v2055
    %v2097 = vpop.xlane.xlu0 %2096
    %2098 = vadd.xlane.f32.xlu0 %v2072
    %v2099 = vpop.xlane.xlu0 %2098
    %2100 = vadd.xlane.f32.xlu0 %v2089
    %v2101 = vpop.xlane.xlu0 %2100
    %v2102 = vrcp.pop 128.0
    %v2103 = vmul.f32 %v2095, %v2102
    %v2104 = vmul.f32 %v2097, %v2102
    %v2105 = vmul.f32 %v2099, %v2102
    %v2106 = vmul.f32 %v2101, %v2102
    %v2112 = vunpack.c.l.s4 269488144
    %v2113 = vunpack.c.0.s8 %v2112
    %v2114 = vlaneseq
    %v2115 = vshrl.u32 %v2114, 7
    %v2116 = vsub.s32 %v2113, %v2115
    %v2117 = vrot.slane %v2103, %v2116
    %v2119 = vunpack.c.l.s4 842150450
    %v2120 = vunpack.c.0.s8 %v2119
    %v2121 = vlaneseq
    %v2122 = vshrl.u32 %v2121, 7
    %v2123 = vsub.s32 %v2120, %v2122
    %v2124 = vrot.slane %v2103, %v2123
    %v2126 = vunpack.c.l.s4 1414812756
    %v2127 = vunpack.c.0.s8 %v2126
    %v2128 = vlaneseq
    %v2129 = vshrl.u32 %v2128, 7
    %v2130 = vsub.s32 %v2127, %v2129
    %v2131 = vrot.slane %v2103, %v2130
    %v2133 = vunpack.c.l.s4 1987475062
    %v2134 = vunpack.c.0.s8 %v2133
    %v2135 = vlaneseq
    %v2136 = vshrl.u32 %v2135, 7
    %v2137 = vsub.s32 %v2134, %v2136
    %v2138 = vrot.slane %v2103, %v2137
    %v2140 = vunpack.c.l.s4 269488144
    %v2141 = vunpack.c.0.s8 %v2140
    %v2142 = vlaneseq
    %v2143 = vshrl.u32 %v2142, 7
    %v2144 = vsub.s32 %v2141, %v2143
    %v2145 = vrot.slane %v2104, %v2144
    %v2147 = vunpack.c.l.s4 842150450
    %v2148 = vunpack.c.0.s8 %v2147
    %v2149 = vlaneseq
    %v2150 = vshrl.u32 %v2149, 7
    %v2151 = vsub.s32 %v2148, %v2150
    %v2152 = vrot.slane %v2104, %v2151
    %v2154 = vunpack.c.l.s4 1414812756
    %v2155 = vunpack.c.0.s8 %v2154
    %v2156 = vlaneseq
    %v2157 = vshrl.u32 %v2156, 7
    %v2158 = vsub.s32 %v2155, %v2157
    %v2159 = vrot.slane %v2104, %v2158
    %v2161 = vunpack.c.l.s4 1987475062
    %v2162 = vunpack.c.0.s8 %v2161
    %v2163 = vlaneseq
    %v2164 = vshrl.u32 %v2163, 7
    %v2165 = vsub.s32 %v2162, %v2164
    %v2166 = vrot.slane %v2104, %v2165
    %v2168 = vunpack.c.l.s4 269488144
    %v2169 = vunpack.c.0.s8 %v2168
    %v2170 = vlaneseq
    %v2171 = vshrl.u32 %v2170, 7
    %v2172 = vsub.s32 %v2169, %v2171
    %v2173 = vrot.slane %v2105, %v2172
    %v2175 = vunpack.c.l.s4 842150450
    %v2176 = vunpack.c.0.s8 %v2175
    %v2177 = vlaneseq
    %v2178 = vshrl.u32 %v2177, 7
    %v2179 = vsub.s32 %v2176, %v2178
    %v2180 = vrot.slane %v2105, %v2179
    %v2182 = vunpack.c.l.s4 1414812756
    %v2183 = vunpack.c.0.s8 %v2182
    %v2184 = vlaneseq
    %v2185 = vshrl.u32 %v2184, 7
    %v2186 = vsub.s32 %v2183, %v2185
    %v2187 = vrot.slane %v2105, %v2186
    %v2189 = vunpack.c.l.s4 1987475062
    %v2190 = vunpack.c.0.s8 %v2189
    %v2191 = vlaneseq
    %v2192 = vshrl.u32 %v2191, 7
    %v2193 = vsub.s32 %v2190, %v2192
    %v2194 = vrot.slane %v2105, %v2193
    %v2196 = vunpack.c.l.s4 269488144
    %v2197 = vunpack.c.0.s8 %v2196
    %v2198 = vlaneseq
    %v2199 = vshrl.u32 %v2198, 7
    %v2200 = vsub.s32 %v2197, %v2199
    %v2201 = vrot.slane %v2106, %v2200
    %v2203 = vunpack.c.l.s4 842150450
    %v2204 = vunpack.c.0.s8 %v2203
    %v2205 = vlaneseq
    %v2206 = vshrl.u32 %v2205, 7
    %v2207 = vsub.s32 %v2204, %v2206
    %v2208 = vrot.slane %v2106, %v2207
    %v2210 = vunpack.c.l.s4 1414812756
    %v2211 = vunpack.c.0.s8 %v2210
    %v2212 = vlaneseq
    %v2213 = vshrl.u32 %v2212, 7
    %v2214 = vsub.s32 %v2211, %v2213
    %v2215 = vrot.slane %v2106, %v2214
    %v2217 = vunpack.c.l.s4 1987475062
    %v2218 = vunpack.c.0.s8 %v2217
    %v2219 = vlaneseq
    %v2220 = vshrl.u32 %v2219, 7
    %v2221 = vsub.s32 %v2218, %v2220
    %v2222 = vrot.slane %v2106, %v2221
    %v2239 = vsub.f32 %v1990, %v2117
    %v2240 = vsub.f32 %v1991, %v2124
    %v2241 = vsub.f32 %v1992, %v2131
    %v2242 = vsub.f32 %v1993, %v2138
    %v2243 = vsub.f32 %v1994, %v2145
    %v2244 = vsub.f32 %v1995, %v2152
    %v2245 = vsub.f32 %v1996, %v2159
    %v2246 = vsub.f32 %v1997, %v2166
    %v2247 = vsub.f32 %v1998, %v2173
    %v2248 = vsub.f32 %v1999, %v2180
    %v2249 = vsub.f32 %v2000, %v2187
    %v2250 = vsub.f32 %v2001, %v2194
    %v2251 = vsub.f32 %v2002, %v2201
    %v2252 = vsub.f32 %v2003, %v2208
    %v2253 = vsub.f32 %v2004, %v2215
    %v2254 = vsub.f32 %v2005, %v2222
    %v2255 = vmul.f32 %v2239, %v2239
    %v2256 = vmul.f32 %v2240, %v2240
    %v2257 = vmul.f32 %v2241, %v2241
    %v2258 = vmul.f32 %v2242, %v2242
    %v2259 = vmul.f32 %v2243, %v2243
    %v2260 = vmul.f32 %v2244, %v2244
    %v2261 = vmul.f32 %v2245, %v2245
    %v2262 = vmul.f32 %v2246, %v2246
    %v2263 = vmul.f32 %v2247, %v2247
    %v2264 = vmul.f32 %v2248, %v2248
    %v2265 = vmul.f32 %v2249, %v2249
    %v2266 = vmul.f32 %v2250, %v2250
    %v2267 = vmul.f32 %v2251, %v2251
    %v2268 = vmul.f32 %v2252, %v2252
    %v2269 = vmul.f32 %v2253, %v2253
    %v2270 = vmul.f32 %v2254, %v2254
    %v2287 = vcombine.low %v2255, %v2256
    %v2288 = vcombine.low %v2257, %v2258
    %v2290 = vunpack.c.l.s4 1983009808
    %v2291 = vunpack.c.0.s8 %v2290
    %v2292 = vlaneseq
    %v2293 = vshrl.u32 %v2292, 7
    %v2294 = vsub.s32 %v2291, %v2293
    %v2295 = vrot.slane %v2287, %v2294
    %v2297 = vunpack.c.l.s4 1983009808
    %v2298 = vunpack.c.0.s8 %v2297
    %v2299 = vlaneseq
    %v2300 = vshrl.u32 %v2299, 7
    %v2301 = vsub.s32 %v2298, %v2300
    %v2302 = vrot.slane %v2288, %v2301
    %v2303 = vcombine.low %v2295, %v2302
    %v2304 = vcombine.low %v2259, %v2260
    %v2305 = vcombine.low %v2261, %v2262
    %v2307 = vunpack.c.l.s4 1983009808
    %v2308 = vunpack.c.0.s8 %v2307
    %v2309 = vlaneseq
    %v2310 = vshrl.u32 %v2309, 7
    %v2311 = vsub.s32 %v2308, %v2310
    %v2312 = vrot.slane %v2304, %v2311
    %v2314 = vunpack.c.l.s4 1983009808
    %v2315 = vunpack.c.0.s8 %v2314
    %v2316 = vlaneseq
    %v2317 = vshrl.u32 %v2316, 7
    %v2318 = vsub.s32 %v2315, %v2317
    %v2319 = vrot.slane %v2305, %v2318
    %v2320 = vcombine.low %v2312, %v2319
    %v2321 = vcombine.low %v2263, %v2264
    %v2322 = vcombine.low %v2265, %v2266
    %v2324 = vunpack.c.l.s4 1983009808
    %v2325 = vunpack.c.0.s8 %v2324
    %v2326 = vlaneseq
    %v2327 = vshrl.u32 %v2326, 7
    %v2328 = vsub.s32 %v2325, %v2327
    %v2329 = vrot.slane %v2321, %v2328
    %v2331 = vunpack.c.l.s4 1983009808
    %v2332 = vunpack.c.0.s8 %v2331
    %v2333 = vlaneseq
    %v2334 = vshrl.u32 %v2333, 7
    %v2335 = vsub.s32 %v2332, %v2334
    %v2336 = vrot.slane %v2322, %v2335
    %v2337 = vcombine.low %v2329, %v2336
    %v2338 = vcombine.low %v2267, %v2268
    %v2339 = vcombine.low %v2269, %v2270
    %v2341 = vunpack.c.l.s4 1983009808
    %v2342 = vunpack.c.0.s8 %v2341
    %v2343 = vlaneseq
    %v2344 = vshrl.u32 %v2343, 7
    %v2345 = vsub.s32 %v2342, %v2344
    %v2346 = vrot.slane %v2338, %v2345
    %v2348 = vunpack.c.l.s4 1983009808
    %v2349 = vunpack.c.0.s8 %v2348
    %v2350 = vlaneseq
    %v2351 = vshrl.u32 %v2350, 7
    %v2352 = vsub.s32 %v2349, %v2351
    %v2353 = vrot.slane %v2339, %v2352
    %v2354 = vcombine.low %v2346, %v2353
    %2359 = vadd.xlane.f32.xlu0 %v2303
    %v2360 = vpop.xlane.xlu0 %2359
    %2361 = vadd.xlane.f32.xlu0 %v2320
    %v2362 = vpop.xlane.xlu0 %2361
    %2363 = vadd.xlane.f32.xlu0 %v2337
    %v2364 = vpop.xlane.xlu0 %2363
    %2365 = vadd.xlane.f32.xlu0 %v2354
    %v2366 = vpop.xlane.xlu0 %2365
    %v2367 = vmul.f32 %v2360, %v2102
    %v2368 = vmul.f32 %v2362, %v2102
    %v2369 = vmul.f32 %v2364, %v2102
    %v2370 = vmul.f32 %v2366, %v2102
    %v2371 = vadd.f32 %v2367, 1e-05
    %v2372 = vadd.f32 %v2368, 1e-05
    %v2373 = vadd.f32 %v2369, 1e-05
    %v2374 = vadd.f32 %v2370, 1e-05
    %v2375 = vrsqrt.pop %v2371
    %v2376 = vrsqrt.pop %v2372
    %v2377 = vrsqrt.pop %v2373
    %v2378 = vrsqrt.pop %v2374
    %v2384 = vunpack.c.l.s4 269488144
    %v2385 = vunpack.c.0.s8 %v2384
    %v2386 = vlaneseq
    %v2387 = vshrl.u32 %v2386, 7
    %v2388 = vsub.s32 %v2385, %v2387
    %v2389 = vrot.slane %v2375, %v2388
    %v2391 = vunpack.c.l.s4 842150450
    %v2392 = vunpack.c.0.s8 %v2391
    %v2393 = vlaneseq
    %v2394 = vshrl.u32 %v2393, 7
    %v2395 = vsub.s32 %v2392, %v2394
    %v2396 = vrot.slane %v2375, %v2395
    %v2398 = vunpack.c.l.s4 1414812756
    %v2399 = vunpack.c.0.s8 %v2398
    %v2400 = vlaneseq
    %v2401 = vshrl.u32 %v2400, 7
    %v2402 = vsub.s32 %v2399, %v2401
    %v2403 = vrot.slane %v2375, %v2402
    %v2405 = vunpack.c.l.s4 1987475062
    %v2406 = vunpack.c.0.s8 %v2405
    %v2407 = vlaneseq
    %v2408 = vshrl.u32 %v2407, 7
    %v2409 = vsub.s32 %v2406, %v2408
    %v2410 = vrot.slane %v2375, %v2409
    %v2412 = vunpack.c.l.s4 269488144
    %v2413 = vunpack.c.0.s8 %v2412
    %v2414 = vlaneseq
    %v2415 = vshrl.u32 %v2414, 7
    %v2416 = vsub.s32 %v2413, %v2415
    %v2417 = vrot.slane %v2376, %v2416
    %v2419 = vunpack.c.l.s4 842150450
    %v2420 = vunpack.c.0.s8 %v2419
    %v2421 = vlaneseq
    %v2422 = vshrl.u32 %v2421, 7
    %v2423 = vsub.s32 %v2420, %v2422
    %v2424 = vrot.slane %v2376, %v2423
    %v2426 = vunpack.c.l.s4 1414812756
    %v2427 = vunpack.c.0.s8 %v2426
    %v2428 = vlaneseq
    %v2429 = vshrl.u32 %v2428, 7
    %v2430 = vsub.s32 %v2427, %v2429
    %v2431 = vrot.slane %v2376, %v2430
    %v2433 = vunpack.c.l.s4 1987475062
    %v2434 = vunpack.c.0.s8 %v2433
    %v2435 = vlaneseq
    %v2436 = vshrl.u32 %v2435, 7
    %v2437 = vsub.s32 %v2434, %v2436
    %v2438 = vrot.slane %v2376, %v2437
    %v2440 = vunpack.c.l.s4 269488144
    %v2441 = vunpack.c.0.s8 %v2440
    %v2442 = vlaneseq
    %v2443 = vshrl.u32 %v2442, 7
    %v2444 = vsub.s32 %v2441, %v2443
    %v2445 = vrot.slane %v2377, %v2444
    %v2447 = vunpack.c.l.s4 842150450
    %v2448 = vunpack.c.0.s8 %v2447
    %v2449 = vlaneseq
    %v2450 = vshrl.u32 %v2449, 7
    %v2451 = vsub.s32 %v2448, %v2450
    %v2452 = vrot.slane %v2377, %v2451
    %v2454 = vunpack.c.l.s4 1414812756
    %v2455 = vunpack.c.0.s8 %v2454
    %v2456 = vlaneseq
    %v2457 = vshrl.u32 %v2456, 7
    %v2458 = vsub.s32 %v2455, %v2457
    %v2459 = vrot.slane %v2377, %v2458
    %v2461 = vunpack.c.l.s4 1987475062
    %v2462 = vunpack.c.0.s8 %v2461
    %v2463 = vlaneseq
    %v2464 = vshrl.u32 %v2463, 7
    %v2465 = vsub.s32 %v2462, %v2464
    %v2466 = vrot.slane %v2377, %v2465
    %v2468 = vunpack.c.l.s4 269488144
    %v2469 = vunpack.c.0.s8 %v2468
    %v2470 = vlaneseq
    %v2471 = vshrl.u32 %v2470, 7
    %v2472 = vsub.s32 %v2469, %v2471
    %v2473 = vrot.slane %v2378, %v2472
    %v2475 = vunpack.c.l.s4 842150450
    %v2476 = vunpack.c.0.s8 %v2475
    %v2477 = vlaneseq
    %v2478 = vshrl.u32 %v2477, 7
    %v2479 = vsub.s32 %v2476, %v2478
    %v2480 = vrot.slane %v2378, %v2479
    %v2482 = vunpack.c.l.s4 1414812756
    %v2483 = vunpack.c.0.s8 %v2482
    %v2484 = vlaneseq
    %v2485 = vshrl.u32 %v2484, 7
    %v2486 = vsub.s32 %v2483, %v2485
    %v2487 = vrot.slane %v2378, %v2486
    %v2489 = vunpack.c.l.s4 1987475062
    %v2490 = vunpack.c.0.s8 %v2489
    %v2491 = vlaneseq
    %v2492 = vshrl.u32 %v2491, 7
    %v2493 = vsub.s32 %v2490, %v2492
    %v2494 = vrot.slane %v2378, %v2493
    %v2511 = vmul.f32 %v2239, %v2389
    %v2512 = vmul.f32 %v2240, %v2396
    %v2513 = vmul.f32 %v2241, %v2403
    %v2514 = vmul.f32 %v2242, %v2410
    %v2515 = vmul.f32 %v2243, %v2417
    %v2516 = vmul.f32 %v2244, %v2424
    %v2517 = vmul.f32 %v2245, %v2431
    %v2518 = vmul.f32 %v2246, %v2438
    %v2519 = vmul.f32 %v2247, %v2445
    %v2520 = vmul.f32 %v2248, %v2452
    %v2521 = vmul.f32 %v2249, %v2459
    %v2522 = vmul.f32 %v2250, %v2466
    %v2523 = vmul.f32 %v2251, %v2473
    %v2524 = vmul.f32 %v2252, %v2480
    %v2525 = vmul.f32 %v2253, %v2487
    %v2526 = vmul.f32 %v2254, %v2494
    %v2527 = vld [vmem:[%s11] sm:$0x1]
    %v2529 = vlaneseq
    %v2530 = vshrl.u32 %v2529, 7
    %v2531 = vsub.s32 0, %v2530
    %v2532 = vrot.slane %v2527, %v2531
    %v2533 = vcombine.high %v2532, %v2532
    %v2535 = vunpack.c.l.s4 1983009808
    %v2536 = vunpack.c.0.s8 %v2535
    %v2537 = vlaneseq
    %v2538 = vshrl.u32 %v2537, 7
    %v2539 = vsub.s32 %v2536, %v2538
    %v2540 = vrot.slane %v2532, %v2539
    %v2542 = vunpack.c.l.s4 1983009808
    %v2543 = vunpack.c.0.s8 %v2542
    %v2544 = vlaneseq
    %v2545 = vshrl.u32 %v2544, 7
    %v2546 = vsub.s32 %v2543, %v2545
    %v2547 = vrot.slane %v2533, %v2546
    %v2548 = vcombine.high %v2540, %v2540
    %v2549 = vcombine.high %v2547, %v2547
    %v2554 = vmul.f32 %v2511, %v2540
    %v2555 = vmul.f32 %v2512, %v2548
    %v2556 = vmul.f32 %v2513, %v2547
    %v2557 = vmul.f32 %v2514, %v2549
    %v2558 = vmul.f32 %v2515, %v2540
    %v2559 = vmul.f32 %v2516, %v2548
    %v2560 = vmul.f32 %v2517, %v2547
    %v2561 = vmul.f32 %v2518, %v2549
    %v2562 = vmul.f32 %v2519, %v2540
    %v2563 = vmul.f32 %v2520, %v2548
    %v2564 = vmul.f32 %v2521, %v2547
    %v2565 = vmul.f32 %v2522, %v2549
    %v2566 = vmul.f32 %v2523, %v2540
    %v2567 = vmul.f32 %v2524, %v2548
    %v2568 = vmul.f32 %v2525, %v2547
    %v2569 = vmul.f32 %v2526, %v2549
    %v2570 = vld [vmem:[%s12] sm:$0x1]
    %v2572 = vlaneseq
    %v2573 = vshrl.u32 %v2572, 7
    %v2574 = vsub.s32 0, %v2573
    %v2575 = vrot.slane %v2570, %v2574
    %v2576 = vcombine.high %v2575, %v2575
    %v2578 = vunpack.c.l.s4 1983009808
    %v2579 = vunpack.c.0.s8 %v2578
    %v2580 = vlaneseq
    %v2581 = vshrl.u32 %v2580, 7
    %v2582 = vsub.s32 %v2579, %v2581
    %v2583 = vrot.slane %v2575, %v2582
    %v2585 = vunpack.c.l.s4 1983009808
    %v2586 = vunpack.c.0.s8 %v2585
    %v2587 = vlaneseq
    %v2588 = vshrl.u32 %v2587, 7
    %v2589 = vsub.s32 %v2586, %v2588
    %v2590 = vrot.slane %v2576, %v2589
    %v2591 = vcombine.high %v2583, %v2583
    %v2592 = vcombine.high %v2590, %v2590
    %v2597 = vadd.f32 %v2554, %v2583
    %v2598 = vadd.f32 %v2555, %v2591
    %v2599 = vadd.f32 %v2556, %v2590
    %v2600 = vadd.f32 %v2557, %v2592
    %v2601 = vadd.f32 %v2558, %v2583
    %v2602 = vadd.f32 %v2559, %v2591
    %v2603 = vadd.f32 %v2560, %v2590
    %v2604 = vadd.f32 %v2561, %v2592
    %v2605 = vadd.f32 %v2562, %v2583
    %v2606 = vadd.f32 %v2563, %v2591
    %v2607 = vadd.f32 %v2564, %v2590
    %v2608 = vadd.f32 %v2565, %v2592
    %v2609 = vadd.f32 %v2566, %v2583
    %v2610 = vadd.f32 %v2567, %v2591
    %v2611 = vadd.f32 %v2568, %v2590
    %v2612 = vadd.f32 %v2569, %v2592
    %v2629 = vcombine.low %v2597, %v2598
    %v2630 = vcombine.low %v2599, %v2600
    %v2632 = vunpack.c.l.s4 1983009808
    %v2633 = vunpack.c.0.s8 %v2632
    %v2634 = vlaneseq
    %v2635 = vshrl.u32 %v2634, 7
    %v2636 = vsub.s32 %v2633, %v2635
    %v2637 = vrot.slane %v2629, %v2636
    %v2639 = vunpack.c.l.s4 1983009808
    %v2640 = vunpack.c.0.s8 %v2639
    %v2641 = vlaneseq
    %v2642 = vshrl.u32 %v2641, 7
    %v2643 = vsub.s32 %v2640, %v2642
    %v2644 = vrot.slane %v2630, %v2643
    %v2645 = vcombine.low %v2637, %v2644
    %v2646 = vcombine.low %v2601, %v2602
    %v2647 = vcombine.low %v2603, %v2604
    %v2649 = vunpack.c.l.s4 1983009808
    %v2650 = vunpack.c.0.s8 %v2649
    %v2651 = vlaneseq
    %v2652 = vshrl.u32 %v2651, 7
    %v2653 = vsub.s32 %v2650, %v2652
    %v2654 = vrot.slane %v2646, %v2653
    %v2656 = vunpack.c.l.s4 1983009808
    %v2657 = vunpack.c.0.s8 %v2656
    %v2658 = vlaneseq
    %v2659 = vshrl.u32 %v2658, 7
    %v2660 = vsub.s32 %v2657, %v2659
    %v2661 = vrot.slane %v2647, %v2660
    %v2662 = vcombine.low %v2654, %v2661
    %v2663 = vcombine.low %v2605, %v2606
    %v2664 = vcombine.low %v2607, %v2608
    %v2666 = vunpack.c.l.s4 1983009808
    %v2667 = vunpack.c.0.s8 %v2666
    %v2668 = vlaneseq
    %v2669 = vshrl.u32 %v2668, 7
    %v2670 = vsub.s32 %v2667, %v2669
    %v2671 = vrot.slane %v2663, %v2670
    %v2673 = vunpack.c.l.s4 1983009808
    %v2674 = vunpack.c.0.s8 %v2673
    %v2675 = vlaneseq
    %v2676 = vshrl.u32 %v2675, 7
    %v2677 = vsub.s32 %v2674, %v2676
    %v2678 = vrot.slane %v2664, %v2677
    %v2679 = vcombine.low %v2671, %v2678
    %v2680 = vcombine.low %v2609, %v2610
    %v2681 = vcombine.low %v2611, %v2612
    %v2683 = vunpack.c.l.s4 1983009808
    %v2684 = vunpack.c.0.s8 %v2683
    %v2685 = vlaneseq
    %v2686 = vshrl.u32 %v2685, 7
    %v2687 = vsub.s32 %v2684, %v2686
    %v2688 = vrot.slane %v2680, %v2687
    %v2690 = vunpack.c.l.s4 1983009808
    %v2691 = vunpack.c.0.s8 %v2690
    %v2692 = vlaneseq
    %v2693 = vshrl.u32 %v2692, 7
    %v2694 = vsub.s32 %v2691, %v2693
    %v2695 = vrot.slane %v2681, %v2694
    %v2696 = vcombine.low %v2688, %v2695
    %v2701 = vpack.c.bf16 %v2662, %v2645
    %v2702 = vpack.c.bf16 %v2696, %v2679
    %v2703 = vld [vmem:[#allocation12] sm:$0xf]
    %v2704 = vld [vmem:[#allocation12 + $0x4] sm:$0xf]
    %v2705 = vld [vmem:[#allocation12 + $0x8] sm:$0xf]
    %v2706 = vld [vmem:[#allocation12 + $0xc] sm:$0xf]
    %v2707 = vld [vmem:[#allocation12 + $0x10] sm:$0xf]
    %v2708 = vld [vmem:[#allocation12 + $0x14] sm:$0xf]
    %v2709 = vld [vmem:[#allocation12 + $0x18] sm:$0xf]
    %v2710 = vld [vmem:[#allocation12 + $0x1c] sm:$0xf]
    %v2711 = vld [vmem:[#allocation12 + $0x20] sm:$0xf]
    %v2712 = vld [vmem:[#allocation12 + $0x24] sm:$0xf]
    %v2713 = vld [vmem:[#allocation12 + $0x28] sm:$0xf]
    %v2714 = vld [vmem:[#allocation12 + $0x2c] sm:$0xf]
    %v2715 = vld [vmem:[#allocation12 + $0x30] sm:$0xf]
    %v2716 = vld [vmem:[#allocation12 + $0x34] sm:$0xf]
    %v2717 = vld [vmem:[#allocation12 + $0x38] sm:$0xf]
    %v2718 = vld [vmem:[#allocation12 + $0x3c] sm:$0xf]
    %v2719 = vld [vmem:[%s8] sm:$0x1]
    %v2721 = vlaneseq
    %v2722 = vshrl.u32 %v2721, 7
    %v2723 = vsub.s32 0, %v2722
    %v2724 = vrot.slane %v2719, %v2723
    %v2742 = vunpack.c.l.b16 %v2703
    %v2743 = vunpack.c.l.b16 %v2704
    %v2744 = vunpack.c.l.b16 %v2705
    %v2745 = vunpack.c.l.b16 %v2706
    %v2746 = vunpack.c.l.b16 %v2707
    %v2747 = vunpack.c.l.b16 %v2708
    %v2748 = vunpack.c.l.b16 %v2709
    %v2749 = vunpack.c.l.b16 %v2710
    %v2750 = vunpack.c.l.b16 %v2711
    %v2751 = vunpack.c.l.b16 %v2712
    %v2752 = vunpack.c.l.b16 %v2713
    %v2753 = vunpack.c.l.b16 %v2714
    %v2754 = vunpack.c.l.b16 %v2715
    %v2755 = vunpack.c.l.b16 %v2716
    %v2756 = vunpack.c.l.b16 %v2717
    %v2757 = vunpack.c.l.b16 %v2718
    %v2758 = vpack.c.b16 %v2743, %v2742
    %v2759 = vpack.c.b16 %v2745, %v2744
    %v2760 = vpack.c.b16 %v2747, %v2746
    %v2761 = vpack.c.b16 %v2749, %v2748
    %v2762 = vpack.c.b16 %v2751, %v2750
    %v2763 = vpack.c.b16 %v2753, %v2752
    %v2764 = vpack.c.b16 %v2755, %v2754
    %v2765 = vpack.c.b16 %v2757, %v2756
    %2774 = vmatprep.subr.bf16.mxu0 0
    %2775 = vmatpush1.bf16.msra.mxu0 %v2765
    %2776 = vmatprep.subr.bf16.mxu0 0
    %2777 = vmatpush1.bf16.msra.mxu0 %v2764
    %2778 = vmatprep.subr.bf16.mxu0 0
    %2779 = vmatpush1.bf16.msra.mxu0 %v2763
    %2780 = vmatprep.subr.bf16.mxu0 0
    %2781 = vmatpush1.bf16.msra.mxu0 %v2762
    %2782 = vmatprep.subr.bf16.mxu0 0
    %2783 = vmatpush1.bf16.msra.mxu0 %v2761
    %2784 = vmatprep.subr.bf16.mxu0 0
    %2785 = vmatpush1.bf16.msra.mxu0 %v2760
    %2786 = vmatprep.subr.bf16.mxu0 0
    %2787 = vmatpush1.bf16.msra.mxu0 %v2759
    %2788 = vmatprep.subr.bf16.mxu0 0
    %2789 = vmatpush1.bf16.msra.mxu0 %v2758
    %2790 = vmatprep.subr.bf16.mxu0 0
    %2791 = vmatpush2.bf16.msra.mxu0 0
    %2792 = vmatprep.subr.bf16.mxu0 0
    %2793 = vmatpush2.bf16.msra.mxu0 0
    %2794 = vmatprep.subr.bf16.mxu0 0
    %2795 = vmatpush2.bf16.msra.mxu0 0
    %2796 = vmatprep.subr.bf16.mxu0 0
    %2797 = vmatpush2.bf16.msra.mxu0 0
    %2798 = vmatprep.subr.bf16.mxu0 0
    %2799 = vmatpush2.bf16.msra.mxu0 0
    %2800 = vmatprep.subr.bf16.mxu0 0
    %2801 = vmatpush2.bf16.msra.mxu0 0
    %2802 = vmatprep.subr.bf16.mxu0 0
    %2803 = vmatpush2.bf16.msra.mxu0 0
    %2804 = vmatprep.subr.bf16.mxu0 0
    %2805 = vmatpush2.bf16.msra.mxu0 0
    %2806 = vmatprep.mubr.bf16.mxu0 0
    %2807 = vmatmul.mubr.bf16.gmra.mxu0 %v2701
    %v2808 = vpop.f32.mrf.mxu0
    %v2809 = vadd.f32 %v2724, %v2808
    %v2810 = vpop.f32.mrf.mxu0
    %v2811 = vpop.f32.mrf.mxu0
    %v2812 = vadd.f32 %v2724, %v2811
    %v2813 = vpop.f32.mrf.mxu0
    %2814 = vmatprep.mubr.bf16.mxu0 0
    %2815 = vmatmul.mubr.bf16.gmra.mxu0 %v2702
    %v2816 = vpop.f32.mrf.mxu0
    %v2817 = vadd.f32 %v2724, %v2816
    %v2818 = vpop.f32.mrf.mxu0
    %v2819 = vpop.f32.mrf.mxu0
    %v2820 = vadd.f32 %v2724, %v2819
    %v2821 = vpop.f32.mrf.mxu0
    %2822 = vdwg.mxu0
    %v2823 = vmax.f32 %v2809, 0.0
    %v2824 = vmax.f32 %v2812, 0.0
    %v2825 = vmax.f32 %v2817, 0.0
    %v2826 = vmax.f32 %v2820, 0.0
    %v2827 = vpack.c.bf16 %v2824, %v2823
    %v2828 = vpack.c.bf16 %v2826, %v2825
    %v2829 = vld [vmem:[#allocation14] sm:$0xf]
    %v2830 = vld [vmem:[#allocation14 + $0x4] sm:$0xf]
    %v2831 = vld [vmem:[#allocation14 + $0x8] sm:$0xf]
    %v2832 = vld [vmem:[#allocation14 + $0xc] sm:$0xf]
    %v2833 = vld [vmem:[#allocation14 + $0x10] sm:$0xf]
    %v2834 = vld [vmem:[#allocation14 + $0x14] sm:$0xf]
    %v2835 = vld [vmem:[#allocation14 + $0x18] sm:$0xf]
    %v2836 = vld [vmem:[#allocation14 + $0x1c] sm:$0xf]
    %v2837 = vld [vmem:[#allocation14 + $0x20] sm:$0xf]
    %v2838 = vld [vmem:[#allocation14 + $0x24] sm:$0xf]
    %v2839 = vld [vmem:[#allocation14 + $0x28] sm:$0xf]
    %v2840 = vld [vmem:[#allocation14 + $0x2c] sm:$0xf]
    %v2841 = vld [vmem:[#allocation14 + $0x30] sm:$0xf]
    %v2842 = vld [vmem:[#allocation14 + $0x34] sm:$0xf]
    %v2843 = vld [vmem:[#allocation14 + $0x38] sm:$0xf]
    %v2844 = vld [vmem:[#allocation14 + $0x3c] sm:$0xf]
    %v2845 = vld [vmem:[%s10] sm:$0x1]
    %v2847 = vlaneseq
    %v2848 = vshrl.u32 %v2847, 7
    %v2849 = vsub.s32 0, %v2848
    %v2850 = vrot.slane %v2845, %v2849
    %v2868 = vunpack.c.l.b16 %v2829
    %v2869 = vunpack.c.l.b16 %v2830
    %v2870 = vunpack.c.l.b16 %v2831
    %v2871 = vunpack.c.l.b16 %v2832
    %v2872 = vunpack.c.l.b16 %v2833
    %v2873 = vunpack.c.l.b16 %v2834
    %v2874 = vunpack.c.l.b16 %v2835
    %v2875 = vunpack.c.l.b16 %v2836
    %v2876 = vunpack.c.l.b16 %v2837
    %v2877 = vunpack.c.l.b16 %v2838
    %v2878 = vunpack.c.l.b16 %v2839
    %v2879 = vunpack.c.l.b16 %v2840
    %v2880 = vunpack.c.l.b16 %v2841
    %v2881 = vunpack.c.l.b16 %v2842
    %v2882 = vunpack.c.l.b16 %v2843
    %v2883 = vunpack.c.l.b16 %v2844
    %v2884 = vpack.c.b16 %v2869, %v2868
    %v2885 = vpack.c.b16 %v2871, %v2870
    %v2886 = vpack.c.b16 %v2873, %v2872
    %v2887 = vpack.c.b16 %v2875, %v2874
    %v2888 = vpack.c.b16 %v2877, %v2876
    %v2889 = vpack.c.b16 %v2879, %v2878
    %v2890 = vpack.c.b16 %v2881, %v2880
    %v2891 = vpack.c.b16 %v2883, %v2882
    %2900 = vmatprep.subr.bf16.mxu0 0
    %2901 = vmatpush1.bf16.msra.mxu0 %v2891
    %2902 = vmatprep.subr.bf16.mxu0 0
    %2903 = vmatpush1.bf16.msra.mxu0 %v2890
    %2904 = vmatprep.subr.bf16.mxu0 0
    %2905 = vmatpush1.bf16.msra.mxu0 %v2889
    %2906 = vmatprep.subr.bf16.mxu0 0
    %2907 = vmatpush1.bf16.msra.mxu0 %v2888
    %2908 = vmatprep.subr.bf16.mxu0 0
    %2909 = vmatpush1.bf16.msra.mxu0 %v2887
    %2910 = vmatprep.subr.bf16.mxu0 0
    %2911 = vmatpush1.bf16.msra.mxu0 %v2886
    %2912 = vmatprep.subr.bf16.mxu0 0
    %2913 = vmatpush1.bf16.msra.mxu0 %v2885
    %2914 = vmatprep.subr.bf16.mxu0 0
    %2915 = vmatpush1.bf16.msra.mxu0 %v2884
    %2916 = vmatprep.subr.bf16.mxu0 0
    %2917 = vmatpush2.bf16.msra.mxu0 0
    %2918 = vmatprep.subr.bf16.mxu0 0
    %2919 = vmatpush2.bf16.msra.mxu0 0
    %2920 = vmatprep.subr.bf16.mxu0 0
    %2921 = vmatpush2.bf16.msra.mxu0 0
    %2922 = vmatprep.subr.bf16.mxu0 0
    %2923 = vmatpush2.bf16.msra.mxu0 0
    %2924 = vmatprep.subr.bf16.mxu0 0
    %2925 = vmatpush2.bf16.msra.mxu0 0
    %2926 = vmatprep.subr.bf16.mxu0 0
    %2927 = vmatpush2.bf16.msra.mxu0 0
    %2928 = vmatprep.subr.bf16.mxu0 0
    %2929 = vmatpush2.bf16.msra.mxu0 0
    %2930 = vmatprep.subr.bf16.mxu0 0
    %2931 = vmatpush2.bf16.msra.mxu0 0
    %2932 = vmatprep.mubr.bf16.mxu0 0
    %2933 = vmatmul.mubr.bf16.gmra.mxu0 %v2827
    %v2934 = vpop.f32.mrf.mxu0
    %v2935 = vadd.f32 %v2850, %v2934
    %v2936 = vpop.f32.mrf.mxu0
    %v2937 = vpop.f32.mrf.mxu0
    %v2938 = vadd.f32 %v2850, %v2937
    %v2939 = vpop.f32.mrf.mxu0
    %2940 = vmatprep.mubr.bf16.mxu0 0
    %2941 = vmatmul.mubr.bf16.gmra.mxu0 %v2828
    %v2942 = vpop.f32.mrf.mxu0
    %v2943 = vadd.f32 %v2850, %v2942
    %v2944 = vpop.f32.mrf.mxu0
    %v2945 = vpop.f32.mrf.mxu0
    %v2946 = vadd.f32 %v2850, %v2945
    %v2947 = vpop.f32.mrf.mxu0
    %2948 = vdwg.mxu0
    %v2953 = vcombine.high %v2935, %v2935
    %v2955 = vunpack.c.l.s4 1983009808
    %v2956 = vunpack.c.0.s8 %v2955
    %v2957 = vlaneseq
    %v2958 = vshrl.u32 %v2957, 7
    %v2959 = vsub.s32 %v2956, %v2958
    %v2960 = vrot.slane %v2935, %v2959
    %v2962 = vunpack.c.l.s4 1983009808
    %v2963 = vunpack.c.0.s8 %v2962
    %v2964 = vlaneseq
    %v2965 = vshrl.u32 %v2964, 7
    %v2966 = vsub.s32 %v2963, %v2965
    %v2967 = vrot.slane %v2953, %v2966
    %v2968 = vcombine.high %v2960, %v2960
    %v2969 = vcombine.high %v2967, %v2967
    %v2970 = vcombine.high %v2938, %v2938
    %v2972 = vunpack.c.l.s4 1983009808
    %v2973 = vunpack.c.0.s8 %v2972
    %v2974 = vlaneseq
    %v2975 = vshrl.u32 %v2974, 7
    %v2976 = vsub.s32 %v2973, %v2975
    %v2977 = vrot.slane %v2938, %v2976
    %v2979 = vunpack.c.l.s4 1983009808
    %v2980 = vunpack.c.0.s8 %v2979
    %v2981 = vlaneseq
    %v2982 = vshrl.u32 %v2981, 7
    %v2983 = vsub.s32 %v2980, %v2982
    %v2984 = vrot.slane %v2970, %v2983
    %v2985 = vcombine.high %v2977, %v2977
    %v2986 = vcombine.high %v2984, %v2984
    %v2987 = vcombine.high %v2943, %v2943
    %v2989 = vunpack.c.l.s4 1983009808
    %v2990 = vunpack.c.0.s8 %v2989
    %v2991 = vlaneseq
    %v2992 = vshrl.u32 %v2991, 7
    %v2993 = vsub.s32 %v2990, %v2992
    %v2994 = vrot.slane %v2943, %v2993
    %v2996 = vunpack.c.l.s4 1983009808
    %v2997 = vunpack.c.0.s8 %v2996
    %v2998 = vlaneseq
    %v2999 = vshrl.u32 %v2998, 7
    %v3000 = vsub.s32 %v2997, %v2999
    %v3001 = vrot.slane %v2987, %v3000
    %v3002 = vcombine.high %v2994, %v2994
    %v3003 = vcombine.high %v3001, %v3001
    %v3004 = vcombine.high %v2946, %v2946
    %v3006 = vunpack.c.l.s4 1983009808
    %v3007 = vunpack.c.0.s8 %v3006
    %v3008 = vlaneseq
    %v3009 = vshrl.u32 %v3008, 7
    %v3010 = vsub.s32 %v3007, %v3009
    %v3011 = vrot.slane %v2946, %v3010
    %v3013 = vunpack.c.l.s4 1983009808
    %v3014 = vunpack.c.0.s8 %v3013
    %v3015 = vlaneseq
    %v3016 = vshrl.u32 %v3015, 7
    %v3017 = vsub.s32 %v3014, %v3016
    %v3018 = vrot.slane %v3004, %v3017
    %v3019 = vcombine.high %v3011, %v3011
    %v3020 = vcombine.high %v3018, %v3018
    %v3037 = vadd.f32 %v2597, %v2960
    %v3038 = vadd.f32 %v2598, %v2968
    %v3039 = vadd.f32 %v2599, %v2967
    %v3040 = vadd.f32 %v2600, %v2969
    %v3041 = vadd.f32 %v2601, %v2977
    %v3042 = vadd.f32 %v2602, %v2985
    %v3043 = vadd.f32 %v2603, %v2984
    %v3044 = vadd.f32 %v2604, %v2986
    %v3045 = vadd.f32 %v2605, %v2994
    %v3046 = vadd.f32 %v2606, %v3002
    %v3047 = vadd.f32 %v2607, %v3001
    %v3048 = vadd.f32 %v2608, %v3003
    %v3049 = vadd.f32 %v2609, %v3011
    %v3050 = vadd.f32 %v2610, %v3019
    %v3051 = vadd.f32 %v2611, %v3018
    %v3052 = vadd.f32 %v2612, %v3020
    %v3069 = vcombine.low %v3037, %v3038
    %v3070 = vcombine.low %v3039, %v3040
    %v3072 = vunpack.c.l.s4 1983009808
    %v3073 = vunpack.c.0.s8 %v3072
    %v3074 = vlaneseq
    %v3075 = vshrl.u32 %v3074, 7
    %v3076 = vsub.s32 %v3073, %v3075
    %v3077 = vrot.slane %v3069, %v3076
    %v3079 = vunpack.c.l.s4 1983009808
    %v3080 = vunpack.c.0.s8 %v3079
    %v3081 = vlaneseq
    %v3082 = vshrl.u32 %v3081, 7
    %v3083 = vsub.s32 %v3080, %v3082
    %v3084 = vrot.slane %v3070, %v3083
    %v3085 = vcombine.low %v3077, %v3084
    %v3086 = vcombine.low %v3041, %v3042
    %v3087 = vcombine.low %v3043, %v3044
    %v3089 = vunpack.c.l.s4 1983009808
    %v3090 = vunpack.c.0.s8 %v3089
    %v3091 = vlaneseq
    %v3092 = vshrl.u32 %v3091, 7
    %v3093 = vsub.s32 %v3090, %v3092
    %v3094 = vrot.slane %v3086, %v3093
    %v3096 = vunpack.c.l.s4 1983009808
    %v3097 = vunpack.c.0.s8 %v3096
    %v3098 = vlaneseq
    %v3099 = vshrl.u32 %v3098, 7
    %v3100 = vsub.s32 %v3097, %v3099
    %v3101 = vrot.slane %v3087, %v3100
    %v3102 = vcombine.low %v3094, %v3101
    %v3103 = vcombine.low %v3045, %v3046
    %v3104 = vcombine.low %v3047, %v3048
    %v3106 = vunpack.c.l.s4 1983009808
    %v3107 = vunpack.c.0.s8 %v3106
    %v3108 = vlaneseq
    %v3109 = vshrl.u32 %v3108, 7
    %v3110 = vsub.s32 %v3107, %v3109
    %v3111 = vrot.slane %v3103, %v3110
    %v3113 = vunpack.c.l.s4 1983009808
    %v3114 = vunpack.c.0.s8 %v3113
    %v3115 = vlaneseq
    %v3116 = vshrl.u32 %v3115, 7
    %v3117 = vsub.s32 %v3114, %v3116
    %v3118 = vrot.slane %v3104, %v3117
    %v3119 = vcombine.low %v3111, %v3118
    %v3120 = vcombine.low %v3049, %v3050
    %v3121 = vcombine.low %v3051, %v3052
    %v3123 = vunpack.c.l.s4 1983009808
    %v3124 = vunpack.c.0.s8 %v3123
    %v3125 = vlaneseq
    %v3126 = vshrl.u32 %v3125, 7
    %v3127 = vsub.s32 %v3124, %v3126
    %v3128 = vrot.slane %v3120, %v3127
    %v3130 = vunpack.c.l.s4 1983009808
    %v3131 = vunpack.c.0.s8 %v3130
    %v3132 = vlaneseq
    %v3133 = vshrl.u32 %v3132, 7
    %v3134 = vsub.s32 %v3131, %v3133
    %v3135 = vrot.slane %v3121, %v3134
    %v3136 = vcombine.low %v3128, %v3135
    %3141 = vadd.xlane.f32.xlu0 %v3085
    %v3142 = vpop.xlane.xlu0 %3141
    %3143 = vadd.xlane.f32.xlu0 %v3102
    %v3144 = vpop.xlane.xlu0 %3143
    %3145 = vadd.xlane.f32.xlu0 %v3119
    %v3146 = vpop.xlane.xlu0 %3145
    %3147 = vadd.xlane.f32.xlu0 %v3136
    %v3148 = vpop.xlane.xlu0 %3147
    %v3149 = vmul.f32 %v3142, %v2102
    %v3150 = vmul.f32 %v3144, %v2102
    %v3151 = vmul.f32 %v3146, %v2102
    %v3152 = vmul.f32 %v3148, %v2102
    %v3158 = vunpack.c.l.s4 269488144
    %v3159 = vunpack.c.0.s8 %v3158
    %v3160 = vlaneseq
    %v3161 = vshrl.u32 %v3160, 7
    %v3162 = vsub.s32 %v3159, %v3161
    %v3163 = vrot.slane %v3149, %v3162
    %v3165 = vunpack.c.l.s4 842150450
    %v3166 = vunpack.c.0.s8 %v3165
    %v3167 = vlaneseq
    %v3168 = vshrl.u32 %v3167, 7
    %v3169 = vsub.s32 %v3166, %v3168
    %v3170 = vrot.slane %v3149, %v3169
    %v3172 = vunpack.c.l.s4 1414812756
    %v3173 = vunpack.c.0.s8 %v3172
    %v3174 = vlaneseq
    %v3175 = vshrl.u32 %v3174, 7
    %v3176 = vsub.s32 %v3173, %v3175
    %v3177 = vrot.slane %v3149, %v3176
    %v3179 = vunpack.c.l.s4 1987475062
    %v3180 = vunpack.c.0.s8 %v3179
    %v3181 = vlaneseq
    %v3182 = vshrl.u32 %v3181, 7
    %v3183 = vsub.s32 %v3180, %v3182
    %v3184 = vrot.slane %v3149, %v3183
    %v3186 = vunpack.c.l.s4 269488144
    %v3187 = vunpack.c.0.s8 %v3186
    %v3188 = vlaneseq
    %v3189 = vshrl.u32 %v3188, 7
    %v3190 = vsub.s32 %v3187, %v3189
    %v3191 = vrot.slane %v3150, %v3190
    %v3193 = vunpack.c.l.s4 842150450
    %v3194 = vunpack.c.0.s8 %v3193
    %v3195 = vlaneseq
    %v3196 = vshrl.u32 %v3195, 7
    %v3197 = vsub.s32 %v3194, %v3196
    %v3198 = vrot.slane %v3150, %v3197
    %v3200 = vunpack.c.l.s4 1414812756
    %v3201 = vunpack.c.0.s8 %v3200
    %v3202 = vlaneseq
    %v3203 = vshrl.u32 %v3202, 7
    %v3204 = vsub.s32 %v3201, %v3203
    %v3205 = vrot.slane %v3150, %v3204
    %v3207 = vunpack.c.l.s4 1987475062
    %v3208 = vunpack.c.0.s8 %v3207
    %v3209 = vlaneseq
    %v3210 = vshrl.u32 %v3209, 7
    %v3211 = vsub.s32 %v3208, %v3210
    %v3212 = vrot.slane %v3150, %v3211
    %v3214 = vunpack.c.l.s4 269488144
    %v3215 = vunpack.c.0.s8 %v3214
    %v3216 = vlaneseq
    %v3217 = vshrl.u32 %v3216, 7
    %v3218 = vsub.s32 %v3215, %v3217
    %v3219 = vrot.slane %v3151, %v3218
    %v3221 = vunpack.c.l.s4 842150450
    %v3222 = vunpack.c.0.s8 %v3221
    %v3223 = vlaneseq
    %v3224 = vshrl.u32 %v3223, 7
    %v3225 = vsub.s32 %v3222, %v3224
    %v3226 = vrot.slane %v3151, %v3225
    %v3228 = vunpack.c.l.s4 1414812756
    %v3229 = vunpack.c.0.s8 %v3228
    %v3230 = vlaneseq
    %v3231 = vshrl.u32 %v3230, 7
    %v3232 = vsub.s32 %v3229, %v3231
    %v3233 = vrot.slane %v3151, %v3232
    %v3235 = vunpack.c.l.s4 1987475062
    %v3236 = vunpack.c.0.s8 %v3235
    %v3237 = vlaneseq
    %v3238 = vshrl.u32 %v3237, 7
    %v3239 = vsub.s32 %v3236, %v3238
    %v3240 = vrot.slane %v3151, %v3239
    %v3242 = vunpack.c.l.s4 269488144
    %v3243 = vunpack.c.0.s8 %v3242
    %v3244 = vlaneseq
    %v3245 = vshrl.u32 %v3244, 7
    %v3246 = vsub.s32 %v3243, %v3245
    %v3247 = vrot.slane %v3152, %v3246
    %v3249 = vunpack.c.l.s4 842150450
    %v3250 = vunpack.c.0.s8 %v3249
    %v3251 = vlaneseq
    %v3252 = vshrl.u32 %v3251, 7
    %v3253 = vsub.s32 %v3250, %v3252
    %v3254 = vrot.slane %v3152, %v3253
    %v3256 = vunpack.c.l.s4 1414812756
    %v3257 = vunpack.c.0.s8 %v3256
    %v3258 = vlaneseq
    %v3259 = vshrl.u32 %v3258, 7
    %v3260 = vsub.s32 %v3257, %v3259
    %v3261 = vrot.slane %v3152, %v3260
    %v3263 = vunpack.c.l.s4 1987475062
    %v3264 = vunpack.c.0.s8 %v3263
    %v3265 = vlaneseq
    %v3266 = vshrl.u32 %v3265, 7
    %v3267 = vsub.s32 %v3264, %v3266
    %v3268 = vrot.slane %v3152, %v3267
    %v3285 = vsub.f32 %v3037, %v3163
    %v3286 = vsub.f32 %v3038, %v3170
    %v3287 = vsub.f32 %v3039, %v3177
    %v3288 = vsub.f32 %v3040, %v3184
    %v3289 = vsub.f32 %v3041, %v3191
    %v3290 = vsub.f32 %v3042, %v3198
    %v3291 = vsub.f32 %v3043, %v3205
    %v3292 = vsub.f32 %v3044, %v3212
    %v3293 = vsub.f32 %v3045, %v3219
    %v3294 = vsub.f32 %v3046, %v3226
    %v3295 = vsub.f32 %v3047, %v3233
    %v3296 = vsub.f32 %v3048, %v3240
    %v3297 = vsub.f32 %v3049, %v3247
    %v3298 = vsub.f32 %v3050, %v3254
    %v3299 = vsub.f32 %v3051, %v3261
    %v3300 = vsub.f32 %v3052, %v3268
    %v3301 = vmul.f32 %v3285, %v3285
    %v3302 = vmul.f32 %v3286, %v3286
    %v3303 = vmul.f32 %v3287, %v3287
    %v3304 = vmul.f32 %v3288, %v3288
    %v3305 = vmul.f32 %v3289, %v3289
    %v3306 = vmul.f32 %v3290, %v3290
    %v3307 = vmul.f32 %v3291, %v3291
    %v3308 = vmul.f32 %v3292, %v3292
    %v3309 = vmul.f32 %v3293, %v3293
    %v3310 = vmul.f32 %v3294, %v3294
    %v3311 = vmul.f32 %v3295, %v3295
    %v3312 = vmul.f32 %v3296, %v3296
    %v3313 = vmul.f32 %v3297, %v3297
    %v3314 = vmul.f32 %v3298, %v3298
    %v3315 = vmul.f32 %v3299, %v3299
    %v3316 = vmul.f32 %v3300, %v3300
    %v3333 = vcombine.low %v3301, %v3302
    %v3334 = vcombine.low %v3303, %v3304
    %v3336 = vunpack.c.l.s4 1983009808
    %v3337 = vunpack.c.0.s8 %v3336
    %v3338 = vlaneseq
    %v3339 = vshrl.u32 %v3338, 7
    %v3340 = vsub.s32 %v3337, %v3339
    %v3341 = vrot.slane %v3333, %v3340
    %v3343 = vunpack.c.l.s4 1983009808
    %v3344 = vunpack.c.0.s8 %v3343
    %v3345 = vlaneseq
    %v3346 = vshrl.u32 %v3345, 7
    %v3347 = vsub.s32 %v3344, %v3346
    %v3348 = vrot.slane %v3334, %v3347
    %v3349 = vcombine.low %v3341, %v3348
    %v3350 = vcombine.low %v3305, %v3306
    %v3351 = vcombine.low %v3307, %v3308
    %v3353 = vunpack.c.l.s4 1983009808
    %v3354 = vunpack.c.0.s8 %v3353
    %v3355 = vlaneseq
    %v3356 = vshrl.u32 %v3355, 7
    %v3357 = vsub.s32 %v3354, %v3356
    %v3358 = vrot.slane %v3350, %v3357
    %v3360 = vunpack.c.l.s4 1983009808
    %v3361 = vunpack.c.0.s8 %v3360
    %v3362 = vlaneseq
    %v3363 = vshrl.u32 %v3362, 7
    %v3364 = vsub.s32 %v3361, %v3363
    %v3365 = vrot.slane %v3351, %v3364
    %v3366 = vcombine.low %v3358, %v3365
    %v3367 = vcombine.low %v3309, %v3310
    %v3368 = vcombine.low %v3311, %v3312
    %v3370 = vunpack.c.l.s4 1983009808
    %v3371 = vunpack.c.0.s8 %v3370
    %v3372 = vlaneseq
    %v3373 = vshrl.u32 %v3372, 7
    %v3374 = vsub.s32 %v3371, %v3373
    %v3375 = vrot.slane %v3367, %v3374
    %v3377 = vunpack.c.l.s4 1983009808
    %v3378 = vunpack.c.0.s8 %v3377
    %v3379 = vlaneseq
    %v3380 = vshrl.u32 %v3379, 7
    %v3381 = vsub.s32 %v3378, %v3380
    %v3382 = vrot.slane %v3368, %v3381
    %v3383 = vcombine.low %v3375, %v3382
    %v3384 = vcombine.low %v3313, %v3314
    %v3385 = vcombine.low %v3315, %v3316
    %v3387 = vunpack.c.l.s4 1983009808
    %v3388 = vunpack.c.0.s8 %v3387
    %v3389 = vlaneseq
    %v3390 = vshrl.u32 %v3389, 7
    %v3391 = vsub.s32 %v3388, %v3390
    %v3392 = vrot.slane %v3384, %v3391
    %v3394 = vunpack.c.l.s4 1983009808
    %v3395 = vunpack.c.0.s8 %v3394
    %v3396 = vlaneseq
    %v3397 = vshrl.u32 %v3396, 7
    %v3398 = vsub.s32 %v3395, %v3397
    %v3399 = vrot.slane %v3385, %v3398
    %v3400 = vcombine.low %v3392, %v3399
    %3405 = vadd.xlane.f32.xlu0 %v3349
    %v3406 = vpop.xlane.xlu0 %3405
    %3407 = vadd.xlane.f32.xlu0 %v3366
    %v3408 = vpop.xlane.xlu0 %3407
    %3409 = vadd.xlane.f32.xlu0 %v3383
    %v3410 = vpop.xlane.xlu0 %3409
    %3411 = vadd.xlane.f32.xlu0 %v3400
    %v3412 = vpop.xlane.xlu0 %3411
    %v3413 = vmul.f32 %v3406, %v2102
    %v3414 = vmul.f32 %v3408, %v2102
    %v3415 = vmul.f32 %v3410, %v2102
    %v3416 = vmul.f32 %v3412, %v2102
    %v3417 = vadd.f32 %v3413, 1e-05
    %v3418 = vadd.f32 %v3414, 1e-05
    %v3419 = vadd.f32 %v3415, 1e-05
    %v3420 = vadd.f32 %v3416, 1e-05
    %v3421 = vrsqrt.pop %v3417
    %v3422 = vrsqrt.pop %v3418
    %v3423 = vrsqrt.pop %v3419
    %v3424 = vrsqrt.pop %v3420
    %v3430 = vunpack.c.l.s4 269488144
    %v3431 = vunpack.c.0.s8 %v3430
    %v3432 = vlaneseq
    %v3433 = vshrl.u32 %v3432, 7
    %v3434 = vsub.s32 %v3431, %v3433
    %v3435 = vrot.slane %v3421, %v3434
    %v3437 = vunpack.c.l.s4 842150450
    %v3438 = vunpack.c.0.s8 %v3437
    %v3439 = vlaneseq
    %v3440 = vshrl.u32 %v3439, 7
    %v3441 = vsub.s32 %v3438, %v3440
    %v3442 = vrot.slane %v3421, %v3441
    %v3444 = vunpack.c.l.s4 1414812756
    %v3445 = vunpack.c.0.s8 %v3444
    %v3446 = vlaneseq
    %v3447 = vshrl.u32 %v3446, 7
    %v3448 = vsub.s32 %v3445, %v3447
    %v3449 = vrot.slane %v3421, %v3448
    %v3451 = vunpack.c.l.s4 1987475062
    %v3452 = vunpack.c.0.s8 %v3451
    %v3453 = vlaneseq
    %v3454 = vshrl.u32 %v3453, 7
    %v3455 = vsub.s32 %v3452, %v3454
    %v3456 = vrot.slane %v3421, %v3455
    %v3458 = vunpack.c.l.s4 269488144
    %v3459 = vunpack.c.0.s8 %v3458
    %v3460 = vlaneseq
    %v3461 = vshrl.u32 %v3460, 7
    %v3462 = vsub.s32 %v3459, %v3461
    %v3463 = vrot.slane %v3422, %v3462
    %v3465 = vunpack.c.l.s4 842150450
    %v3466 = vunpack.c.0.s8 %v3465
    %v3467 = vlaneseq
    %v3468 = vshrl.u32 %v3467, 7
    %v3469 = vsub.s32 %v3466, %v3468
    %v3470 = vrot.slane %v3422, %v3469
    %v3472 = vunpack.c.l.s4 1414812756
    %v3473 = vunpack.c.0.s8 %v3472
    %v3474 = vlaneseq
    %v3475 = vshrl.u32 %v3474, 7
    %v3476 = vsub.s32 %v3473, %v3475
    %v3477 = vrot.slane %v3422, %v3476
    %v3479 = vunpack.c.l.s4 1987475062
    %v3480 = vunpack.c.0.s8 %v3479
    %v3481 = vlaneseq
    %v3482 = vshrl.u32 %v3481, 7
    %v3483 = vsub.s32 %v3480, %v3482
    %v3484 = vrot.slane %v3422, %v3483
    %v3486 = vunpack.c.l.s4 269488144
    %v3487 = vunpack.c.0.s8 %v3486
    %v3488 = vlaneseq
    %v3489 = vshrl.u32 %v3488, 7
    %v3490 = vsub.s32 %v3487, %v3489
    %v3491 = vrot.slane %v3423, %v3490
    %v3493 = vunpack.c.l.s4 842150450
    %v3494 = vunpack.c.0.s8 %v3493
    %v3495 = vlaneseq
    %v3496 = vshrl.u32 %v3495, 7
    %v3497 = vsub.s32 %v3494, %v3496
    %v3498 = vrot.slane %v3423, %v3497
    %v3500 = vunpack.c.l.s4 1414812756
    %v3501 = vunpack.c.0.s8 %v3500
    %v3502 = vlaneseq
    %v3503 = vshrl.u32 %v3502, 7
    %v3504 = vsub.s32 %v3501, %v3503
    %v3505 = vrot.slane %v3423, %v3504
    %v3507 = vunpack.c.l.s4 1987475062
    %v3508 = vunpack.c.0.s8 %v3507
    %v3509 = vlaneseq
    %v3510 = vshrl.u32 %v3509, 7
    %v3511 = vsub.s32 %v3508, %v3510
    %v3512 = vrot.slane %v3423, %v3511
    %v3514 = vunpack.c.l.s4 269488144
    %v3515 = vunpack.c.0.s8 %v3514
    %v3516 = vlaneseq
    %v3517 = vshrl.u32 %v3516, 7
    %v3518 = vsub.s32 %v3515, %v3517
    %v3519 = vrot.slane %v3424, %v3518
    %v3521 = vunpack.c.l.s4 842150450
    %v3522 = vunpack.c.0.s8 %v3521
    %v3523 = vlaneseq
    %v3524 = vshrl.u32 %v3523, 7
    %v3525 = vsub.s32 %v3522, %v3524
    %v3526 = vrot.slane %v3424, %v3525
    %v3528 = vunpack.c.l.s4 1414812756
    %v3529 = vunpack.c.0.s8 %v3528
    %v3530 = vlaneseq
    %v3531 = vshrl.u32 %v3530, 7
    %v3532 = vsub.s32 %v3529, %v3531
    %v3533 = vrot.slane %v3424, %v3532
    %v3535 = vunpack.c.l.s4 1987475062
    %v3536 = vunpack.c.0.s8 %v3535
    %v3537 = vlaneseq
    %v3538 = vshrl.u32 %v3537, 7
    %v3539 = vsub.s32 %v3536, %v3538
    %v3540 = vrot.slane %v3424, %v3539
    %v3557 = vmul.f32 %v3285, %v3435
    %v3558 = vmul.f32 %v3286, %v3442
    %v3559 = vmul.f32 %v3287, %v3449
    %v3560 = vmul.f32 %v3288, %v3456
    %v3561 = vmul.f32 %v3289, %v3463
    %v3562 = vmul.f32 %v3290, %v3470
    %v3563 = vmul.f32 %v3291, %v3477
    %v3564 = vmul.f32 %v3292, %v3484
    %v3565 = vmul.f32 %v3293, %v3491
    %v3566 = vmul.f32 %v3294, %v3498
    %v3567 = vmul.f32 %v3295, %v3505
    %v3568 = vmul.f32 %v3296, %v3512
    %v3569 = vmul.f32 %v3297, %v3519
    %v3570 = vmul.f32 %v3298, %v3526
    %v3571 = vmul.f32 %v3299, %v3533
    %v3572 = vmul.f32 %v3300, %v3540
    %v3573 = vld [vmem:[%s13] sm:$0x1]
    %v3575 = vlaneseq
    %v3576 = vshrl.u32 %v3575, 7
    %v3577 = vsub.s32 0, %v3576
    %v3578 = vrot.slane %v3573, %v3577
    %v3579 = vcombine.high %v3578, %v3578
    %v3581 = vunpack.c.l.s4 1983009808
    %v3582 = vunpack.c.0.s8 %v3581
    %v3583 = vlaneseq
    %v3584 = vshrl.u32 %v3583, 7
    %v3585 = vsub.s32 %v3582, %v3584
    %v3586 = vrot.slane %v3578, %v3585
    %v3588 = vunpack.c.l.s4 1983009808
    %v3589 = vunpack.c.0.s8 %v3588
    %v3590 = vlaneseq
    %v3591 = vshrl.u32 %v3590, 7
    %v3592 = vsub.s32 %v3589, %v3591
    %v3593 = vrot.slane %v3579, %v3592
    %v3594 = vcombine.high %v3586, %v3586
    %v3595 = vcombine.high %v3593, %v3593
    %v3600 = vmul.f32 %v3557, %v3586
    %v3601 = vmul.f32 %v3558, %v3594
    %v3602 = vmul.f32 %v3559, %v3593
    %v3603 = vmul.f32 %v3560, %v3595
    %v3604 = vmul.f32 %v3561, %v3586
    %v3605 = vmul.f32 %v3562, %v3594
    %v3606 = vmul.f32 %v3563, %v3593
    %v3607 = vmul.f32 %v3564, %v3595
    %v3608 = vmul.f32 %v3565, %v3586
    %v3609 = vmul.f32 %v3566, %v3594
    %v3610 = vmul.f32 %v3567, %v3593
    %v3611 = vmul.f32 %v3568, %v3595
    %v3612 = vmul.f32 %v3569, %v3586
    %v3613 = vmul.f32 %v3570, %v3594
    %v3614 = vmul.f32 %v3571, %v3593
    %v3615 = vmul.f32 %v3572, %v3595
    %v3616 = vld [vmem:[%s14] sm:$0x1]
    %v3618 = vlaneseq
    %v3619 = vshrl.u32 %v3618, 7
    %v3620 = vsub.s32 0, %v3619
    %v3621 = vrot.slane %v3616, %v3620
    %v3622 = vcombine.high %v3621, %v3621
    %v3624 = vunpack.c.l.s4 1983009808
    %v3625 = vunpack.c.0.s8 %v3624
    %v3626 = vlaneseq
    %v3627 = vshrl.u32 %v3626, 7
    %v3628 = vsub.s32 %v3625, %v3627
    %v3629 = vrot.slane %v3621, %v3628
    %v3631 = vunpack.c.l.s4 1983009808
    %v3632 = vunpack.c.0.s8 %v3631
    %v3633 = vlaneseq
    %v3634 = vshrl.u32 %v3633, 7
    %v3635 = vsub.s32 %v3632, %v3634
    %v3636 = vrot.slane %v3622, %v3635
    %v3637 = vcombine.high %v3629, %v3629
    %v3638 = vcombine.high %v3636, %v3636
    %v3643 = vadd.f32 %v3600, %v3629
    %v3644 = vadd.f32 %v3601, %v3637
    %v3645 = vadd.f32 %v3602, %v3636
    %v3646 = vadd.f32 %v3603, %v3638
    %v3647 = vadd.f32 %v3604, %v3629
    %v3648 = vadd.f32 %v3605, %v3637
    %v3649 = vadd.f32 %v3606, %v3636
    %v3650 = vadd.f32 %v3607, %v3638
    %v3651 = vadd.f32 %v3608, %v3629
    %v3652 = vadd.f32 %v3609, %v3637
    %v3653 = vadd.f32 %v3610, %v3636
    %v3654 = vadd.f32 %v3611, %v3638
    %v3655 = vadd.f32 %v3612, %v3629
    %v3656 = vadd.f32 %v3613, %v3637
    %v3657 = vadd.f32 %v3614, %v3636
    %v3658 = vadd.f32 %v3615, %v3638
    %3659 = vst [vmem:[#allocation15] sm:$0x3] %v3643
    %3660 = vst [vmem:[#allocation15 + $0x2] sm:$0x3] %v3644
    %3661 = vst [vmem:[#allocation15 + $0x4] sm:$0x3] %v3645
    %3662 = vst [vmem:[#allocation15 + $0x6] sm:$0x3] %v3646
    %3663 = vst [vmem:[#allocation15 + $0x8] sm:$0x3] %v3647
    %3664 = vst [vmem:[#allocation15 + $0xa] sm:$0x3] %v3648
    %3665 = vst [vmem:[#allocation15 + $0xc] sm:$0x3] %v3649
    %3666 = vst [vmem:[#allocation15 + $0xe] sm:$0x3] %v3650
    %3667 = vst [vmem:[#allocation15 + $0x10] sm:$0x3] %v3651
    %3668 = vst [vmem:[#allocation15 + $0x12] sm:$0x3] %v3652
    %3669 = vst [vmem:[#allocation15 + $0x14] sm:$0x3] %v3653
    %3670 = vst [vmem:[#allocation15 + $0x16] sm:$0x3] %v3654
    %3671 = vst [vmem:[#allocation15 + $0x18] sm:$0x3] %v3655
    %3672 = vst [vmem:[#allocation15 + $0x1a] sm:$0x3] %v3656
    %3673 = vst [vmem:[#allocation15 + $0x1c] sm:$0x3] %v3657
    %3674 = vst [vmem:[#allocation15 + $0x1e] sm:$0x3] %v3658
    // Predicated region
    $region90: #{tpu_custom_call.1} parent=1 // pred_check
      _
    $region91: #{tpu_custom_call.1} parent=1 // pred_check_branch
      %3676 = sbr.rel (0) target = $region93
    $region92: #{tpu_custom_call.1} parent=1 // pred_region
      %s3678 = ssub.s32 512, 512
      %3679 = vsyncadd [#allocation5], %s3678
      %s3680 = sshll.u32 [#allocation15], 4
      %s3681 = int_to_ptr.vmem [resolvable:$true] %s3680
      %3686 = dma.vmem_to_hbm [thread:$0]  %s3681, 512, %s15, [#allocation5], 32, 32, 2
    $region93: #{tpu_custom_call.1} parent=1 // pred_fallthru
      _
    // Predicated region
    $region94: #{tpu_custom_call.1} parent=1 // pred_check
      _
    $region95: #{tpu_custom_call.1} parent=1 // pred_check_branch
      %3688 = sbr.rel (0) target = $region97
    $region96: #{tpu_custom_call.1} parent=1 // pred_region
      %3689 = dma.done [#allocation5], 512
    $region97: #{tpu_custom_call.1} parent=1 // pred_fallthru
      _
    %3690 = vsyncpa [#allocation4], 1
    %3691 = vsyncpa [#allocation7], 1
    %3692 = vsyncpa [#allocation10], 1
    %3693 = vsyncpa [#allocation13], 1
    %3694 = vsyncpa [#allocation5], 1

</llo_original>
